<compile_context>
chip_gen: v6e
topology: v6e:2x2x1
jax: 0.10.0
libtpu: 0.0.40
codegen_flags: <defaults>
</compile_context>

<pallas_src>
import functools
import math

import jax
import jax.numpy as jnp
from jax.experimental import pallas as pl
from jax.experimental.pallas import tpu as pltpu

LN_EPS = 1e-5
MASK_FILL = -1e9  # matches masked_fill(attn_mask, -1000000000.0)


# ----------------------------------------------------------------------------
# Shared helpers
# ----------------------------------------------------------------------------
def _layernorm_rows(x_f32, gamma_row, beta_row):
    """LayerNorm over the last axis, PyTorch semantics (biased var, eps=1e-5)."""
    mean = jnp.mean(x_f32, axis=-1, keepdims=True)
    var = jnp.mean((x_f32 - mean) ** 2, axis=-1, keepdims=True)
    y = (x_f32 - mean) * jax.lax.rsqrt(var + LN_EPS)
    return y * gamma_row + beta_row


def _pick_row_tile(m, target=512):
    """Largest row tile <= target that divides m (full extent if m <= target)."""
    if m <= target:
        return m
    t = (target // 8) * 8
    while t >= 8 and m % t:
        t -= 8
    return t if t >= 8 and m % t == 0 else m


def _pick_lane_tile(n, target=512):
    """Lane-dim tile: multiple of 128 dividing n, else the full extent."""
    if n <= target:
        return n
    t = (target // 128) * 128
    while t >= 128 and n % t:
        t -= 128
    return t if t >= 128 and n % t == 0 else n


# ----------------------------------------------------------------------------
# Multi-head attention (10x-scaled softmax) + residual + LayerNorm
# ----------------------------------------------------------------------------
def _mha_kernel(x_ref, wq_ref, wk_ref, wv_ref, wo_ref, mask_ref, g_ref, b_ref,
                out_ref, attn_ref, acc_ref, *, scale):
    h = pl.program_id(1)

    @pl.when(h == 0)
    def _():
        acc_ref[...] = jnp.zeros_like(acc_ref)

    x = x_ref[0]                                                     # [S, D]
    # Per-head projections: native-dtype MXU inputs, f32 accumulation.
    q = jnp.dot(x, wq_ref[0], preferred_element_type=jnp.float32)    # [S, dk]
    k = jnp.dot(x, wk_ref[0], preferred_element_type=jnp.float32)    # [S, dk]
    v = jnp.dot(x, wv_ref[0], preferred_element_type=jnp.float32)    # [S, dv]

    # scores = 10 * q @ k^T / sqrt(d_k)  (contract on d_k, no explicit transpose)
    scores = jax.lax.dot_general(q, k, (((1,), (1,)), ((), ())),
                                 preferred_element_type=jnp.float32) * scale
    scores = jnp.where(mask_ref[0] != 0.0, jnp.float32(MASK_FILL), scores)

    # Softmax along keys.
    m = jnp.max(scores, axis=-1, keepdims=True)
    p = jnp.exp(scores - m)
    p = p / jnp.sum(p, axis=-1, keepdims=True)
    attn_ref[0, 0] = p.astype(attn_ref.dtype)

    ctx = jnp.dot(p, v, preferred_element_type=jnp.float32)          # [S, dv]
    # Per-head slice of the output projection, accumulated over heads (avoids
    # materializing the concat-over-heads tensor entirely).
    acc_ref[...] += jnp.dot(ctx.astype(wo_ref.dtype), wo_ref[0],
                            preferred_element_type=jnp.float32)      # [S, D]

    @pl.when(h == pl.num_programs(1) - 1)
    def _():
        out = acc_ref[...] + x.astype(jnp.float32)
        y = _layernorm_rows(out, g_ref[...].astype(jnp.float32),
                            b_ref[...].astype(jnp.float32))
        out_ref[0] = y.astype(out_ref.dtype)


def multi_head_attention(x, wq, wk, wv, wo, gamma, beta, mask_f,
                         *, n_heads, d_k, d_v):
    """x: [B, S, D] -> (LayerNorm(attn_out + x) [B, S, D], softmax_attn [B, H, S, S])."""
    B, S, D = x.shape
    # Split weights per head in the wrapper (cheap; avoids in-kernel reshapes).
    wq_h = wq.reshape(D, n_heads, d_k).transpose(1, 0, 2)   # [H, D, dk]
    wk_h = wk.reshape(D, n_heads, d_k).transpose(1, 0, 2)   # [H, D, dk]
    wv_h = wv.reshape(D, n_heads, d_v).transpose(1, 0, 2)   # [H, D, dv]
    wo_h = wo.reshape(n_heads, d_v, D)                      # [H, dv, D]
    g2 = gamma.reshape(1, D)
    b2 = beta.reshape(1, D)
    scale = 10.0 / math.sqrt(d_k)

    kernel = functools.partial(_mha_kernel, scale=scale)

    out, attn = pl.pallas_call(
        kernel,
        out_shape=(
            jax.ShapeDtypeStruct((B, S, D), x.dtype),
            jax.ShapeDtypeStruct((B, n_heads, S, S), jnp.float32),
        ),
        grid_spec=pltpu.PrefetchScalarGridSpec(
            num_scalar_prefetch=0,
            grid=(B, n_heads),
            in_specs=[
                pl.BlockSpec((1, S, D), lambda b, h: (b, 0, 0)),     # x (resident over h)
                pl.BlockSpec((1, D, d_k), lambda b, h: (h, 0, 0)),   # Wq (per head)
                pl.BlockSpec((1, D, d_k), lambda b, h: (h, 0, 0)),   # Wk (per head)
                pl.BlockSpec((1, D, d_v), lambda b, h: (h, 0, 0)),   # Wv (per head)
                pl.BlockSpec((1, d_v, D), lambda b, h: (h, 0, 0)),   # Wo (per head)
                pl.BlockSpec((1, S, S), lambda b, h: (b, 0, 0)),     # mask (resident over h)
                pl.BlockSpec((1, D), lambda b, h: (0, 0)),           # gamma
                pl.BlockSpec((1, D), lambda b, h: (0, 0)),           # beta
            ],
            out_specs=(
                pl.BlockSpec((1, S, D), lambda b, h: (b, 0, 0)),         # LN(out + x)
                pl.BlockSpec((1, 1, S, S), lambda b, h: (b, h, 0, 0)),   # softmax attn
            ),
            scratch_shapes=[pltpu.VMEM((S, D), jnp.float32)],
        ),
        compiler_params=pltpu.CompilerParams(
            dimension_semantics=("parallel", "arbitrary")),
    )(x, wq_h, wk_h, wv_h, wo_h, mask_f, g2, b2)
    return out, attn


# ----------------------------------------------------------------------------
# Position-wise FFN + residual + LayerNorm (row-tiled, d_ff reduction axis)
# ----------------------------------------------------------------------------
def _ffn_kernel(x_ref, w1_ref, w2_ref, g_ref, b_ref, o_ref, acc_ref):
    k = pl.program_id(1)

    @pl.when(k == 0)
    def _():
        acc_ref[...] = jnp.zeros_like(acc_ref)

    x = x_ref[...]
    # ReLU commutes with the d_ff (column) tiling of W1, so we can accumulate
    # ReLU(x @ W1[:, k_tile]) @ W2[k_tile, :] over k-tiles.
    h = jnp.maximum(jnp.dot(x, w1_ref[...],
                            preferred_element_type=jnp.float32), 0.0)
    acc_ref[...] += jnp.dot(h.astype(x.dtype), w2_ref[...],
                            preferred_element_type=jnp.float32)

    @pl.when(k == pl.num_programs(1) - 1)
    def _():
        out = acc_ref[...] + x.astype(jnp.float32)
        y = _layernorm_rows(out, g_ref[...].astype(jnp.float32),
                            b_ref[...].astype(jnp.float32))
        o_ref[...] = y.astype(o_ref.dtype)


def poswise_feed_forward_net(x, w1, w2, gamma, beta, *, row_tile=512, ff_tile=512):
    """x: [B, S, D] -> LayerNorm(ReLU(x@W1)@W2 + x): [B, S, D]."""
    B, S, D = x.shape
    d_ff = w1.shape[1]
    M = B * S
    tm = _pick_row_tile(M, row_tile)     # large row tile -> MXU not starved
    tk = _pick_lane_tile(d_ff, ff_tile)  # bound VMEM independent of d_ff

    x2d = x.reshape(M, D)
    g2 = gamma.reshape(1, D)
    b2 = beta.reshape(1, D)

    out2d = pl.pallas_call(
        _ffn_kernel,
        out_shape=jax.ShapeDtypeStruct((M, D), x.dtype),
        grid_spec=pltpu.PrefetchScalarGridSpec(
            num_scalar_prefetch=0,
            grid=(M // tm, d_ff // tk),
            in_specs=[
                pl.BlockSpec((tm, D), lambda i, k: (i, 0)),   # x row tile (resident over k)
                pl.BlockSpec((D, tk), lambda i, k: (0, k)),   # W1 column tile
                pl.BlockSpec((tk, D), lambda i, k: (k, 0)),   # W2 row tile
                pl.BlockSpec((1, D), lambda i, k: (0, 0)),    # gamma
                pl.BlockSpec((1, D), lambda i, k: (0, 0)),    # beta
            ],
            out_specs=pl.BlockSpec((tm, D), lambda i, k: (i, 0)),
            scratch_shapes=[pltpu.VMEM((tm, D), jnp.float32)],
        ),
        compiler_params=pltpu.CompilerParams(
            dimension_semantics=("parallel", "arbitrary")),
    )(x2d, w1, w2, g2, b2)
    return out2d.reshape(B, S, D)


# ----------------------------------------------------------------------------
# Final vocab projection (Linear with bias), row x vocab tiled
# ----------------------------------------------------------------------------
def _proj_kernel(x_ref, w_ref, b_ref, o_ref):
    y = jnp.dot(x_ref[...], w_ref[...], preferred_element_type=jnp.float32)
    o_ref[...] = (y + b_ref[...].astype(jnp.float32)).astype(o_ref.dtype)


def projection(x, w, b, *, row_tile=512, vocab_tile=1024):
    """x: [B, S, D] -> logits [B*S, vocab]."""
    B, S, D = x.shape
    V = w.shape[1]
    M = B * S
    tm = _pick_row_tile(M, row_tile)
    tv = _pick_lane_tile(V, vocab_tile)   # keep vocab weight tiles VMEM-sized
    x2d = x.reshape(M, D)
    b2 = b.reshape(1, V)
    return pl.pallas_call(
        _proj_kernel,
        out_shape=jax.ShapeDtypeStruct((M, V), x.dtype),
        grid_spec=pltpu.PrefetchScalarGridSpec(
            num_scalar_prefetch=0,
            grid=(M // tm, V // tv),
            in_specs=[
                pl.BlockSpec((tm, D), lambda i, j: (i, 0)),   # x row tile
                pl.BlockSpec((D, tv), lambda i, j: (0, j)),   # W vocab tile
                pl.BlockSpec((1, tv), lambda i, j: (0, j)),   # bias vocab tile
            ],
            out_specs=pl.BlockSpec((tm, tv), lambda i, j: (i, j)),
        ),
        compiler_params=pltpu.CompilerParams(
            dimension_semantics=("parallel", "parallel")),
    )(x2d, w, b2)


# ----------------------------------------------------------------------------
# Full myGPT_softmax10x forward
# ----------------------------------------------------------------------------
def gpt_softmax10x_forward(X, params, *, n_heads, d_k, d_v):
    """X: [batch, tgt_len] int token ids -> (logits [B*S, vocab], [attn per layer])."""
    B, S = X.shape
    # TODO(synk): embedding-table gather (data-dependent row lookup) has no clean
    # rectangular BlockSpec equivalent; done with jnp advanced indexing here.
    hid = params["tok_emb"][X] + params["pos_emb"][jnp.arange(S)][None, :, :]

    # Decoder self-attention mask: pad (token==0 keys) OR strict-upper causal.
    pad = (X == 0)[:, None, :]                                   # [B, 1, S]
    causal = jnp.triu(jnp.ones((S, S), dtype=bool), k=1)[None]   # [1, S, S]
    mask_f = jnp.logical_or(pad, causal).astype(jnp.float32)     # [B, S, S]

    attns = []
    for lp in params["layers"]:
        hid, attn = multi_head_attention(
            hid, lp["wq"], lp["wk"], lp["wv"], lp["wo"],
            lp["ln1_g"], lp["ln1_b"], mask_f,
            n_heads=n_heads, d_k=d_k, d_v=d_v)
        hid = poswise_feed_forward_net(
            hid, lp["w1"], lp["w2"], lp["ln2_g"], lp["ln2_b"])
        attns.append(attn)

    logits = projection(hid, params["proj_w"], params["proj_b"])
    return logits, attns


# ----------------------------------------------------------------------------
# Pure-JAX reference (mirrors the PyTorch module)
# ----------------------------------------------------------------------------
def _ref_layer_norm(x, g, b):
    mean = x.mean(-1, keepdims=True)
    var = ((x - mean) ** 2).mean(-1, keepdims=True)
    return (x - mean) * jax.lax.rsqrt(var + LN_EPS) * g + b


def gpt_softmax10x_reference(X, params, *, n_heads, d_k, d_v):
    B, S = X.shape
    hid = params["tok_emb"][X] + params["pos_emb"][jnp.arange(S)][None, :, :]
    pad = (X == 0)[:, None, :]
    causal = jnp.triu(jnp.ones((S, S), dtype=bool), k=1)[None]
    mask = jnp.logical_or(pad, causal)
    attns = []
    for lp in params["layers"]:
        q = (hid @ lp["wq"]).reshape(B, S, n_heads, d_k).transpose(0, 2, 1, 3)
        k = (hid @ lp["wk"]).reshape(B, S, n_heads, d_k).transpose(0, 2, 1, 3)
        v = (hid @ lp["wv"]).reshape(B, S, n_heads, d_v).transpose(0, 2, 1, 3)
        scores = 10.0 * jnp.einsum("bhqd,bhkd->bhqk", q, k) / math.sqrt(d_k)
        scores = jnp.where(mask[:, None], MASK_FILL, scores)
        attn = jax.nn.softmax(scores, axis=-1)
        ctx = jnp.einsum("bhqk,bhkd->bhqd", attn, v)
        ctx = ctx.transpose(0, 2, 1, 3).reshape(B, S, n_heads * d_v)
        hid = _ref_layer_norm(ctx @ lp["wo"] + hid, lp["ln1_g"], lp["ln1_b"])
        ffn = jnp.maximum(hid @ lp["w1"], 0.0) @ lp["w2"]
        hid = _ref_layer_norm(ffn + hid, lp["ln2_g"], lp["ln2_b"])
        attns.append(attn)
    logits = (hid @ params["proj_w"] + params["proj_b"])
    return logits.reshape(-1, params["proj_w"].shape[1]), attns


if __name__ == "__main__":
    # Force full-f32 matmuls in the pure-JAX reference so the check isolates
    # kernel correctness rather than XLA's default bf16 matmul passes.
    jax.config.update("jax_default_matmul_precision", "highest")

    batch, seq = 2, 8
    d_model, d_ff = 32, 64
    n_heads, d_k, d_v = 2, 16, 16
    vocab_size, max_pos, n_layers = 50, 16, 2

    key = jax.random.PRNGKey(0)
    keys = jax.random.split(key, 24)

    def normal(k, shape, scale=0.05):
        return scale * jax.random.normal(k, shape, dtype=jnp.float32)

    params = {
        "tok_emb": normal(keys[0], (vocab_size, d_model), 1.0),
        "pos_emb": normal(keys[1], (max_pos, d_model), 1.0),
        "proj_w": normal(keys[2], (d_model, vocab_size)),
        "proj_b": normal(keys[3], (vocab_size,)),
        "layers": [],
    }
    for l in range(n_layers):
        ks = keys[4 + 6 * l: 4 + 6 * (l + 1)]
        params["layers"].append({
            "wq": normal(ks[0], (d_model, n_heads * d_k)),
            "wk": normal(ks[1], (d_model, n_heads * d_k)),
            "wv": normal(ks[2], (d_model, n_heads * d_v)),
            "wo": normal(ks[3], (n_heads * d_v, d_model)),
            "ln1_g": jnp.ones((d_model,), jnp.float32),
            "ln1_b": jnp.zeros((d_model,), jnp.float32),
            "w1": normal(ks[4], (d_model, d_ff)),
            "w2": normal(ks[5], (d_ff, d_model)),
            "ln2_g": jnp.ones((d_model,), jnp.float32),
            "ln2_b": jnp.zeros((d_model,), jnp.float32),
        })

    # Token ids in [1, vocab); put a pad token (id 0) at the end of each row to
    # exercise the pad mask without fully-masked attention rows.
    X = jax.random.randint(keys[20], (batch, seq), 1, vocab_size, dtype=jnp.int32)
    X = X.at[:, -1].set(0)

    forward = jax.jit(functools.partial(
        gpt_softmax10x_forward, n_heads=n_heads, d_k=d_k, d_v=d_v))
    logits, attns = forward(X, params)
    jax.block_until_ready((logits, attns))

    ref_logits, ref_attns = gpt_softmax10x_reference(
        X, params, n_heads=n_heads, d_k=d_k, d_v=d_v)

    assert logits.shape == (batch * seq, vocab_size)
    max_err = float(jnp.max(jnp.abs(logits - ref_logits)))
    assert jnp.allclose(logits, ref_logits, atol=1e-3, rtol=1e-3), max_err
    for a, ra in zip(attns, ref_attns):
        assert jnp.allclose(a, ra, atol=1e-3, rtol=1e-3)

    print("KERNEL_OK")
</pallas_src>

<mosaic_0001>
module attributes {stable_mosaic.version = 11 : i64} {
  func.func @_mha_kernel(%arg0: i32, %arg1: i32, %arg2: memref<1x8x32xf32, #tpu.memory_space<vmem>>, %arg3: memref<1x32x16xf32, #tpu.memory_space<vmem>>, %arg4: memref<1x32x16xf32, #tpu.memory_space<vmem>>, %arg5: memref<1x32x16xf32, #tpu.memory_space<vmem>>, %arg6: memref<1x16x32xf32, #tpu.memory_space<vmem>>, %arg7: memref<1x8x8xf32, #tpu.memory_space<vmem>>, %arg8: memref<1x32xf32, #tpu.memory_space<vmem>>, %arg9: memref<1x32xf32, #tpu.memory_space<vmem>>, %arg10: memref<1x8x32xf32, #tpu.memory_space<vmem>>, %arg11: memref<1x1x8x8xf32, #tpu.memory_space<vmem>>, %arg12: memref<8x32xf32, #tpu.memory_space<vmem>>) attributes {dimension_semantics = [#tpu.dimension_semantics<parallel>, #tpu.dimension_semantics<arbitrary>], iteration_bounds = array<i64: 2, 2>, scalar_prefetch = 0 : i64, scratch_operands = 1 : i64, tpu.core_type = #tpu.core_type<tc>, window_params = [{transform_indices = @transform_0, window_bounds = array<i64: 1, 8, 32>}, {transform_indices = @transform_1, window_bounds = array<i64: 1, 32, 16>}, {transform_indices = @transform_2, window_bounds = array<i64: 1, 32, 16>}, {transform_indices = @transform_3, window_bounds = array<i64: 1, 32, 16>}, {transform_indices = @transform_4, window_bounds = array<i64: 1, 16, 32>}, {transform_indices = @transform_5, window_bounds = array<i64: 1, 8, 8>}, {pipeline_mode = #tpu.pipeline_mode<synchronous>, transform_indices = @transform_6, window_bounds = array<i64: 1, 32>}, {pipeline_mode = #tpu.pipeline_mode<synchronous>, transform_indices = @transform_7, window_bounds = array<i64: 1, 32>}, {transform_indices = @transform_8, window_bounds = array<i64: 1, 8, 32>}, {transform_indices = @transform_9, window_bounds = array<i64: 1, 1, 8, 8>}]} {
    %c0_i32 = arith.constant 0 : i32
    %0 = arith.cmpi eq, %arg1, %c0_i32 : i32
    %1 = arith.extui %0 : i1 to i32
    %c0_i32_0 = arith.constant 0 : i32
    %2 = arith.cmpi ne, %1, %c0_i32_0 : i32
    scf.if %2 {
      %cst_37 = arith.constant 0.000000e+00 : f32
      %45 = vector.broadcast %cst_37 : f32 to vector<8x32xf32>
      %c0_38 = arith.constant 0 : index
      %c0_39 = arith.constant 0 : index
      %46 = vector.load %arg12[%c0_38, %c0_39] : memref<8x32xf32, #tpu.memory_space<vmem>>, vector<8x32xf32>
      tpu.vector_store %arg12[%c0_38, %c0_39], %45 {strides = array<i32>} : memref<8x32xf32, #tpu.memory_space<vmem>>, vector<8x32xf32>,
    } else {
    }
    %c0 = arith.constant 0 : index
    %c0_1 = arith.constant 0 : index
    %c0_2 = arith.constant 0 : index
    %3 = vector.load %arg2[%c0, %c0_1, %c0_2] : memref<1x8x32xf32, #tpu.memory_space<vmem>>, vector<1x8x32xf32>
    %4 = vector.shape_cast %3 : vector<1x8x32xf32> to vector<8x32xf32>
    %c0_3 = arith.constant 0 : index
    %c0_4 = arith.constant 0 : index
    %c0_5 = arith.constant 0 : index
    %5 = vector.load %arg3[%c0_3, %c0_4, %c0_5] : memref<1x32x16xf32, #tpu.memory_space<vmem>>, vector<1x32x16xf32>
    %6 = vector.shape_cast %5 : vector<1x32x16xf32> to vector<32x16xf32>
    %cst = arith.constant dense<0.000000e+00> : vector<8x16xf32>
    %7 = tpu.matmul %4, %6, %cst {dimension_numbers = #tpu.dot_dimension_numbers<[1], [0], [0], [1], [0, 0, 1, 1], [], []>, precision = #tpu.contract_precision<fp32>} : vector<8x32xf32>, vector<32x16xf32>, vector<8x16xf32> -> vector<8x16xf32>
    %c0_6 = arith.constant 0 : index
    %c0_7 = arith.constant 0 : index
    %c0_8 = arith.constant 0 : index
    %8 = vector.load %arg4[%c0_6, %c0_7, %c0_8] : memref<1x32x16xf32, #tpu.memory_space<vmem>>, vector<1x32x16xf32>
    %9 = vector.shape_cast %8 : vector<1x32x16xf32> to vector<32x16xf32>
    %cst_9 = arith.constant dense<0.000000e+00> : vector<8x16xf32>
    %10 = tpu.matmul %4, %9, %cst_9 {dimension_numbers = #tpu.dot_dimension_numbers<[1], [0], [0], [1], [0, 0, 1, 1], [], []>, precision = #tpu.contract_precision<fp32>} : vector<8x32xf32>, vector<32x16xf32>, vector<8x16xf32> -> vector<8x16xf32>
    %c0_10 = arith.constant 0 : index
    %c0_11 = arith.constant 0 : index
    %c0_12 = arith.constant 0 : index
    %11 = vector.load %arg5[%c0_10, %c0_11, %c0_12] : memref<1x32x16xf32, #tpu.memory_space<vmem>>, vector<1x32x16xf32>
    %12 = vector.shape_cast %11 : vector<1x32x16xf32> to vector<32x16xf32>
    %cst_13 = arith.constant dense<0.000000e+00> : vector<8x16xf32>
    %13 = tpu.matmul %4, %12, %cst_13 {dimension_numbers = #tpu.dot_dimension_numbers<[1], [0], [0], [1], [0, 0, 1, 1], [], []>, precision = #tpu.contract_precision<fp32>} : vector<8x32xf32>, vector<32x16xf32>, vector<8x16xf32> -> vector<8x16xf32>
    %cst_14 = arith.constant dense<0.000000e+00> : vector<8x8xf32>
    %14 = tpu.matmul %7, %10, %cst_14 {dimension_numbers = #tpu.dot_dimension_numbers<[1], [1], [0], [0], [0, 0, 1, 0], [], []>, precision = #tpu.contract_precision<fp32>} : vector<8x16xf32>, vector<8x16xf32>, vector<8x8xf32> -> vector<8x8xf32>
    %cst_15 = arith.constant 2.500000e+00 : f32
    %15 = vector.broadcast %cst_15 : f32 to vector<8x8xf32>
    %16 = arith.mulf %14, %15 : vector<8x8xf32>
    %c0_16 = arith.constant 0 : index
    %c0_17 = arith.constant 0 : index
    %c0_18 = arith.constant 0 : index
    %17 = vector.load %arg7[%c0_16, %c0_17, %c0_18] : memref<1x8x8xf32, #tpu.memory_space<vmem>>, vector<1x8x8xf32>
    %18 = vector.shape_cast %17 : vector<1x8x8xf32> to vector<8x8xf32>
    %cst_19 = arith.constant 0.000000e+00 : f32
    %19 = vector.broadcast %cst_19 : f32 to vector<8x8xf32>
    %20 = arith.cmpf one, %18, %19 : vector<8x8xf32>
    %cst_20 = arith.constant -1.000000e+09 : f32
    %21 = vector.broadcast %cst_20 : f32 to vector<8x8xf32>
    %22 = arith.select %20, %21, %16 : vector<8x8xi1>, vector<8x8xf32>
    %cst_21 = arith.constant dense<0xFF800000> : vector<8xf32>
    %23 = vector.multi_reduction <maximumf>, %22, %cst_21 [1] : vector<8x8xf32> to vector<8xf32>
    %24 = vector.shape_cast %23 : vector<8xf32> to vector<8x1xf32>
    %25 = vector.broadcast %24 : vector<8x1xf32> to vector<8x8xf32>
    %26 = arith.subf %22, %25 : vector<8x8xf32>
    %27 = math.exp %26 : vector<8x8xf32>
    %cst_22 = arith.constant dense<0.000000e+00> : vector<8xf32>
    %28 = vector.multi_reduction <add>, %27, %cst_22 [1] : vector<8x8xf32> to vector<8xf32>
    %29 = vector.shape_cast %28 : vector<8xf32> to vector<8x1xf32>
    %30 = vector.broadcast %29 : vector<8x1xf32> to vector<8x8xf32>
    %31 = arith.divf %27, %30 : vector<8x8xf32>
    %c0_23 = arith.constant 0 : index
    %c0_24 = arith.constant 0 : index
    %c0_25 = arith.constant 0 : index
    %c0_26 = arith.constant 0 : index
    %32 = vector.load %arg11[%c0_23, %c0_24, %c0_25, %c0_26] : memref<1x1x8x8xf32, #tpu.memory_space<vmem>>, vector<1x1x8x8xf32>
    %33 = vector.shape_cast %32 : vector<1x1x8x8xf32> to vector<8x8xf32>
    %34 = vector.shape_cast %31 : vector<8x8xf32> to vector<1x1x8x8xf32>
    tpu.vector_store %arg11[%c0_23, %c0_24, %c0_25, %c0_26], %34 {strides = array<i32>} : memref<1x1x8x8xf32, #tpu.memory_space<vmem>>, vector<1x1x8x8xf32>,
    %cst_27 = arith.constant dense<0.000000e+00> : vector<8x16xf32>
    %35 = tpu.matmul %31, %13, %cst_27 {dimension_numbers = #tpu.dot_dimension_numbers<[1], [0], [0], [1], [0, 0, 1, 1], [], []>, precision = #tpu.contract_precision<fp32>} : vector<8x8xf32>, vector<8x16xf32>, vector<8x16xf32> -> vector<8x16xf32>
    %c0_28 = arith.constant 0 : index
    %c0_29 = arith.constant 0 : index
    %36 = vector.load %arg12[%c0_28, %c0_29] : memref<8x32xf32, #tpu.memory_space<vmem>>, vector<8x32xf32>
    %c0_30 = arith.constant 0 : index
    %c0_31 = arith.constant 0 : index
    %c0_32 = arith.constant 0 : index
    %37 = vector.load %arg6[%c0_30, %c0_31, %c0_32] : memref<1x16x32xf32, #tpu.memory_space<vmem>>, vector<1x16x32xf32>
    %38 = vector.shape_cast %37 : vector<1x16x32xf32> to vector<16x32xf32>
    %cst_33 = arith.constant dense<0.000000e+00> : vector<8x32xf32>
    %39 = tpu.matmul %35, %38, %cst_33 {dimension_numbers = #tpu.dot_dimension_numbers<[1], [0], [0], [1], [0, 0, 1, 1], [], []>, precision = #tpu.contract_precision<fp32>} : vector<8x16xf32>, vector<16x32xf32>, vector<8x32xf32> -> vector<8x32xf32>
    %40 = arith.addf %36, %39 : vector<8x32xf32>
    %c0_34 = arith.constant 0 : index
    %c0_35 = arith.constant 0 : index
    %41 = vector.load %arg12[%c0_34, %c0_35] : memref<8x32xf32, #tpu.memory_space<vmem>>, vector<8x32xf32>
    tpu.vector_store %arg12[%c0_34, %c0_35], %40 {strides = array<i32>} : memref<8x32xf32, #tpu.memory_space<vmem>>, vector<8x32xf32>,
    %c1_i32 = arith.constant 1 : i32
    %42 = arith.cmpi eq, %arg1, %c1_i32 : i32
    %43 = arith.extui %42 : i1 to i32
    %c0_i32_36 = arith.constant 0 : i32
    %44 = arith.cmpi ne, %43, %c0_i32_36 : i32
    scf.if %44 {
      %c0_37 = arith.constant 0 : index
      %c0_38 = arith.constant 0 : index
      %45 = vector.load %arg12[%c0_37, %c0_38] : memref<8x32xf32, #tpu.memory_space<vmem>>, vector<8x32xf32>
      %46 = arith.addf %45, %4 : vector<8x32xf32>
      %c0_39 = arith.constant 0 : index
      %c0_40 = arith.constant 0 : index
      %47 = vector.load %arg8[%c0_39, %c0_40] : memref<1x32xf32, #tpu.memory_space<vmem>>, vector<1x32xf32>
      %c0_41 = arith.constant 0 : index
      %c0_42 = arith.constant 0 : index
      %48 = vector.load %arg9[%c0_41, %c0_42] : memref<1x32xf32, #tpu.memory_space<vmem>>, vector<1x32xf32>
      %cst_43 = arith.constant dense<0.000000e+00> : vector<8xf32>
      %49 = vector.multi_reduction <add>, %46, %cst_43 [1] : vector<8x32xf32> to vector<8xf32>
      %50 = vector.shape_cast %49 : vector<8xf32> to vector<8x1xf32>
      %cst_44 = arith.constant 3.200000e+01 : f32
      %51 = vector.broadcast %cst_44 : f32 to vector<8x1xf32>
      %52 = arith.divf %50, %51 : vector<8x1xf32>
      %53 = vector.broadcast %52 : vector<8x1xf32> to vector<8x32xf32>
      %54 = arith.subf %46, %53 : vector<8x32xf32>
      %55 = arith.mulf %54, %54 : vector<8x32xf32>
      %cst_45 = arith.constant dense<0.000000e+00> : vector<8xf32>
      %56 = vector.multi_reduction <add>, %55, %cst_45 [1] : vector<8x32xf32> to vector<8xf32>
      %57 = vector.shape_cast %56 : vector<8xf32> to vector<8x1xf32>
      %cst_46 = arith.constant 3.200000e+01 : f32
      %58 = vector.broadcast %cst_46 : f32 to vector<8x1xf32>
      %59 = arith.divf %57, %58 : vector<8x1xf32>
      %60 = vector.broadcast %52 : vector<8x1xf32> to vector<8x32xf32>
      %61 = arith.subf %46, %60 : vector<8x32xf32>
      %cst_47 = arith.constant 9.99999974E-6 : f32
      %62 = vector.broadcast %cst_47 : f32 to vector<8x1xf32>
      %63 = arith.addf %59, %62 : vector<8x1xf32>
      %64 = math.rsqrt %63 : vector<8x1xf32>
      %65 = vector.broadcast %64 : vector<8x1xf32> to vector<8x32xf32>
      %66 = arith.mulf %61, %65 : vector<8x32xf32>
      %67 = vector.broadcast %47 : vector<1x32xf32> to vector<8x32xf32>
      %68 = arith.mulf %66, %67 : vector<8x32xf32>
      %69 = vector.broadcast %48 : vector<1x32xf32> to vector<8x32xf32>
      %70 = arith.addf %68, %69 : vector<8x32xf32>
      %c0_48 = arith.constant 0 : index
      %c0_49 = arith.constant 0 : index
      %c0_50 = arith.constant 0 : index
      %71 = vector.load %arg10[%c0_48, %c0_49, %c0_50] : memref<1x8x32xf32, #tpu.memory_space<vmem>>, vector<1x8x32xf32>
      %72 = vector.shape_cast %71 : vector<1x8x32xf32> to vector<8x32xf32>
      %73 = vector.shape_cast %70 : vector<8x32xf32> to vector<1x8x32xf32>
      tpu.vector_store %arg10[%c0_48, %c0_49, %c0_50], %73 {strides = array<i32>} : memref<1x8x32xf32, #tpu.memory_space<vmem>>, vector<1x8x32xf32>,
    } else {
    }
    return
  }
  func.func @transform_0(%arg0: i32, %arg1: i32) -> (i32, i32, i32) {
    %c0_i32 = arith.constant 0 : i32
    %c0_i32_0 = arith.constant 0 : i32
    %c0_i32_1 = arith.constant 0 : i32
    return %arg0, %c0_i32, %c0_i32_0 : i32, i32, i32
  }
  func.func @transform_1(%arg0: i32, %arg1: i32) -> (i32, i32, i32) {
    %c0_i32 = arith.constant 0 : i32
    %c0_i32_0 = arith.constant 0 : i32
    %c0_i32_1 = arith.constant 0 : i32
    return %arg1, %c0_i32, %c0_i32_0 : i32, i32, i32
  }
  func.func @transform_2(%arg0: i32, %arg1: i32) -> (i32, i32, i32) {
    %c0_i32 = arith.constant 0 : i32
    %c0_i32_0 = arith.constant 0 : i32
    %c0_i32_1 = arith.constant 0 : i32
    return %arg1, %c0_i32, %c0_i32_0 : i32, i32, i32
  }
  func.func @transform_3(%arg0: i32, %arg1: i32) -> (i32, i32, i32) {
    %c0_i32 = arith.constant 0 : i32
    %c0_i32_0 = arith.constant 0 : i32
    %c0_i32_1 = arith.constant 0 : i32
    return %arg1, %c0_i32, %c0_i32_0 : i32, i32, i32
  }
  func.func @transform_4(%arg0: i32, %arg1: i32) -> (i32, i32, i32) {
    %c0_i32 = arith.constant 0 : i32
    %c0_i32_0 = arith.constant 0 : i32
    %c0_i32_1 = arith.constant 0 : i32
    return %arg1, %c0_i32, %c0_i32_0 : i32, i32, i32
  }
  func.func @transform_5(%arg0: i32, %arg1: i32) -> (i32, i32, i32) {
    %c0_i32 = arith.constant 0 : i32
    %c0_i32_0 = arith.constant 0 : i32
    %c0_i32_1 = arith.constant 0 : i32
    return %arg0, %c0_i32, %c0_i32_0 : i32, i32, i32
  }
  func.func @transform_6(%arg0: i32, %arg1: i32) -> (i32, i32) {
    %c0_i32 = arith.constant 0 : i32
    %c0_i32_0 = arith.constant 0 : i32
    %c0_i32_1 = arith.constant 0 : i32
    return %c0_i32, %c0_i32_0 : i32, i32
  }
  func.func @transform_7(%arg0: i32, %arg1: i32) -> (i32, i32) {
    %c0_i32 = arith.constant 0 : i32
    %c0_i32_0 = arith.constant 0 : i32
    %c0_i32_1 = arith.constant 0 : i32
    return %c0_i32, %c0_i32_0 : i32, i32
  }
  func.func @transform_8(%arg0: i32, %arg1: i32) -> (i32, i32, i32) {
    %c0_i32 = arith.constant 0 : i32
    %c0_i32_0 = arith.constant 0 : i32
    %c0_i32_1 = arith.constant 0 : i32
    return %arg0, %c0_i32, %c0_i32_0 : i32, i32, i32
  }
  func.func @transform_9(%arg0: i32, %arg1: i32) -> (i32, i32, i32, i32) {
    %c0_i32 = arith.constant 0 : i32
    %c0_i32_0 = arith.constant 0 : i32
    %c0_i32_1 = arith.constant 0 : i32
    return %arg0, %arg1, %c0_i32, %c0_i32_0 : i32, i32, i32, i32
  }
}

module attributes {stable_mosaic.version = 11 : i64} {
  func.func @_proj_kernel(%arg0: i32, %arg1: i32, %arg2: memref<16x32xf32, #tpu.memory_space<vmem>>, %arg3: memref<32x50xf32, #tpu.memory_space<vmem>>, %arg4: memref<1x50xf32, #tpu.memory_space<vmem>>, %arg5: memref<16x50xf32, #tpu.memory_space<vmem>>) attributes {dimension_semantics = [#tpu.dimension_semantics<parallel>, #tpu.dimension_semantics<parallel>], iteration_bounds = array<i64: 1, 1>, scalar_prefetch = 0 : i64, scratch_operands = 0 : i64, tpu.core_type = #tpu.core_type<tc>, window_params = [{transform_indices = @transform_0, window_bounds = array<i64: 16, 32>}, {transform_indices = @transform_1, window_bounds = array<i64: 32, 50>}, {transform_indices = @transform_2, window_bounds = array<i64: 1, 50>}, {transform_indices = @transform_3, window_bounds = array<i64: 16, 50>}]} {
    %c0 = arith.constant 0 : index
    %c0_0 = arith.constant 0 : index
    %0 = vector.load %arg2[%c0, %c0_0] : memref<16x32xf32, #tpu.memory_space<vmem>>, vector<16x32xf32>
    %c0_1 = arith.constant 0 : index
    %c0_2 = arith.constant 0 : index
    %1 = vector.load %arg3[%c0_1, %c0_2] : memref<32x50xf32, #tpu.memory_space<vmem>>, vector<32x50xf32>
    %cst = arith.constant dense<0.000000e+00> : vector<16x50xf32>
    %2 = tpu.matmul %0, %1, %cst {dimension_numbers = #tpu.dot_dimension_numbers<[1], [0], [0], [1], [0, 0, 1, 1], [], []>, precision = #tpu.contract_precision<fp32>} : vector<16x32xf32>, vector<32x50xf32>, vector<16x50xf32> -> vector<16x50xf32>
    %c0_3 = arith.constant 0 : index
    %c0_4 = arith.constant 0 : index
    %3 = vector.load %arg4[%c0_3, %c0_4] : memref<1x50xf32, #tpu.memory_space<vmem>>, vector<1x50xf32>
    %4 = vector.broadcast %3 : vector<1x50xf32> to vector<16x50xf32>
    %5 = arith.addf %2, %4 : vector<16x50xf32>
    %c0_5 = arith.constant 0 : index
    %c0_6 = arith.constant 0 : index
    %6 = vector.load %arg5[%c0_5, %c0_6] : memref<16x50xf32, #tpu.memory_space<vmem>>, vector<16x50xf32>
    tpu.vector_store %arg5[%c0_5, %c0_6], %5 {strides = array<i32>} : memref<16x50xf32, #tpu.memory_space<vmem>>, vector<16x50xf32>,
    return
  }
  func.func @transform_0(%arg0: i32, %arg1: i32) -> (i32, i32) {
    %c0_i32 = arith.constant 0 : i32
    %c0_i32_0 = arith.constant 0 : i32
    return %arg0, %c0_i32 : i32, i32
  }
  func.func @transform_1(%arg0: i32, %arg1: i32) -> (i32, i32) {
    %c0_i32 = arith.constant 0 : i32
    %c0_i32_0 = arith.constant 0 : i32
    return %c0_i32, %arg1 : i32, i32
  }
  func.func @transform_2(%arg0: i32, %arg1: i32) -> (i32, i32) {
    %c0_i32 = arith.constant 0 : i32
    %c0_i32_0 = arith.constant 0 : i32
    return %c0_i32, %arg1 : i32, i32
  }
  func.func @transform_3(%arg0: i32, %arg1: i32) -> (i32, i32) {
    %c0_i32 = arith.constant 0 : i32
    return %arg0, %arg1 : i32, i32
  }
}

module attributes {stable_mosaic.version = 11 : i64} {
  func.func @_ffn_kernel(%arg0: i32, %arg1: i32, %arg2: memref<16x32xf32, #tpu.memory_space<vmem>>, %arg3: memref<32x64xf32, #tpu.memory_space<vmem>>, %arg4: memref<64x32xf32, #tpu.memory_space<vmem>>, %arg5: memref<1x32xf32, #tpu.memory_space<vmem>>, %arg6: memref<1x32xf32, #tpu.memory_space<vmem>>, %arg7: memref<16x32xf32, #tpu.memory_space<vmem>>, %arg8: memref<16x32xf32, #tpu.memory_space<vmem>>) attributes {dimension_semantics = [#tpu.dimension_semantics<parallel>, #tpu.dimension_semantics<arbitrary>], iteration_bounds = array<i64: 1, 1>, scalar_prefetch = 0 : i64, scratch_operands = 1 : i64, tpu.core_type = #tpu.core_type<tc>, window_params = [{transform_indices = @transform_0, window_bounds = array<i64: 16, 32>}, {transform_indices = @transform_1, window_bounds = array<i64: 32, 64>}, {transform_indices = @transform_2, window_bounds = array<i64: 64, 32>}, {pipeline_mode = #tpu.pipeline_mode<synchronous>, transform_indices = @transform_3, window_bounds = array<i64: 1, 32>}, {pipeline_mode = #tpu.pipeline_mode<synchronous>, transform_indices = @transform_4, window_bounds = array<i64: 1, 32>}, {transform_indices = @transform_5, window_bounds = array<i64: 16, 32>}]} {
    %c0_i32 = arith.constant 0 : i32
    %0 = arith.cmpi eq, %arg1, %c0_i32 : i32
    %1 = arith.extui %0 : i1 to i32
    %c0_i32_0 = arith.constant 0 : i32
    %2 = arith.cmpi ne, %1, %c0_i32_0 : i32
    scf.if %2 {
      %cst_14 = arith.constant 0.000000e+00 : f32
      %16 = vector.broadcast %cst_14 : f32 to vector<16x32xf32>
      %c0_15 = arith.constant 0 : index
      %c0_16 = arith.constant 0 : index
      %17 = vector.load %arg8[%c0_15, %c0_16] : memref<16x32xf32, #tpu.memory_space<vmem>>, vector<16x32xf32>
      tpu.vector_store %arg8[%c0_15, %c0_16], %16 {strides = array<i32>} : memref<16x32xf32, #tpu.memory_space<vmem>>, vector<16x32xf32>,
    } else {
    }
    %c0 = arith.constant 0 : index
    %c0_1 = arith.constant 0 : index
    %3 = vector.load %arg2[%c0, %c0_1] : memref<16x32xf32, #tpu.memory_space<vmem>>, vector<16x32xf32>
    %c0_2 = arith.constant 0 : index
    %c0_3 = arith.constant 0 : index
    %4 = vector.load %arg3[%c0_2, %c0_3] : memref<32x64xf32, #tpu.memory_space<vmem>>, vector<32x64xf32>
    %cst = arith.constant dense<0.000000e+00> : vector<16x64xf32>
    %5 = tpu.matmul %3, %4, %cst {dimension_numbers = #tpu.dot_dimension_numbers<[1], [0], [0], [1], [0, 0, 1, 1], [], []>, precision = #tpu.contract_precision<fp32>} : vector<16x32xf32>, vector<32x64xf32>, vector<16x64xf32> -> vector<16x64xf32>
    %cst_4 = arith.constant 0.000000e+00 : f32
    %6 = vector.broadcast %cst_4 : f32 to vector<16x64xf32>
    %7 = arith.maximumf %5, %6 : vector<16x64xf32>
    %c0_5 = arith.constant 0 : index
    %c0_6 = arith.constant 0 : index
    %8 = vector.load %arg8[%c0_5, %c0_6] : memref<16x32xf32, #tpu.memory_space<vmem>>, vector<16x32xf32>
    %c0_7 = arith.constant 0 : index
    %c0_8 = arith.constant 0 : index
    %9 = vector.load %arg4[%c0_7, %c0_8] : memref<64x32xf32, #tpu.memory_space<vmem>>, vector<64x32xf32>
    %cst_9 = arith.constant dense<0.000000e+00> : vector<16x32xf32>
    %10 = tpu.matmul %7, %9, %cst_9 {dimension_numbers = #tpu.dot_dimension_numbers<[1], [0], [0], [1], [0, 0, 1, 1], [], []>, precision = #tpu.contract_precision<fp32>} : vector<16x64xf32>, vector<64x32xf32>, vector<16x32xf32> -> vector<16x32xf32>
    %11 = arith.addf %8, %10 : vector<16x32xf32>
    %c0_10 = arith.constant 0 : index
    %c0_11 = arith.constant 0 : index
    %12 = vector.load %arg8[%c0_10, %c0_11] : memref<16x32xf32, #tpu.memory_space<vmem>>, vector<16x32xf32>
    tpu.vector_store %arg8[%c0_10, %c0_11], %11 {strides = array<i32>} : memref<16x32xf32, #tpu.memory_space<vmem>>, vector<16x32xf32>,
    %c0_i32_12 = arith.constant 0 : i32
    %13 = arith.cmpi eq, %arg1, %c0_i32_12 : i32
    %14 = arith.extui %13 : i1 to i32
    %c0_i32_13 = arith.constant 0 : i32
    %15 = arith.cmpi ne, %14, %c0_i32_13 : i32
    scf.if %15 {
      %c0_14 = arith.constant 0 : index
      %c0_15 = arith.constant 0 : index
      %16 = vector.load %arg8[%c0_14, %c0_15] : memref<16x32xf32, #tpu.memory_space<vmem>>, vector<16x32xf32>
      %17 = arith.addf %16, %3 : vector<16x32xf32>
      %c0_16 = arith.constant 0 : index
      %c0_17 = arith.constant 0 : index
      %18 = vector.load %arg5[%c0_16, %c0_17] : memref<1x32xf32, #tpu.memory_space<vmem>>, vector<1x32xf32>
      %c0_18 = arith.constant 0 : index
      %c0_19 = arith.constant 0 : index
      %19 = vector.load %arg6[%c0_18, %c0_19] : memref<1x32xf32, #tpu.memory_space<vmem>>, vector<1x32xf32>
      %cst_20 = arith.constant dense<0.000000e+00> : vector<16xf32>
      %20 = vector.multi_reduction <add>, %17, %cst_20 [1] : vector<16x32xf32> to vector<16xf32>
      %21 = vector.shape_cast %20 : vector<16xf32> to vector<16x1xf32>
      %cst_21 = arith.constant 3.200000e+01 : f32
      %22 = vector.broadcast %cst_21 : f32 to vector<16x1xf32>
      %23 = arith.divf %21, %22 : vector<16x1xf32>
      %24 = vector.broadcast %23 : vector<16x1xf32> to vector<16x32xf32>
      %25 = arith.subf %17, %24 : vector<16x32xf32>
      %26 = arith.mulf %25, %25 : vector<16x32xf32>
      %cst_22 = arith.constant dense<0.000000e+00> : vector<16xf32>
      %27 = vector.multi_reduction <add>, %26, %cst_22 [1] : vector<16x32xf32> to vector<16xf32>
      %28 = vector.shape_cast %27 : vector<16xf32> to vector<16x1xf32>
      %cst_23 = arith.constant 3.200000e+01 : f32
      %29 = vector.broadcast %cst_23 : f32 to vector<16x1xf32>
      %30 = arith.divf %28, %29 : vector<16x1xf32>
      %31 = vector.broadcast %23 : vector<16x1xf32> to vector<16x32xf32>
      %32 = arith.subf %17, %31 : vector<16x32xf32>
      %cst_24 = arith.constant 9.99999974E-6 : f32
      %33 = vector.broadcast %cst_24 : f32 to vector<16x1xf32>
      %34 = arith.addf %30, %33 : vector<16x1xf32>
      %35 = math.rsqrt %34 : vector<16x1xf32>
      %36 = vector.broadcast %35 : vector<16x1xf32> to vector<16x32xf32>
      %37 = arith.mulf %32, %36 : vector<16x32xf32>
      %38 = vector.broadcast %18 : vector<1x32xf32> to vector<16x32xf32>
      %39 = arith.mulf %37, %38 : vector<16x32xf32>
      %40 = vector.broadcast %19 : vector<1x32xf32> to vector<16x32xf32>
      %41 = arith.addf %39, %40 : vector<16x32xf32>
      %c0_25 = arith.constant 0 : index
      %c0_26 = arith.constant 0 : index
      %42 = vector.load %arg7[%c0_25, %c0_26] : memref<16x32xf32, #tpu.memory_space<vmem>>, vector<16x32xf32>
      tpu.vector_store %arg7[%c0_25, %c0_26], %41 {strides = array<i32>} : memref<16x32xf32, #tpu.memory_space<vmem>>, vector<16x32xf32>,
    } else {
    }
    return
  }
  func.func @transform_0(%arg0: i32, %arg1: i32) -> (i32, i32) {
    %c0_i32 = arith.constant 0 : i32
    %c0_i32_0 = arith.constant 0 : i32
    return %arg0, %c0_i32 : i32, i32
  }
  func.func @transform_1(%arg0: i32, %arg1: i32) -> (i32, i32) {
    %c0_i32 = arith.constant 0 : i32
    %c0_i32_0 = arith.constant 0 : i32
    return %c0_i32, %arg1 : i32, i32
  }
  func.func @transform_2(%arg0: i32, %arg1: i32) -> (i32, i32) {
    %c0_i32 = arith.constant 0 : i32
    %c0_i32_0 = arith.constant 0 : i32
    return %arg1, %c0_i32 : i32, i32
  }
  func.func @transform_3(%arg0: i32, %arg1: i32) -> (i32, i32) {
    %c0_i32 = arith.constant 0 : i32
    %c0_i32_0 = arith.constant 0 : i32
    %c0_i32_1 = arith.constant 0 : i32
    return %c0_i32, %c0_i32_0 : i32, i32
  }
  func.func @transform_4(%arg0: i32, %arg1: i32) -> (i32, i32) {
    %c0_i32 = arith.constant 0 : i32
    %c0_i32_0 = arith.constant 0 : i32
    %c0_i32_1 = arith.constant 0 : i32
    return %c0_i32, %c0_i32_0 : i32, i32
  }
  func.func @transform_5(%arg0: i32, %arg1: i32) -> (i32, i32) {
    %c0_i32 = arith.constant 0 : i32
    %c0_i32_0 = arith.constant 0 : i32
    return %arg0, %c0_i32 : i32, i32
  }
}

</mosaic_0001>

<llo_original>
// kernel: gpt_softmax10x_forward.9
$region0: #{gpt_softmax10x_forward.9}
  #allocation0 [shape = 'u32[]', space=smem, size = 0x4, offset = 0x4, fixed_abs, tag = 'smem constant byte address 0x4 - core index']
  #allocation1 [shape = 'u32[144,128]{1,0:T(1,128)}', space=vmem, size = 0x12000, scoped, tag = 'internal scratch']
  %s0 = inlined_call_operand.vmem [shape: f32[16,32], index: 0, kind: input, shape index: {}]
  %s1 = inlined_call_operand.vmem [shape: f32[32,50], index: 1, kind: input, shape index: {}]
  %s2 = inlined_call_operand.vmem [shape: f32[1,50], index: 2, kind: input, shape index: {}]
  %s3 = inlined_call_operand.hbm [shape: f32[16,50], index: 3, kind: output, shape index: {}]
  %s4 = sld [smem:[#allocation0]]
  $region22: #{gpt_softmax10x_forward.9} parent=0
    _
  %s6 = ssub.s32 1, %s4
  %s7 = scalar_select 0, %s6, %s4
  $region1: #{gpt_softmax10x_forward.9} parent=0
    #allocation2 [shape = 'u8[8192]{0}', space=vmem, size = 0x2000, scoped, tag = 'output window, operand 0, single buffered']
    #allocation3 [shape = 's32[1]{0}', space=sflag, size = 0x4, scoped, tag = 'scoped memory for gpt_softmax10x_forward.9']
    %8 = vsyncpa [#allocation3], 0
    // Predicated region
    $region2: #{gpt_softmax10x_forward.9} parent=1 // pred_check
      _
    $region3: #{gpt_softmax10x_forward.9} parent=1 // pred_check_branch
      %10 = sbr.rel (0) target = $region5
    $region4: #{gpt_softmax10x_forward.9} parent=1 // pred_region
      _
    $region5: #{gpt_softmax10x_forward.9} parent=1 // pred_fallthru
      _
    // Predicated region
    $region6: #{gpt_softmax10x_forward.9} parent=1 // pred_check
      _
    $region7: #{gpt_softmax10x_forward.9} parent=1 // pred_check_branch
      %12 = sbr.rel (0) target = $region9
    $region8: #{gpt_softmax10x_forward.9} parent=1 // pred_region
      _
    $region9: #{gpt_softmax10x_forward.9} parent=1 // pred_fallthru
      _
    // Predicated region
    $region10: #{gpt_softmax10x_forward.9} parent=1 // pred_check
      _
    $region11: #{gpt_softmax10x_forward.9} parent=1 // pred_check_branch
      %14 = sbr.rel (0) target = $region13
    $region12: #{gpt_softmax10x_forward.9} parent=1 // pred_region
      _
    $region13: #{gpt_softmax10x_forward.9} parent=1 // pred_fallthru
      _
    %v15 = vld [vmem:[%s0] sm:$0xff]
    %v16 = vld [vmem:[%s0 + $0x8] sm:$0xff]
    %v17 = vld [vmem:[%s1] sm:$0xff]
    %v18 = vld [vmem:[%s1 + $0x8] sm:$0xff]
    %v19 = vld [vmem:[%s1 + $0x10] sm:$0xff]
    %v20 = vld [vmem:[%s1 + $0x18] sm:$0xff]
    %v21 = vld [vmem:[%s2] sm:$0x1]
    %v23 = vlaneseq
    %v24 = vshrl.u32 %v23, 7
    %v25 = vsub.s32 0, %v24
    %v26 = vrot.slane %v21, %v25
    %vm28 = vcmask 261120
    %v30 = vsel %vm28, %v15, 0
    %v33 = vsel %vm28, %v16, 0
    %35 = vmatprep.subr.mxu0 0.0
    %36 = vmatpush1.msra.mxu0 0.0
    %37 = vmatprep.subr.mxu0 0.0
    %38 = vmatpush1.msra.mxu0 0.0
    %39 = vmatprep.subr.mxu0 0.0
    %40 = vmatpush1.msra.mxu0 0.0
    %41 = vmatprep.subr.mxu0 0.0
    %42 = vmatpush1.msra.mxu0 0.0
    %43 = vmatprep.subr.mxu0 0.0
    %44 = vmatpush1.msra.mxu0 0.0
    %45 = vmatprep.subr.mxu0 0.0
    %46 = vmatpush1.msra.mxu0 0.0
    %47 = vmatprep.subr.mxu0 0.0
    %48 = vmatpush1.msra.mxu0 0.0
    %49 = vmatprep.subr.mxu0 0.0
    %50 = vmatpush1.msra.mxu0 0.0
    %51 = vmatprep.subr.mxu0 0.0
    %52 = vmatpush1.msra.mxu0 0.0
    %53 = vmatprep.subr.mxu0 0.0
    %54 = vmatpush1.msra.mxu0 0.0
    %55 = vmatprep.subr.mxu0 0.0
    %56 = vmatpush1.msra.mxu0 0.0
    %57 = vmatprep.subr.mxu0 0.0
    %58 = vmatpush1.msra.mxu0 0.0
    %59 = vmatprep.subr.mxu0 0.0
    %v60 = vand.u32 %v20, 4294901760
    %61 = vmatpush1.msra.mxu0 %v60
    %62 = vmatprep.subr.mxu0 0.0
    %v63 = vand.u32 %v19, 4294901760
    %64 = vmatpush1.msra.mxu0 %v63
    %65 = vmatprep.subr.mxu0 0.0
    %v66 = vand.u32 %v18, 4294901760
    %67 = vmatpush1.msra.mxu0 %v66
    %68 = vmatprep.subr.mxu0 0.0
    %v69 = vand.u32 %v17, 4294901760
    %70 = vmatpush1.msra.mxu0 %v69
    %71 = vmatprep.subr.mxu0 0.0
    %72 = vmatpush2.msra.mxu0 0.0
    %73 = vmatprep.subr.mxu0 0.0
    %74 = vmatpush2.msra.mxu0 0.0
    %75 = vmatprep.subr.mxu0 0.0
    %76 = vmatpush2.msra.mxu0 0.0
    %77 = vmatprep.subr.mxu0 0.0
    %78 = vmatpush2.msra.mxu0 0.0
    %79 = vmatprep.subr.mxu0 0.0
    %80 = vmatpush2.msra.mxu0 0.0
    %81 = vmatprep.subr.mxu0 0.0
    %82 = vmatpush2.msra.mxu0 0.0
    %83 = vmatprep.subr.mxu0 0.0
    %84 = vmatpush2.msra.mxu0 0.0
    %85 = vmatprep.subr.mxu0 0.0
    %86 = vmatpush2.msra.mxu0 0.0
    %87 = vmatprep.subr.mxu0 0.0
    %88 = vmatpush2.msra.mxu0 0.0
    %89 = vmatprep.subr.mxu0 0.0
    %90 = vmatpush2.msra.mxu0 0.0
    %91 = vmatprep.subr.mxu0 0.0
    %92 = vmatpush2.msra.mxu0 0.0
    %93 = vmatprep.subr.mxu0 0.0
    %94 = vmatpush2.msra.mxu0 0.0
    %95 = vmatprep.subr.mxu0 0.0
    %96 = vmatpush2.msra.mxu0 0.0
    %97 = vmatprep.subr.mxu0 0.0
    %98 = vmatpush2.msra.mxu0 0.0
    %99 = vmatprep.subr.mxu0 0.0
    %100 = vmatpush2.msra.mxu0 0.0
    %101 = vmatprep.subr.mxu0 0.0
    %102 = vmatpush2.msra.mxu0 0.0
    %103 = vmatprep.mubr.f32.mxu0 0.0
    %v104 = vand.u32 %v30, 4294901760
    %v105 = vsub.f32 %v30, %v104
    %v106 = vand.u32 %v105, 4294901760
    %v107 = vsub.f32 %v105, %v106
    %v108 = vand.u32 %v107, 4294901760
    %109 = vmatmul.mubr.f32.gmra.mxu0 %v108
    %v110 = vpop.f32.mrf.mxu0
    %v111 = vadd.f32 %v26, %v110
    %v112 = vpop.f32.mrf.mxu0
    %113 = vmatprep.mubr.f32.mxu0 0.0
    %v114 = vand.u32 %v33, 4294901760
    %v115 = vsub.f32 %v33, %v114
    %v116 = vand.u32 %v115, 4294901760
    %v117 = vsub.f32 %v115, %v116
    %v118 = vand.u32 %v117, 4294901760
    %119 = vmatmul.mubr.f32.gmra.mxu0 %v118
    %v120 = vpop.f32.mrf.mxu0
    %v121 = vadd.f32 %v26, %v120
    %v122 = vpop.f32.mrf.mxu0
    %123 = vdwg.mxu0
    %124 = vmatprep.subr.mxu0 0.0
    %125 = vmatpush1.msra.mxu0 0.0
    %126 = vmatprep.subr.mxu0 0.0
    %127 = vmatpush1.msra.mxu0 0.0
    %128 = vmatprep.subr.mxu0 0.0
    %129 = vmatpush1.msra.mxu0 0.0
    %130 = vmatprep.subr.mxu0 0.0
    %131 = vmatpush1.msra.mxu0 0.0
    %132 = vmatprep.subr.mxu0 0.0
    %133 = vmatpush1.msra.mxu0 0.0
    %134 = vmatprep.subr.mxu0 0.0
    %135 = vmatpush1.msra.mxu0 0.0
    %136 = vmatprep.subr.mxu0 0.0
    %137 = vmatpush1.msra.mxu0 0.0
    %138 = vmatprep.subr.mxu0 0.0
    %139 = vmatpush1.msra.mxu0 0.0
    %140 = vmatprep.subr.mxu0 0.0
    %141 = vmatpush1.msra.mxu0 0.0
    %142 = vmatprep.subr.mxu0 0.0
    %143 = vmatpush1.msra.mxu0 0.0
    %144 = vmatprep.subr.mxu0 0.0
    %145 = vmatpush1.msra.mxu0 0.0
    %146 = vmatprep.subr.mxu0 0.0
    %147 = vmatpush1.msra.mxu0 0.0
    %148 = vmatprep.subr.mxu0 0.0
    %v149 = vand.u32 %v20, 4294901760
    %v150 = vsub.f32 %v20, %v149
    %v151 = vand.u32 %v150, 4294901760
    %v152 = vsub.f32 %v150, %v151
    %v153 = vand.u32 %v152, 4294901760
    %154 = vmatpush1.msra.mxu0 %v153
    %155 = vmatprep.subr.mxu0 0.0
    %v156 = vand.u32 %v19, 4294901760
    %v157 = vsub.f32 %v19, %v156
    %v158 = vand.u32 %v157, 4294901760
    %v159 = vsub.f32 %v157, %v158
    %v160 = vand.u32 %v159, 4294901760
    %161 = vmatpush1.msra.mxu0 %v160
    %162 = vmatprep.subr.mxu0 0.0
    %v163 = vand.u32 %v18, 4294901760
    %v164 = vsub.f32 %v18, %v163
    %v165 = vand.u32 %v164, 4294901760
    %v166 = vsub.f32 %v164, %v165
    %v167 = vand.u32 %v166, 4294901760
    %168 = vmatpush1.msra.mxu0 %v167
    %169 = vmatprep.subr.mxu0 0.0
    %v170 = vand.u32 %v17, 4294901760
    %v171 = vsub.f32 %v17, %v170
    %v172 = vand.u32 %v171, 4294901760
    %v173 = vsub.f32 %v171, %v172
    %v174 = vand.u32 %v173, 4294901760
    %175 = vmatpush1.msra.mxu0 %v174
    %176 = vmatprep.subr.mxu0 0.0
    %177 = vmatpush2.msra.mxu0 0.0
    %178 = vmatprep.subr.mxu0 0.0
    %179 = vmatpush2.msra.mxu0 0.0
    %180 = vmatprep.subr.mxu0 0.0
    %181 = vmatpush2.msra.mxu0 0.0
    %182 = vmatprep.subr.mxu0 0.0
    %183 = vmatpush2.msra.mxu0 0.0
    %184 = vmatprep.subr.mxu0 0.0
    %185 = vmatpush2.msra.mxu0 0.0
    %186 = vmatprep.subr.mxu0 0.0
    %187 = vmatpush2.msra.mxu0 0.0
    %188 = vmatprep.subr.mxu0 0.0
    %189 = vmatpush2.msra.mxu0 0.0
    %190 = vmatprep.subr.mxu0 0.0
    %191 = vmatpush2.msra.mxu0 0.0
    %192 = vmatprep.subr.mxu0 0.0
    %193 = vmatpush2.msra.mxu0 0.0
    %194 = vmatprep.subr.mxu0 0.0
    %195 = vmatpush2.msra.mxu0 0.0
    %196 = vmatprep.subr.mxu0 0.0
    %197 = vmatpush2.msra.mxu0 0.0
    %198 = vmatprep.subr.mxu0 0.0
    %199 = vmatpush2.msra.mxu0 0.0
    %200 = vmatprep.subr.mxu0 0.0
    %201 = vmatpush2.msra.mxu0 0.0
    %202 = vmatprep.subr.mxu0 0.0
    %203 = vmatpush2.msra.mxu0 0.0
    %204 = vmatprep.subr.mxu0 0.0
    %205 = vmatpush2.msra.mxu0 0.0
    %206 = vmatprep.subr.mxu0 0.0
    %207 = vmatpush2.msra.mxu0 0.0
    %208 = vmatprep.mubr.f32.mxu0 0.0
    %v209 = vand.u32 %v30, 4294901760
    %210 = vmatmul.mubr.f32.gmra.mxu0 %v209
    %v211 = vpop.f32.mrf.mxu0
    %v212 = vadd.f32 %v111, %v211
    %v213 = vpop.f32.mrf.mxu0
    %214 = vmatprep.mubr.f32.mxu0 0.0
    %v215 = vand.u32 %v33, 4294901760
    %216 = vmatmul.mubr.f32.gmra.mxu0 %v215
    %v217 = vpop.f32.mrf.mxu0
    %v218 = vadd.f32 %v121, %v217
    %v219 = vpop.f32.mrf.mxu0
    %220 = vdwg.mxu0
    %221 = vmatprep.subr.mxu0 0.0
    %222 = vmatpush1.msra.mxu0 0.0
    %223 = vmatprep.subr.mxu0 0.0
    %224 = vmatpush1.msra.mxu0 0.0
    %225 = vmatprep.subr.mxu0 0.0
    %226 = vmatpush1.msra.mxu0 0.0
    %227 = vmatprep.subr.mxu0 0.0
    %228 = vmatpush1.msra.mxu0 0.0
    %229 = vmatprep.subr.mxu0 0.0
    %230 = vmatpush1.msra.mxu0 0.0
    %231 = vmatprep.subr.mxu0 0.0
    %232 = vmatpush1.msra.mxu0 0.0
    %233 = vmatprep.subr.mxu0 0.0
    %234 = vmatpush1.msra.mxu0 0.0
    %235 = vmatprep.subr.mxu0 0.0
    %236 = vmatpush1.msra.mxu0 0.0
    %237 = vmatprep.subr.mxu0 0.0
    %238 = vmatpush1.msra.mxu0 0.0
    %239 = vmatprep.subr.mxu0 0.0
    %240 = vmatpush1.msra.mxu0 0.0
    %241 = vmatprep.subr.mxu0 0.0
    %242 = vmatpush1.msra.mxu0 0.0
    %243 = vmatprep.subr.mxu0 0.0
    %244 = vmatpush1.msra.mxu0 0.0
    %245 = vmatprep.subr.mxu0 0.0
    %v246 = vand.u32 %v20, 4294901760
    %v247 = vsub.f32 %v20, %v246
    %248 = vmatpush1.msra.mxu0 %v247
    %249 = vmatprep.subr.mxu0 0.0
    %v250 = vand.u32 %v19, 4294901760
    %v251 = vsub.f32 %v19, %v250
    %252 = vmatpush1.msra.mxu0 %v251
    %253 = vmatprep.subr.mxu0 0.0
    %v254 = vand.u32 %v18, 4294901760
    %v255 = vsub.f32 %v18, %v254
    %256 = vmatpush1.msra.mxu0 %v255
    %257 = vmatprep.subr.mxu0 0.0
    %v258 = vand.u32 %v17, 4294901760
    %v259 = vsub.f32 %v17, %v258
    %260 = vmatpush1.msra.mxu0 %v259
    %261 = vmatprep.subr.mxu0 0.0
    %262 = vmatpush2.msra.mxu0 0.0
    %263 = vmatprep.subr.mxu0 0.0
    %264 = vmatpush2.msra.mxu0 0.0
    %265 = vmatprep.subr.mxu0 0.0
    %266 = vmatpush2.msra.mxu0 0.0
    %267 = vmatprep.subr.mxu0 0.0
    %268 = vmatpush2.msra.mxu0 0.0
    %269 = vmatprep.subr.mxu0 0.0
    %270 = vmatpush2.msra.mxu0 0.0
    %271 = vmatprep.subr.mxu0 0.0
    %272 = vmatpush2.msra.mxu0 0.0
    %273 = vmatprep.subr.mxu0 0.0
    %274 = vmatpush2.msra.mxu0 0.0
    %275 = vmatprep.subr.mxu0 0.0
    %276 = vmatpush2.msra.mxu0 0.0
    %277 = vmatprep.subr.mxu0 0.0
    %278 = vmatpush2.msra.mxu0 0.0
    %279 = vmatprep.subr.mxu0 0.0
    %280 = vmatpush2.msra.mxu0 0.0
    %281 = vmatprep.subr.mxu0 0.0
    %282 = vmatpush2.msra.mxu0 0.0
    %283 = vmatprep.subr.mxu0 0.0
    %284 = vmatpush2.msra.mxu0 0.0
    %285 = vmatprep.subr.mxu0 0.0
    %286 = vmatpush2.msra.mxu0 0.0
    %287 = vmatprep.subr.mxu0 0.0
    %288 = vmatpush2.msra.mxu0 0.0
    %289 = vmatprep.subr.mxu0 0.0
    %290 = vmatpush2.msra.mxu0 0.0
    %291 = vmatprep.subr.mxu0 0.0
    %292 = vmatpush2.msra.mxu0 0.0
    %293 = vmatprep.mubr.f32.mxu0 0.0
    %v294 = vand.u32 %v30, 4294901760
    %v295 = vsub.f32 %v30, %v294
    %296 = vmatmul.mubr.f32.gmra.mxu0 %v295
    %v297 = vpop.f32.mrf.mxu0
    %v298 = vadd.f32 %v212, %v297
    %v299 = vpop.f32.mrf.mxu0
    %300 = vmatprep.mubr.f32.mxu0 0.0
    %v301 = vand.u32 %v33, 4294901760
    %v302 = vsub.f32 %v33, %v301
    %303 = vmatmul.mubr.f32.gmra.mxu0 %v302
    %v304 = vpop.f32.mrf.mxu0
    %v305 = vadd.f32 %v218, %v304
    %v306 = vpop.f32.mrf.mxu0
    %307 = vdwg.mxu0
    %308 = vmatprep.subr.mxu0 0.0
    %309 = vmatpush1.msra.mxu0 0.0
    %310 = vmatprep.subr.mxu0 0.0
    %311 = vmatpush1.msra.mxu0 0.0
    %312 = vmatprep.subr.mxu0 0.0
    %313 = vmatpush1.msra.mxu0 0.0
    %314 = vmatprep.subr.mxu0 0.0
    %315 = vmatpush1.msra.mxu0 0.0
    %316 = vmatprep.subr.mxu0 0.0
    %317 = vmatpush1.msra.mxu0 0.0
    %318 = vmatprep.subr.mxu0 0.0
    %319 = vmatpush1.msra.mxu0 0.0
    %320 = vmatprep.subr.mxu0 0.0
    %321 = vmatpush1.msra.mxu0 0.0
    %322 = vmatprep.subr.mxu0 0.0
    %323 = vmatpush1.msra.mxu0 0.0
    %324 = vmatprep.subr.mxu0 0.0
    %325 = vmatpush1.msra.mxu0 0.0
    %326 = vmatprep.subr.mxu0 0.0
    %327 = vmatpush1.msra.mxu0 0.0
    %328 = vmatprep.subr.mxu0 0.0
    %329 = vmatpush1.msra.mxu0 0.0
    %330 = vmatprep.subr.mxu0 0.0
    %331 = vmatpush1.msra.mxu0 0.0
    %332 = vmatprep.subr.mxu0 0.0
    %v333 = vand.u32 %v20, 4294901760
    %334 = vmatpush1.msra.mxu0 %v333
    %335 = vmatprep.subr.mxu0 0.0
    %v336 = vand.u32 %v19, 4294901760
    %337 = vmatpush1.msra.mxu0 %v336
    %338 = vmatprep.subr.mxu0 0.0
    %v339 = vand.u32 %v18, 4294901760
    %340 = vmatpush1.msra.mxu0 %v339
    %341 = vmatprep.subr.mxu0 0.0
    %v342 = vand.u32 %v17, 4294901760
    %343 = vmatpush1.msra.mxu0 %v342
    %344 = vmatprep.subr.mxu0 0.0
    %345 = vmatpush2.msra.mxu0 0.0
    %346 = vmatprep.subr.mxu0 0.0
    %347 = vmatpush2.msra.mxu0 0.0
    %348 = vmatprep.subr.mxu0 0.0
    %349 = vmatpush2.msra.mxu0 0.0
    %350 = vmatprep.subr.mxu0 0.0
    %351 = vmatpush2.msra.mxu0 0.0
    %352 = vmatprep.subr.mxu0 0.0
    %353 = vmatpush2.msra.mxu0 0.0
    %354 = vmatprep.subr.mxu0 0.0
    %355 = vmatpush2.msra.mxu0 0.0
    %356 = vmatprep.subr.mxu0 0.0
    %357 = vmatpush2.msra.mxu0 0.0
    %358 = vmatprep.subr.mxu0 0.0
    %359 = vmatpush2.msra.mxu0 0.0
    %360 = vmatprep.subr.mxu0 0.0
    %361 = vmatpush2.msra.mxu0 0.0
    %362 = vmatprep.subr.mxu0 0.0
    %363 = vmatpush2.msra.mxu0 0.0
    %364 = vmatprep.subr.mxu0 0.0
    %365 = vmatpush2.msra.mxu0 0.0
    %366 = vmatprep.subr.mxu0 0.0
    %367 = vmatpush2.msra.mxu0 0.0
    %368 = vmatprep.subr.mxu0 0.0
    %369 = vmatpush2.msra.mxu0 0.0
    %370 = vmatprep.subr.mxu0 0.0
    %371 = vmatpush2.msra.mxu0 0.0
    %372 = vmatprep.subr.mxu0 0.0
    %373 = vmatpush2.msra.mxu0 0.0
    %374 = vmatprep.subr.mxu0 0.0
    %375 = vmatpush2.msra.mxu0 0.0
    %376 = vmatprep.mubr.f32.mxu0 0.0
    %v377 = vand.u32 %v30, 4294901760
    %v378 = vsub.f32 %v30, %v377
    %v379 = vand.u32 %v378, 4294901760
    %380 = vmatmul.mubr.f32.gmra.mxu0 %v379
    %v381 = vpop.f32.mrf.mxu0
    %v382 = vadd.f32 %v298, %v381
    %v383 = vpop.f32.mrf.mxu0
    %384 = vmatprep.mubr.f32.mxu0 0.0
    %v385 = vand.u32 %v33, 4294901760
    %v386 = vsub.f32 %v33, %v385
    %v387 = vand.u32 %v386, 4294901760
    %388 = vmatmul.mubr.f32.gmra.mxu0 %v387
    %v389 = vpop.f32.mrf.mxu0
    %v390 = vadd.f32 %v305, %v389
    %v391 = vpop.f32.mrf.mxu0
    %392 = vdwg.mxu0
    %393 = vmatprep.subr.mxu0 0.0
    %394 = vmatpush1.msra.mxu0 0.0
    %395 = vmatprep.subr.mxu0 0.0
    %396 = vmatpush1.msra.mxu0 0.0
    %397 = vmatprep.subr.mxu0 0.0
    %398 = vmatpush1.msra.mxu0 0.0
    %399 = vmatprep.subr.mxu0 0.0
    %400 = vmatpush1.msra.mxu0 0.0
    %401 = vmatprep.subr.mxu0 0.0
    %402 = vmatpush1.msra.mxu0 0.0
    %403 = vmatprep.subr.mxu0 0.0
    %404 = vmatpush1.msra.mxu0 0.0
    %405 = vmatprep.subr.mxu0 0.0
    %406 = vmatpush1.msra.mxu0 0.0
    %407 = vmatprep.subr.mxu0 0.0
    %408 = vmatpush1.msra.mxu0 0.0
    %409 = vmatprep.subr.mxu0 0.0
    %410 = vmatpush1.msra.mxu0 0.0
    %411 = vmatprep.subr.mxu0 0.0
    %412 = vmatpush1.msra.mxu0 0.0
    %413 = vmatprep.subr.mxu0 0.0
    %414 = vmatpush1.msra.mxu0 0.0
    %415 = vmatprep.subr.mxu0 0.0
    %416 = vmatpush1.msra.mxu0 0.0
    %417 = vmatprep.subr.mxu0 0.0
    %v418 = vand.u32 %v20, 4294901760
    %v419 = vsub.f32 %v20, %v418
    %v420 = vand.u32 %v419, 4294901760
    %421 = vmatpush1.msra.mxu0 %v420
    %422 = vmatprep.subr.mxu0 0.0
    %v423 = vand.u32 %v19, 4294901760
    %v424 = vsub.f32 %v19, %v423
    %v425 = vand.u32 %v424, 4294901760
    %426 = vmatpush1.msra.mxu0 %v425
    %427 = vmatprep.subr.mxu0 0.0
    %v428 = vand.u32 %v18, 4294901760
    %v429 = vsub.f32 %v18, %v428
    %v430 = vand.u32 %v429, 4294901760
    %431 = vmatpush1.msra.mxu0 %v430
    %432 = vmatprep.subr.mxu0 0.0
    %v433 = vand.u32 %v17, 4294901760
    %v434 = vsub.f32 %v17, %v433
    %v435 = vand.u32 %v434, 4294901760
    %436 = vmatpush1.msra.mxu0 %v435
    %437 = vmatprep.subr.mxu0 0.0
    %438 = vmatpush2.msra.mxu0 0.0
    %439 = vmatprep.subr.mxu0 0.0
    %440 = vmatpush2.msra.mxu0 0.0
    %441 = vmatprep.subr.mxu0 0.0
    %442 = vmatpush2.msra.mxu0 0.0
    %443 = vmatprep.subr.mxu0 0.0
    %444 = vmatpush2.msra.mxu0 0.0
    %445 = vmatprep.subr.mxu0 0.0
    %446 = vmatpush2.msra.mxu0 0.0
    %447 = vmatprep.subr.mxu0 0.0
    %448 = vmatpush2.msra.mxu0 0.0
    %449 = vmatprep.subr.mxu0 0.0
    %450 = vmatpush2.msra.mxu0 0.0
    %451 = vmatprep.subr.mxu0 0.0
    %452 = vmatpush2.msra.mxu0 0.0
    %453 = vmatprep.subr.mxu0 0.0
    %454 = vmatpush2.msra.mxu0 0.0
    %455 = vmatprep.subr.mxu0 0.0
    %456 = vmatpush2.msra.mxu0 0.0
    %457 = vmatprep.subr.mxu0 0.0
    %458 = vmatpush2.msra.mxu0 0.0
    %459 = vmatprep.subr.mxu0 0.0
    %460 = vmatpush2.msra.mxu0 0.0
    %461 = vmatprep.subr.mxu0 0.0
    %462 = vmatpush2.msra.mxu0 0.0
    %463 = vmatprep.subr.mxu0 0.0
    %464 = vmatpush2.msra.mxu0 0.0
    %465 = vmatprep.subr.mxu0 0.0
    %466 = vmatpush2.msra.mxu0 0.0
    %467 = vmatprep.subr.mxu0 0.0
    %468 = vmatpush2.msra.mxu0 0.0
    %469 = vmatprep.mubr.f32.mxu0 0.0
    %v470 = vand.u32 %v30, 4294901760
    %471 = vmatmul.mubr.f32.gmra.mxu0 %v470
    %v472 = vpop.f32.mrf.mxu0
    %v473 = vadd.f32 %v382, %v472
    %v474 = vpop.f32.mrf.mxu0
    %475 = vmatprep.mubr.f32.mxu0 0.0
    %v476 = vand.u32 %v33, 4294901760
    %477 = vmatmul.mubr.f32.gmra.mxu0 %v476
    %v478 = vpop.f32.mrf.mxu0
    %v479 = vadd.f32 %v390, %v478
    %v480 = vpop.f32.mrf.mxu0
    %481 = vdwg.mxu0
    %482 = vmatprep.subr.mxu0 0.0
    %483 = vmatpush1.msra.mxu0 0.0
    %484 = vmatprep.subr.mxu0 0.0
    %485 = vmatpush1.msra.mxu0 0.0
    %486 = vmatprep.subr.mxu0 0.0
    %487 = vmatpush1.msra.mxu0 0.0
    %488 = vmatprep.subr.mxu0 0.0
    %489 = vmatpush1.msra.mxu0 0.0
    %490 = vmatprep.subr.mxu0 0.0
    %491 = vmatpush1.msra.mxu0 0.0
    %492 = vmatprep.subr.mxu0 0.0
    %493 = vmatpush1.msra.mxu0 0.0
    %494 = vmatprep.subr.mxu0 0.0
    %495 = vmatpush1.msra.mxu0 0.0
    %496 = vmatprep.subr.mxu0 0.0
    %497 = vmatpush1.msra.mxu0 0.0
    %498 = vmatprep.subr.mxu0 0.0
    %499 = vmatpush1.msra.mxu0 0.0
    %500 = vmatprep.subr.mxu0 0.0
    %501 = vmatpush1.msra.mxu0 0.0
    %502 = vmatprep.subr.mxu0 0.0
    %503 = vmatpush1.msra.mxu0 0.0
    %504 = vmatprep.subr.mxu0 0.0
    %505 = vmatpush1.msra.mxu0 0.0
    %506 = vmatprep.subr.mxu0 0.0
    %v507 = vand.u32 %v20, 4294901760
    %508 = vmatpush1.msra.mxu0 %v507
    %509 = vmatprep.subr.mxu0 0.0
    %v510 = vand.u32 %v19, 4294901760
    %511 = vmatpush1.msra.mxu0 %v510
    %512 = vmatprep.subr.mxu0 0.0
    %v513 = vand.u32 %v18, 4294901760
    %514 = vmatpush1.msra.mxu0 %v513
    %515 = vmatprep.subr.mxu0 0.0
    %v516 = vand.u32 %v17, 4294901760
    %517 = vmatpush1.msra.mxu0 %v516
    %518 = vmatprep.subr.mxu0 0.0
    %519 = vmatpush2.msra.mxu0 0.0
    %520 = vmatprep.subr.mxu0 0.0
    %521 = vmatpush2.msra.mxu0 0.0
    %522 = vmatprep.subr.mxu0 0.0
    %523 = vmatpush2.msra.mxu0 0.0
    %524 = vmatprep.subr.mxu0 0.0
    %525 = vmatpush2.msra.mxu0 0.0
    %526 = vmatprep.subr.mxu0 0.0
    %527 = vmatpush2.msra.mxu0 0.0
    %528 = vmatprep.subr.mxu0 0.0
    %529 = vmatpush2.msra.mxu0 0.0
    %530 = vmatprep.subr.mxu0 0.0
    %531 = vmatpush2.msra.mxu0 0.0
    %532 = vmatprep.subr.mxu0 0.0
    %533 = vmatpush2.msra.mxu0 0.0
    %534 = vmatprep.subr.mxu0 0.0
    %535 = vmatpush2.msra.mxu0 0.0
    %536 = vmatprep.subr.mxu0 0.0
    %537 = vmatpush2.msra.mxu0 0.0
    %538 = vmatprep.subr.mxu0 0.0
    %539 = vmatpush2.msra.mxu0 0.0
    %540 = vmatprep.subr.mxu0 0.0
    %541 = vmatpush2.msra.mxu0 0.0
    %542 = vmatprep.subr.mxu0 0.0
    %543 = vmatpush2.msra.mxu0 0.0
    %544 = vmatprep.subr.mxu0 0.0
    %545 = vmatpush2.msra.mxu0 0.0
    %546 = vmatprep.subr.mxu0 0.0
    %547 = vmatpush2.msra.mxu0 0.0
    %548 = vmatprep.subr.mxu0 0.0
    %549 = vmatpush2.msra.mxu0 0.0
    %550 = vmatprep.mubr.f32.mxu0 0.0
    %v551 = vand.u32 %v30, 4294901760
    %552 = vmatmul.mubr.f32.gmra.mxu0 %v551
    %v553 = vpop.f32.mrf.mxu0
    %v554 = vadd.f32 %v473, %v553
    %v555 = vpop.f32.mrf.mxu0
    %556 = vmatprep.mubr.f32.mxu0 0.0
    %v557 = vand.u32 %v33, 4294901760
    %558 = vmatmul.mubr.f32.gmra.mxu0 %v557
    %v559 = vpop.f32.mrf.mxu0
    %v560 = vadd.f32 %v479, %v559
    %v561 = vpop.f32.mrf.mxu0
    %562 = vdwg.mxu0
    %vm563 = vcmask 408576
    %564 = vst.msk [vmem:[#allocation2] sm:$0xff] %vm563, %v554
    %565 = vst.msk [vmem:[#allocation2 + $0x8] sm:$0xff] %vm563, %v560
    // Predicated region
    $region14: #{gpt_softmax10x_forward.9} parent=1 // pred_check
      _
    $region15: #{gpt_softmax10x_forward.9} parent=1 // pred_check_branch
      %567 = sbr.rel (0) target = $region17
    $region16: #{gpt_softmax10x_forward.9} parent=1 // pred_region
      %s569 = ssub.s32 256, 256
      %570 = vsyncadd [#allocation3], %s569
      %s571 = sshll.u32 [#allocation2], 4
      %s572 = int_to_ptr.vmem [resolvable:$true] %s571
      %577 = dma.vmem_to_hbm [thread:$0]  %s572, 256, %s3, [#allocation3], 128, 128, 8
    $region17: #{gpt_softmax10x_forward.9} parent=1 // pred_fallthru
      _
    // Predicated region
    $region18: #{gpt_softmax10x_forward.9} parent=1 // pred_check
      _
    $region19: #{gpt_softmax10x_forward.9} parent=1 // pred_check_branch
      %579 = sbr.rel (0) target = $region21
    $region20: #{gpt_softmax10x_forward.9} parent=1 // pred_region
      %580 = dma.done [#allocation3], 256
    $region21: #{gpt_softmax10x_forward.9} parent=1 // pred_fallthru
      _
    %581 = vsyncpa [#allocation3], 1

// kernel: gpt_softmax10x_forward.6
$region0: #{gpt_softmax10x_forward.6}
  #allocation0 [shape = 'u32[]', space=smem, size = 0x4, offset = 0x4, fixed_abs, tag = 'smem constant byte address 0x4 - core index']
  #allocation1 [shape = 'u32[144,128]{1,0:T(1,128)}', space=vmem, size = 0x12000, scoped, tag = 'internal scratch']
  #allocation2 [shape = 'f32[16,32]{1,0:T(8,128)}', space=vmem, size = 0x2000, scoped, tag = 'scratch operand']
  %s0 = inlined_call_operand.vmem [shape: f32[16,32], index: 0, kind: input, shape index: {}]
  %s1 = inlined_call_operand.vmem [shape: f32[32,64], index: 1, kind: input, shape index: {}]
  %s2 = inlined_call_operand.vmem [shape: f32[64,32], index: 2, kind: input, shape index: {}]
  %s3 = inlined_call_operand.vmem [shape: f32[1,32], index: 3, kind: input, shape index: {}]
  %s4 = inlined_call_operand.vmem [shape: f32[1,32], index: 4, kind: input, shape index: {}]
  %s5 = inlined_call_operand.vmem [shape: f32[16,32], index: 5, kind: output, shape index: {}]
  %s6 = sld [smem:[#allocation0]]
  $region38: #{gpt_softmax10x_forward.6} parent=0
    _
  %s8 = ssub.s32 1, %s6
  %s9 = scalar_select 0, %s8, %s6
  // Predicated region
  $region2: #{gpt_softmax10x_forward.6} parent=0 // pred_check
    _
  $region3: #{gpt_softmax10x_forward.6} parent=0 // pred_check_branch
    %11 = sbr.rel (0) target = $region5
  $region4: #{gpt_softmax10x_forward.6} parent=0 // pred_region
    _
  $region5: #{gpt_softmax10x_forward.6} parent=0 // pred_fallthru
    _
  // Predicated region
  $region6: #{gpt_softmax10x_forward.6} parent=0 // pred_check
    _
  $region7: #{gpt_softmax10x_forward.6} parent=0 // pred_check_branch
    %13 = sbr.rel (0) target = $region9
  $region8: #{gpt_softmax10x_forward.6} parent=0 // pred_region
    _
  $region9: #{gpt_softmax10x_forward.6} parent=0 // pred_fallthru
    _
  // Predicated region
  $region10: #{gpt_softmax10x_forward.6} parent=0 // pred_check
    _
  $region11: #{gpt_softmax10x_forward.6} parent=0 // pred_check_branch
    %15 = sbr.rel (0) target = $region13
  $region12: #{gpt_softmax10x_forward.6} parent=0 // pred_region
    _
  $region13: #{gpt_softmax10x_forward.6} parent=0 // pred_fallthru
    _
  // Predicated region
  $region14: #{gpt_softmax10x_forward.6} parent=0 // pred_check
    _
  $region15: #{gpt_softmax10x_forward.6} parent=0 // pred_check_branch
    %17 = sbr.rel (0) target = $region17
  $region16: #{gpt_softmax10x_forward.6} parent=0 // pred_region
    _
  $region17: #{gpt_softmax10x_forward.6} parent=0 // pred_fallthru
    _
  // Predicated region
  $region18: #{gpt_softmax10x_forward.6} parent=0 // pred_check
    _
  $region19: #{gpt_softmax10x_forward.6} parent=0 // pred_check_branch
    %19 = sbr.rel (0) target = $region21
  $region20: #{gpt_softmax10x_forward.6} parent=0 // pred_region
    _
  $region21: #{gpt_softmax10x_forward.6} parent=0 // pred_fallthru
    _
  %p20 = scmp.eq.s32.totalorder 0, 0
  // Predicated region
  $region22: #{gpt_softmax10x_forward.6} parent=0 // pred_check
    %p21 = pneg %p20
  $region23: #{gpt_softmax10x_forward.6} parent=0 // pred_check_branch
    %23 = sbr.rel (%p21) target = $region25
  $region24: #{gpt_softmax10x_forward.6} parent=0 // pred_region
    %vm24 = vcmask 261120
    %25 = vst.msk [vmem:[#allocation2] sm:$0xff] %vm24, 0.0
    %26 = vst.msk [vmem:[#allocation2 + $0x8] sm:$0xff] %vm24, 0.0
  $region25: #{gpt_softmax10x_forward.6} parent=0 // pred_fallthru
    _
  %v27 = vld [vmem:[%s0] sm:$0xff]
  %v28 = vld [vmem:[%s0 + $0x8] sm:$0xff]
  %v29 = vld [vmem:[%s1] sm:$0xff]
  %v30 = vld [vmem:[%s1 + $0x8] sm:$0xff]
  %v31 = vld [vmem:[%s1 + $0x10] sm:$0xff]
  %v32 = vld [vmem:[%s1 + $0x18] sm:$0xff]
  %vm33 = vcmask 261120
  %v35 = vsel %vm33, %v27, 0
  %v38 = vsel %vm33, %v28, 0
  %40 = vmatprep.subr.mxu0 0.0
  %41 = vmatpush1.msra.mxu0 0.0
  %42 = vmatprep.subr.mxu0 0.0
  %43 = vmatpush1.msra.mxu0 0.0
  %44 = vmatprep.subr.mxu0 0.0
  %45 = vmatpush1.msra.mxu0 0.0
  %46 = vmatprep.subr.mxu0 0.0
  %47 = vmatpush1.msra.mxu0 0.0
  %48 = vmatprep.subr.mxu0 0.0
  %49 = vmatpush1.msra.mxu0 0.0
  %50 = vmatprep.subr.mxu0 0.0
  %51 = vmatpush1.msra.mxu0 0.0
  %52 = vmatprep.subr.mxu0 0.0
  %53 = vmatpush1.msra.mxu0 0.0
  %54 = vmatprep.subr.mxu0 0.0
  %55 = vmatpush1.msra.mxu0 0.0
  %56 = vmatprep.subr.mxu0 0.0
  %57 = vmatpush1.msra.mxu0 0.0
  %58 = vmatprep.subr.mxu0 0.0
  %59 = vmatpush1.msra.mxu0 0.0
  %60 = vmatprep.subr.mxu0 0.0
  %61 = vmatpush1.msra.mxu0 0.0
  %62 = vmatprep.subr.mxu0 0.0
  %63 = vmatpush1.msra.mxu0 0.0
  %64 = vmatprep.subr.mxu0 0.0
  %v65 = vand.u32 %v32, 4294901760
  %66 = vmatpush1.msra.mxu0 %v65
  %67 = vmatprep.subr.mxu0 0.0
  %v68 = vand.u32 %v31, 4294901760
  %69 = vmatpush1.msra.mxu0 %v68
  %70 = vmatprep.subr.mxu0 0.0
  %v71 = vand.u32 %v30, 4294901760
  %72 = vmatpush1.msra.mxu0 %v71
  %73 = vmatprep.subr.mxu0 0.0
  %v74 = vand.u32 %v29, 4294901760
  %75 = vmatpush1.msra.mxu0 %v74
  %76 = vmatprep.subr.mxu0 0.0
  %77 = vmatpush2.msra.mxu0 0.0
  %78 = vmatprep.subr.mxu0 0.0
  %79 = vmatpush2.msra.mxu0 0.0
  %80 = vmatprep.subr.mxu0 0.0
  %81 = vmatpush2.msra.mxu0 0.0
  %82 = vmatprep.subr.mxu0 0.0
  %83 = vmatpush2.msra.mxu0 0.0
  %84 = vmatprep.subr.mxu0 0.0
  %85 = vmatpush2.msra.mxu0 0.0
  %86 = vmatprep.subr.mxu0 0.0
  %87 = vmatpush2.msra.mxu0 0.0
  %88 = vmatprep.subr.mxu0 0.0
  %89 = vmatpush2.msra.mxu0 0.0
  %90 = vmatprep.subr.mxu0 0.0
  %91 = vmatpush2.msra.mxu0 0.0
  %92 = vmatprep.subr.mxu0 0.0
  %93 = vmatpush2.msra.mxu0 0.0
  %94 = vmatprep.subr.mxu0 0.0
  %95 = vmatpush2.msra.mxu0 0.0
  %96 = vmatprep.subr.mxu0 0.0
  %97 = vmatpush2.msra.mxu0 0.0
  %98 = vmatprep.subr.mxu0 0.0
  %99 = vmatpush2.msra.mxu0 0.0
  %100 = vmatprep.subr.mxu0 0.0
  %101 = vmatpush2.msra.mxu0 0.0
  %102 = vmatprep.subr.mxu0 0.0
  %103 = vmatpush2.msra.mxu0 0.0
  %104 = vmatprep.subr.mxu0 0.0
  %105 = vmatpush2.msra.mxu0 0.0
  %106 = vmatprep.subr.mxu0 0.0
  %107 = vmatpush2.msra.mxu0 0.0
  %108 = vmatprep.mubr.f32.mxu0 0.0
  %v109 = vand.u32 %v35, 4294901760
  %v110 = vsub.f32 %v35, %v109
  %v111 = vand.u32 %v110, 4294901760
  %v112 = vsub.f32 %v110, %v111
  %v113 = vand.u32 %v112, 4294901760
  %114 = vmatmul.mubr.f32.gmra.mxu0 %v113
  %v115 = vpop.f32.mrf.mxu0
  %v116 = vadd.f32 0.0, %v115
  %v117 = vpop.f32.mrf.mxu0
  %118 = vmatprep.mubr.f32.mxu0 0.0
  %v119 = vand.u32 %v38, 4294901760
  %v120 = vsub.f32 %v38, %v119
  %v121 = vand.u32 %v120, 4294901760
  %v122 = vsub.f32 %v120, %v121
  %v123 = vand.u32 %v122, 4294901760
  %124 = vmatmul.mubr.f32.gmra.mxu0 %v123
  %v125 = vpop.f32.mrf.mxu0
  %v126 = vadd.f32 0.0, %v125
  %v127 = vpop.f32.mrf.mxu0
  %128 = vdwg.mxu0
  %129 = vmatprep.subr.mxu0 0.0
  %130 = vmatpush1.msra.mxu0 0.0
  %131 = vmatprep.subr.mxu0 0.0
  %132 = vmatpush1.msra.mxu0 0.0
  %133 = vmatprep.subr.mxu0 0.0
  %134 = vmatpush1.msra.mxu0 0.0
  %135 = vmatprep.subr.mxu0 0.0
  %136 = vmatpush1.msra.mxu0 0.0
  %137 = vmatprep.subr.mxu0 0.0
  %138 = vmatpush1.msra.mxu0 0.0
  %139 = vmatprep.subr.mxu0 0.0
  %140 = vmatpush1.msra.mxu0 0.0
  %141 = vmatprep.subr.mxu0 0.0
  %142 = vmatpush1.msra.mxu0 0.0
  %143 = vmatprep.subr.mxu0 0.0
  %144 = vmatpush1.msra.mxu0 0.0
  %145 = vmatprep.subr.mxu0 0.0
  %146 = vmatpush1.msra.mxu0 0.0
  %147 = vmatprep.subr.mxu0 0.0
  %148 = vmatpush1.msra.mxu0 0.0
  %149 = vmatprep.subr.mxu0 0.0
  %150 = vmatpush1.msra.mxu0 0.0
  %151 = vmatprep.subr.mxu0 0.0
  %152 = vmatpush1.msra.mxu0 0.0
  %153 = vmatprep.subr.mxu0 0.0
  %v154 = vand.u32 %v32, 4294901760
  %v155 = vsub.f32 %v32, %v154
  %v156 = vand.u32 %v155, 4294901760
  %v157 = vsub.f32 %v155, %v156
  %v158 = vand.u32 %v157, 4294901760
  %159 = vmatpush1.msra.mxu0 %v158
  %160 = vmatprep.subr.mxu0 0.0
  %v161 = vand.u32 %v31, 4294901760
  %v162 = vsub.f32 %v31, %v161
  %v163 = vand.u32 %v162, 4294901760
  %v164 = vsub.f32 %v162, %v163
  %v165 = vand.u32 %v164, 4294901760
  %166 = vmatpush1.msra.mxu0 %v165
  %167 = vmatprep.subr.mxu0 0.0
  %v168 = vand.u32 %v30, 4294901760
  %v169 = vsub.f32 %v30, %v168
  %v170 = vand.u32 %v169, 4294901760
  %v171 = vsub.f32 %v169, %v170
  %v172 = vand.u32 %v171, 4294901760
  %173 = vmatpush1.msra.mxu0 %v172
  %174 = vmatprep.subr.mxu0 0.0
  %v175 = vand.u32 %v29, 4294901760
  %v176 = vsub.f32 %v29, %v175
  %v177 = vand.u32 %v176, 4294901760
  %v178 = vsub.f32 %v176, %v177
  %v179 = vand.u32 %v178, 4294901760
  %180 = vmatpush1.msra.mxu0 %v179
  %181 = vmatprep.subr.mxu0 0.0
  %182 = vmatpush2.msra.mxu0 0.0
  %183 = vmatprep.subr.mxu0 0.0
  %184 = vmatpush2.msra.mxu0 0.0
  %185 = vmatprep.subr.mxu0 0.0
  %186 = vmatpush2.msra.mxu0 0.0
  %187 = vmatprep.subr.mxu0 0.0
  %188 = vmatpush2.msra.mxu0 0.0
  %189 = vmatprep.subr.mxu0 0.0
  %190 = vmatpush2.msra.mxu0 0.0
  %191 = vmatprep.subr.mxu0 0.0
  %192 = vmatpush2.msra.mxu0 0.0
  %193 = vmatprep.subr.mxu0 0.0
  %194 = vmatpush2.msra.mxu0 0.0
  %195 = vmatprep.subr.mxu0 0.0
  %196 = vmatpush2.msra.mxu0 0.0
  %197 = vmatprep.subr.mxu0 0.0
  %198 = vmatpush2.msra.mxu0 0.0
  %199 = vmatprep.subr.mxu0 0.0
  %200 = vmatpush2.msra.mxu0 0.0
  %201 = vmatprep.subr.mxu0 0.0
  %202 = vmatpush2.msra.mxu0 0.0
  %203 = vmatprep.subr.mxu0 0.0
  %204 = vmatpush2.msra.mxu0 0.0
  %205 = vmatprep.subr.mxu0 0.0
  %206 = vmatpush2.msra.mxu0 0.0
  %207 = vmatprep.subr.mxu0 0.0
  %208 = vmatpush2.msra.mxu0 0.0
  %209 = vmatprep.subr.mxu0 0.0
  %210 = vmatpush2.msra.mxu0 0.0
  %211 = vmatprep.subr.mxu0 0.0
  %212 = vmatpush2.msra.mxu0 0.0
  %213 = vmatprep.mubr.f32.mxu0 0.0
  %v214 = vand.u32 %v35, 4294901760
  %215 = vmatmul.mubr.f32.gmra.mxu0 %v214
  %v216 = vpop.f32.mrf.mxu0
  %v217 = vadd.f32 %v116, %v216
  %v218 = vpop.f32.mrf.mxu0
  %219 = vmatprep.mubr.f32.mxu0 0.0
  %v220 = vand.u32 %v38, 4294901760
  %221 = vmatmul.mubr.f32.gmra.mxu0 %v220
  %v222 = vpop.f32.mrf.mxu0
  %v223 = vadd.f32 %v126, %v222
  %v224 = vpop.f32.mrf.mxu0
  %225 = vdwg.mxu0
  %226 = vmatprep.subr.mxu0 0.0
  %227 = vmatpush1.msra.mxu0 0.0
  %228 = vmatprep.subr.mxu0 0.0
  %229 = vmatpush1.msra.mxu0 0.0
  %230 = vmatprep.subr.mxu0 0.0
  %231 = vmatpush1.msra.mxu0 0.0
  %232 = vmatprep.subr.mxu0 0.0
  %233 = vmatpush1.msra.mxu0 0.0
  %234 = vmatprep.subr.mxu0 0.0
  %235 = vmatpush1.msra.mxu0 0.0
  %236 = vmatprep.subr.mxu0 0.0
  %237 = vmatpush1.msra.mxu0 0.0
  %238 = vmatprep.subr.mxu0 0.0
  %239 = vmatpush1.msra.mxu0 0.0
  %240 = vmatprep.subr.mxu0 0.0
  %241 = vmatpush1.msra.mxu0 0.0
  %242 = vmatprep.subr.mxu0 0.0
  %243 = vmatpush1.msra.mxu0 0.0
  %244 = vmatprep.subr.mxu0 0.0
  %245 = vmatpush1.msra.mxu0 0.0
  %246 = vmatprep.subr.mxu0 0.0
  %247 = vmatpush1.msra.mxu0 0.0
  %248 = vmatprep.subr.mxu0 0.0
  %249 = vmatpush1.msra.mxu0 0.0
  %250 = vmatprep.subr.mxu0 0.0
  %v251 = vand.u32 %v32, 4294901760
  %v252 = vsub.f32 %v32, %v251
  %253 = vmatpush1.msra.mxu0 %v252
  %254 = vmatprep.subr.mxu0 0.0
  %v255 = vand.u32 %v31, 4294901760
  %v256 = vsub.f32 %v31, %v255
  %257 = vmatpush1.msra.mxu0 %v256
  %258 = vmatprep.subr.mxu0 0.0
  %v259 = vand.u32 %v30, 4294901760
  %v260 = vsub.f32 %v30, %v259
  %261 = vmatpush1.msra.mxu0 %v260
  %262 = vmatprep.subr.mxu0 0.0
  %v263 = vand.u32 %v29, 4294901760
  %v264 = vsub.f32 %v29, %v263
  %265 = vmatpush1.msra.mxu0 %v264
  %266 = vmatprep.subr.mxu0 0.0
  %267 = vmatpush2.msra.mxu0 0.0
  %268 = vmatprep.subr.mxu0 0.0
  %269 = vmatpush2.msra.mxu0 0.0
  %270 = vmatprep.subr.mxu0 0.0
  %271 = vmatpush2.msra.mxu0 0.0
  %272 = vmatprep.subr.mxu0 0.0
  %273 = vmatpush2.msra.mxu0 0.0
  %274 = vmatprep.subr.mxu0 0.0
  %275 = vmatpush2.msra.mxu0 0.0
  %276 = vmatprep.subr.mxu0 0.0
  %277 = vmatpush2.msra.mxu0 0.0
  %278 = vmatprep.subr.mxu0 0.0
  %279 = vmatpush2.msra.mxu0 0.0
  %280 = vmatprep.subr.mxu0 0.0
  %281 = vmatpush2.msra.mxu0 0.0
  %282 = vmatprep.subr.mxu0 0.0
  %283 = vmatpush2.msra.mxu0 0.0
  %284 = vmatprep.subr.mxu0 0.0
  %285 = vmatpush2.msra.mxu0 0.0
  %286 = vmatprep.subr.mxu0 0.0
  %287 = vmatpush2.msra.mxu0 0.0
  %288 = vmatprep.subr.mxu0 0.0
  %289 = vmatpush2.msra.mxu0 0.0
  %290 = vmatprep.subr.mxu0 0.0
  %291 = vmatpush2.msra.mxu0 0.0
  %292 = vmatprep.subr.mxu0 0.0
  %293 = vmatpush2.msra.mxu0 0.0
  %294 = vmatprep.subr.mxu0 0.0
  %295 = vmatpush2.msra.mxu0 0.0
  %296 = vmatprep.subr.mxu0 0.0
  %297 = vmatpush2.msra.mxu0 0.0
  %298 = vmatprep.mubr.f32.mxu0 0.0
  %v299 = vand.u32 %v35, 4294901760
  %v300 = vsub.f32 %v35, %v299
  %301 = vmatmul.mubr.f32.gmra.mxu0 %v300
  %v302 = vpop.f32.mrf.mxu0
  %v303 = vadd.f32 %v217, %v302
  %v304 = vpop.f32.mrf.mxu0
  %305 = vmatprep.mubr.f32.mxu0 0.0
  %v306 = vand.u32 %v38, 4294901760
  %v307 = vsub.f32 %v38, %v306
  %308 = vmatmul.mubr.f32.gmra.mxu0 %v307
  %v309 = vpop.f32.mrf.mxu0
  %v310 = vadd.f32 %v223, %v309
  %v311 = vpop.f32.mrf.mxu0
  %312 = vdwg.mxu0
  %313 = vmatprep.subr.mxu0 0.0
  %314 = vmatpush1.msra.mxu0 0.0
  %315 = vmatprep.subr.mxu0 0.0
  %316 = vmatpush1.msra.mxu0 0.0
  %317 = vmatprep.subr.mxu0 0.0
  %318 = vmatpush1.msra.mxu0 0.0
  %319 = vmatprep.subr.mxu0 0.0
  %320 = vmatpush1.msra.mxu0 0.0
  %321 = vmatprep.subr.mxu0 0.0
  %322 = vmatpush1.msra.mxu0 0.0
  %323 = vmatprep.subr.mxu0 0.0
  %324 = vmatpush1.msra.mxu0 0.0
  %325 = vmatprep.subr.mxu0 0.0
  %326 = vmatpush1.msra.mxu0 0.0
  %327 = vmatprep.subr.mxu0 0.0
  %328 = vmatpush1.msra.mxu0 0.0
  %329 = vmatprep.subr.mxu0 0.0
  %330 = vmatpush1.msra.mxu0 0.0
  %331 = vmatprep.subr.mxu0 0.0
  %332 = vmatpush1.msra.mxu0 0.0
  %333 = vmatprep.subr.mxu0 0.0
  %334 = vmatpush1.msra.mxu0 0.0
  %335 = vmatprep.subr.mxu0 0.0
  %336 = vmatpush1.msra.mxu0 0.0
  %337 = vmatprep.subr.mxu0 0.0
  %v338 = vand.u32 %v32, 4294901760
  %339 = vmatpush1.msra.mxu0 %v338
  %340 = vmatprep.subr.mxu0 0.0
  %v341 = vand.u32 %v31, 4294901760
  %342 = vmatpush1.msra.mxu0 %v341
  %343 = vmatprep.subr.mxu0 0.0
  %v344 = vand.u32 %v30, 4294901760
  %345 = vmatpush1.msra.mxu0 %v344
  %346 = vmatprep.subr.mxu0 0.0
  %v347 = vand.u32 %v29, 4294901760
  %348 = vmatpush1.msra.mxu0 %v347
  %349 = vmatprep.subr.mxu0 0.0
  %350 = vmatpush2.msra.mxu0 0.0
  %351 = vmatprep.subr.mxu0 0.0
  %352 = vmatpush2.msra.mxu0 0.0
  %353 = vmatprep.subr.mxu0 0.0
  %354 = vmatpush2.msra.mxu0 0.0
  %355 = vmatprep.subr.mxu0 0.0
  %356 = vmatpush2.msra.mxu0 0.0
  %357 = vmatprep.subr.mxu0 0.0
  %358 = vmatpush2.msra.mxu0 0.0
  %359 = vmatprep.subr.mxu0 0.0
  %360 = vmatpush2.msra.mxu0 0.0
  %361 = vmatprep.subr.mxu0 0.0
  %362 = vmatpush2.msra.mxu0 0.0
  %363 = vmatprep.subr.mxu0 0.0
  %364 = vmatpush2.msra.mxu0 0.0
  %365 = vmatprep.subr.mxu0 0.0
  %366 = vmatpush2.msra.mxu0 0.0
  %367 = vmatprep.subr.mxu0 0.0
  %368 = vmatpush2.msra.mxu0 0.0
  %369 = vmatprep.subr.mxu0 0.0
  %370 = vmatpush2.msra.mxu0 0.0
  %371 = vmatprep.subr.mxu0 0.0
  %372 = vmatpush2.msra.mxu0 0.0
  %373 = vmatprep.subr.mxu0 0.0
  %374 = vmatpush2.msra.mxu0 0.0
  %375 = vmatprep.subr.mxu0 0.0
  %376 = vmatpush2.msra.mxu0 0.0
  %377 = vmatprep.subr.mxu0 0.0
  %378 = vmatpush2.msra.mxu0 0.0
  %379 = vmatprep.subr.mxu0 0.0
  %380 = vmatpush2.msra.mxu0 0.0
  %381 = vmatprep.mubr.f32.mxu0 0.0
  %v382 = vand.u32 %v35, 4294901760
  %v383 = vsub.f32 %v35, %v382
  %v384 = vand.u32 %v383, 4294901760
  %385 = vmatmul.mubr.f32.gmra.mxu0 %v384
  %v386 = vpop.f32.mrf.mxu0
  %v387 = vadd.f32 %v303, %v386
  %v388 = vpop.f32.mrf.mxu0
  %389 = vmatprep.mubr.f32.mxu0 0.0
  %v390 = vand.u32 %v38, 4294901760
  %v391 = vsub.f32 %v38, %v390
  %v392 = vand.u32 %v391, 4294901760
  %393 = vmatmul.mubr.f32.gmra.mxu0 %v392
  %v394 = vpop.f32.mrf.mxu0
  %v395 = vadd.f32 %v310, %v394
  %v396 = vpop.f32.mrf.mxu0
  %397 = vdwg.mxu0
  %398 = vmatprep.subr.mxu0 0.0
  %399 = vmatpush1.msra.mxu0 0.0
  %400 = vmatprep.subr.mxu0 0.0
  %401 = vmatpush1.msra.mxu0 0.0
  %402 = vmatprep.subr.mxu0 0.0
  %403 = vmatpush1.msra.mxu0 0.0
  %404 = vmatprep.subr.mxu0 0.0
  %405 = vmatpush1.msra.mxu0 0.0
  %406 = vmatprep.subr.mxu0 0.0
  %407 = vmatpush1.msra.mxu0 0.0
  %408 = vmatprep.subr.mxu0 0.0
  %409 = vmatpush1.msra.mxu0 0.0
  %410 = vmatprep.subr.mxu0 0.0
  %411 = vmatpush1.msra.mxu0 0.0
  %412 = vmatprep.subr.mxu0 0.0
  %413 = vmatpush1.msra.mxu0 0.0
  %414 = vmatprep.subr.mxu0 0.0
  %415 = vmatpush1.msra.mxu0 0.0
  %416 = vmatprep.subr.mxu0 0.0
  %417 = vmatpush1.msra.mxu0 0.0
  %418 = vmatprep.subr.mxu0 0.0
  %419 = vmatpush1.msra.mxu0 0.0
  %420 = vmatprep.subr.mxu0 0.0
  %421 = vmatpush1.msra.mxu0 0.0
  %422 = vmatprep.subr.mxu0 0.0
  %v423 = vand.u32 %v32, 4294901760
  %v424 = vsub.f32 %v32, %v423
  %v425 = vand.u32 %v424, 4294901760
  %426 = vmatpush1.msra.mxu0 %v425
  %427 = vmatprep.subr.mxu0 0.0
  %v428 = vand.u32 %v31, 4294901760
  %v429 = vsub.f32 %v31, %v428
  %v430 = vand.u32 %v429, 4294901760
  %431 = vmatpush1.msra.mxu0 %v430
  %432 = vmatprep.subr.mxu0 0.0
  %v433 = vand.u32 %v30, 4294901760
  %v434 = vsub.f32 %v30, %v433
  %v435 = vand.u32 %v434, 4294901760
  %436 = vmatpush1.msra.mxu0 %v435
  %437 = vmatprep.subr.mxu0 0.0
  %v438 = vand.u32 %v29, 4294901760
  %v439 = vsub.f32 %v29, %v438
  %v440 = vand.u32 %v439, 4294901760
  %441 = vmatpush1.msra.mxu0 %v440
  %442 = vmatprep.subr.mxu0 0.0
  %443 = vmatpush2.msra.mxu0 0.0
  %444 = vmatprep.subr.mxu0 0.0
  %445 = vmatpush2.msra.mxu0 0.0
  %446 = vmatprep.subr.mxu0 0.0
  %447 = vmatpush2.msra.mxu0 0.0
  %448 = vmatprep.subr.mxu0 0.0
  %449 = vmatpush2.msra.mxu0 0.0
  %450 = vmatprep.subr.mxu0 0.0
  %451 = vmatpush2.msra.mxu0 0.0
  %452 = vmatprep.subr.mxu0 0.0
  %453 = vmatpush2.msra.mxu0 0.0
  %454 = vmatprep.subr.mxu0 0.0
  %455 = vmatpush2.msra.mxu0 0.0
  %456 = vmatprep.subr.mxu0 0.0
  %457 = vmatpush2.msra.mxu0 0.0
  %458 = vmatprep.subr.mxu0 0.0
  %459 = vmatpush2.msra.mxu0 0.0
  %460 = vmatprep.subr.mxu0 0.0
  %461 = vmatpush2.msra.mxu0 0.0
  %462 = vmatprep.subr.mxu0 0.0
  %463 = vmatpush2.msra.mxu0 0.0
  %464 = vmatprep.subr.mxu0 0.0
  %465 = vmatpush2.msra.mxu0 0.0
  %466 = vmatprep.subr.mxu0 0.0
  %467 = vmatpush2.msra.mxu0 0.0
  %468 = vmatprep.subr.mxu0 0.0
  %469 = vmatpush2.msra.mxu0 0.0
  %470 = vmatprep.subr.mxu0 0.0
  %471 = vmatpush2.msra.mxu0 0.0
  %472 = vmatprep.subr.mxu0 0.0
  %473 = vmatpush2.msra.mxu0 0.0
  %474 = vmatprep.mubr.f32.mxu0 0.0
  %v475 = vand.u32 %v35, 4294901760
  %476 = vmatmul.mubr.f32.gmra.mxu0 %v475
  %v477 = vpop.f32.mrf.mxu0
  %v478 = vadd.f32 %v387, %v477
  %v479 = vpop.f32.mrf.mxu0
  %480 = vmatprep.mubr.f32.mxu0 0.0
  %v481 = vand.u32 %v38, 4294901760
  %482 = vmatmul.mubr.f32.gmra.mxu0 %v481
  %v483 = vpop.f32.mrf.mxu0
  %v484 = vadd.f32 %v395, %v483
  %v485 = vpop.f32.mrf.mxu0
  %486 = vdwg.mxu0
  %487 = vmatprep.subr.mxu0 0.0
  %488 = vmatpush1.msra.mxu0 0.0
  %489 = vmatprep.subr.mxu0 0.0
  %490 = vmatpush1.msra.mxu0 0.0
  %491 = vmatprep.subr.mxu0 0.0
  %492 = vmatpush1.msra.mxu0 0.0
  %493 = vmatprep.subr.mxu0 0.0
  %494 = vmatpush1.msra.mxu0 0.0
  %495 = vmatprep.subr.mxu0 0.0
  %496 = vmatpush1.msra.mxu0 0.0
  %497 = vmatprep.subr.mxu0 0.0
  %498 = vmatpush1.msra.mxu0 0.0
  %499 = vmatprep.subr.mxu0 0.0
  %500 = vmatpush1.msra.mxu0 0.0
  %501 = vmatprep.subr.mxu0 0.0
  %502 = vmatpush1.msra.mxu0 0.0
  %503 = vmatprep.subr.mxu0 0.0
  %504 = vmatpush1.msra.mxu0 0.0
  %505 = vmatprep.subr.mxu0 0.0
  %506 = vmatpush1.msra.mxu0 0.0
  %507 = vmatprep.subr.mxu0 0.0
  %508 = vmatpush1.msra.mxu0 0.0
  %509 = vmatprep.subr.mxu0 0.0
  %510 = vmatpush1.msra.mxu0 0.0
  %511 = vmatprep.subr.mxu0 0.0
  %v512 = vand.u32 %v32, 4294901760
  %513 = vmatpush1.msra.mxu0 %v512
  %514 = vmatprep.subr.mxu0 0.0
  %v515 = vand.u32 %v31, 4294901760
  %516 = vmatpush1.msra.mxu0 %v515
  %517 = vmatprep.subr.mxu0 0.0
  %v518 = vand.u32 %v30, 4294901760
  %519 = vmatpush1.msra.mxu0 %v518
  %520 = vmatprep.subr.mxu0 0.0
  %v521 = vand.u32 %v29, 4294901760
  %522 = vmatpush1.msra.mxu0 %v521
  %523 = vmatprep.subr.mxu0 0.0
  %524 = vmatpush2.msra.mxu0 0.0
  %525 = vmatprep.subr.mxu0 0.0
  %526 = vmatpush2.msra.mxu0 0.0
  %527 = vmatprep.subr.mxu0 0.0
  %528 = vmatpush2.msra.mxu0 0.0
  %529 = vmatprep.subr.mxu0 0.0
  %530 = vmatpush2.msra.mxu0 0.0
  %531 = vmatprep.subr.mxu0 0.0
  %532 = vmatpush2.msra.mxu0 0.0
  %533 = vmatprep.subr.mxu0 0.0
  %534 = vmatpush2.msra.mxu0 0.0
  %535 = vmatprep.subr.mxu0 0.0
  %536 = vmatpush2.msra.mxu0 0.0
  %537 = vmatprep.subr.mxu0 0.0
  %538 = vmatpush2.msra.mxu0 0.0
  %539 = vmatprep.subr.mxu0 0.0
  %540 = vmatpush2.msra.mxu0 0.0
  %541 = vmatprep.subr.mxu0 0.0
  %542 = vmatpush2.msra.mxu0 0.0
  %543 = vmatprep.subr.mxu0 0.0
  %544 = vmatpush2.msra.mxu0 0.0
  %545 = vmatprep.subr.mxu0 0.0
  %546 = vmatpush2.msra.mxu0 0.0
  %547 = vmatprep.subr.mxu0 0.0
  %548 = vmatpush2.msra.mxu0 0.0
  %549 = vmatprep.subr.mxu0 0.0
  %550 = vmatpush2.msra.mxu0 0.0
  %551 = vmatprep.subr.mxu0 0.0
  %552 = vmatpush2.msra.mxu0 0.0
  %553 = vmatprep.subr.mxu0 0.0
  %554 = vmatpush2.msra.mxu0 0.0
  %555 = vmatprep.mubr.f32.mxu0 0.0
  %v556 = vand.u32 %v35, 4294901760
  %557 = vmatmul.mubr.f32.gmra.mxu0 %v556
  %v558 = vpop.f32.mrf.mxu0
  %v559 = vadd.f32 %v478, %v558
  %v560 = vpop.f32.mrf.mxu0
  %561 = vmatprep.mubr.f32.mxu0 0.0
  %v562 = vand.u32 %v38, 4294901760
  %563 = vmatmul.mubr.f32.gmra.mxu0 %v562
  %v564 = vpop.f32.mrf.mxu0
  %v565 = vadd.f32 %v484, %v564
  %v566 = vpop.f32.mrf.mxu0
  %567 = vdwg.mxu0
  %v568 = vmax.f32 %v559, 0.0
  %v569 = vmax.f32 %v565, 0.0
  %v570 = vld [vmem:[#allocation2] sm:$0xff]
  %v571 = vld [vmem:[#allocation2 + $0x8] sm:$0xff]
  %v572 = vld [vmem:[%s2] sm:$0xff]
  %v573 = vld [vmem:[%s2 + $0x8] sm:$0xff]
  %v574 = vld [vmem:[%s2 + $0x10] sm:$0xff]
  %v575 = vld [vmem:[%s2 + $0x18] sm:$0xff]
  %v576 = vld [vmem:[%s2 + $0x20] sm:$0xff]
  %v577 = vld [vmem:[%s2 + $0x28] sm:$0xff]
  %v578 = vld [vmem:[%s2 + $0x30] sm:$0xff]
  %v579 = vld [vmem:[%s2 + $0x38] sm:$0xff]
  %vm580 = vcmask 523264
  %v582 = vsel %vm580, %v568, 0
  %v585 = vsel %vm580, %v569, 0
  %587 = vmatprep.subr.mxu0 0.0
  %588 = vmatpush1.msra.mxu0 0.0
  %589 = vmatprep.subr.mxu0 0.0
  %590 = vmatpush1.msra.mxu0 0.0
  %591 = vmatprep.subr.mxu0 0.0
  %592 = vmatpush1.msra.mxu0 0.0
  %593 = vmatprep.subr.mxu0 0.0
  %594 = vmatpush1.msra.mxu0 0.0
  %595 = vmatprep.subr.mxu0 0.0
  %596 = vmatpush1.msra.mxu0 0.0
  %597 = vmatprep.subr.mxu0 0.0
  %598 = vmatpush1.msra.mxu0 0.0
  %599 = vmatprep.subr.mxu0 0.0
  %600 = vmatpush1.msra.mxu0 0.0
  %601 = vmatprep.subr.mxu0 0.0
  %602 = vmatpush1.msra.mxu0 0.0
  %603 = vmatprep.subr.mxu0 0.0
  %v604 = vand.u32 %v579, 4294901760
  %605 = vmatpush1.msra.mxu0 %v604
  %606 = vmatprep.subr.mxu0 0.0
  %v607 = vand.u32 %v578, 4294901760
  %608 = vmatpush1.msra.mxu0 %v607
  %609 = vmatprep.subr.mxu0 0.0
  %v610 = vand.u32 %v577, 4294901760
  %611 = vmatpush1.msra.mxu0 %v610
  %612 = vmatprep.subr.mxu0 0.0
  %v613 = vand.u32 %v576, 4294901760
  %614 = vmatpush1.msra.mxu0 %v613
  %615 = vmatprep.subr.mxu0 0.0
  %v616 = vand.u32 %v575, 4294901760
  %617 = vmatpush1.msra.mxu0 %v616
  %618 = vmatprep.subr.mxu0 0.0
  %v619 = vand.u32 %v574, 4294901760
  %620 = vmatpush1.msra.mxu0 %v619
  %621 = vmatprep.subr.mxu0 0.0
  %v622 = vand.u32 %v573, 4294901760
  %623 = vmatpush1.msra.mxu0 %v622
  %624 = vmatprep.subr.mxu0 0.0
  %v625 = vand.u32 %v572, 4294901760
  %626 = vmatpush1.msra.mxu0 %v625
  %627 = vmatprep.subr.mxu0 0.0
  %628 = vmatpush2.msra.mxu0 0.0
  %629 = vmatprep.subr.mxu0 0.0
  %630 = vmatpush2.msra.mxu0 0.0
  %631 = vmatprep.subr.mxu0 0.0
  %632 = vmatpush2.msra.mxu0 0.0
  %633 = vmatprep.subr.mxu0 0.0
  %634 = vmatpush2.msra.mxu0 0.0
  %635 = vmatprep.subr.mxu0 0.0
  %636 = vmatpush2.msra.mxu0 0.0
  %637 = vmatprep.subr.mxu0 0.0
  %638 = vmatpush2.msra.mxu0 0.0
  %639 = vmatprep.subr.mxu0 0.0
  %640 = vmatpush2.msra.mxu0 0.0
  %641 = vmatprep.subr.mxu0 0.0
  %642 = vmatpush2.msra.mxu0 0.0
  %643 = vmatprep.subr.mxu0 0.0
  %644 = vmatpush2.msra.mxu0 0.0
  %645 = vmatprep.subr.mxu0 0.0
  %646 = vmatpush2.msra.mxu0 0.0
  %647 = vmatprep.subr.mxu0 0.0
  %648 = vmatpush2.msra.mxu0 0.0
  %649 = vmatprep.subr.mxu0 0.0
  %650 = vmatpush2.msra.mxu0 0.0
  %651 = vmatprep.subr.mxu0 0.0
  %652 = vmatpush2.msra.mxu0 0.0
  %653 = vmatprep.subr.mxu0 0.0
  %654 = vmatpush2.msra.mxu0 0.0
  %655 = vmatprep.subr.mxu0 0.0
  %656 = vmatpush2.msra.mxu0 0.0
  %657 = vmatprep.subr.mxu0 0.0
  %658 = vmatpush2.msra.mxu0 0.0
  %659 = vmatprep.mubr.f32.mxu0 0.0
  %v660 = vand.u32 %v582, 4294901760
  %v661 = vsub.f32 %v582, %v660
  %v662 = vand.u32 %v661, 4294901760
  %v663 = vsub.f32 %v661, %v662
  %v664 = vand.u32 %v663, 4294901760
  %665 = vmatmul.mubr.f32.gmra.mxu0 %v664
  %v666 = vpop.f32.mrf.mxu0
  %v667 = vadd.f32 0.0, %v666
  %v668 = vpop.f32.mrf.mxu0
  %669 = vmatprep.mubr.f32.mxu0 0.0
  %v670 = vand.u32 %v585, 4294901760
  %v671 = vsub.f32 %v585, %v670
  %v672 = vand.u32 %v671, 4294901760
  %v673 = vsub.f32 %v671, %v672
  %v674 = vand.u32 %v673, 4294901760
  %675 = vmatmul.mubr.f32.gmra.mxu0 %v674
  %v676 = vpop.f32.mrf.mxu0
  %v677 = vadd.f32 0.0, %v676
  %v678 = vpop.f32.mrf.mxu0
  %679 = vdwg.mxu0
  %680 = vmatprep.subr.mxu0 0.0
  %681 = vmatpush1.msra.mxu0 0.0
  %682 = vmatprep.subr.mxu0 0.0
  %683 = vmatpush1.msra.mxu0 0.0
  %684 = vmatprep.subr.mxu0 0.0
  %685 = vmatpush1.msra.mxu0 0.0
  %686 = vmatprep.subr.mxu0 0.0
  %687 = vmatpush1.msra.mxu0 0.0
  %688 = vmatprep.subr.mxu0 0.0
  %689 = vmatpush1.msra.mxu0 0.0
  %690 = vmatprep.subr.mxu0 0.0
  %691 = vmatpush1.msra.mxu0 0.0
  %692 = vmatprep.subr.mxu0 0.0
  %693 = vmatpush1.msra.mxu0 0.0
  %694 = vmatprep.subr.mxu0 0.0
  %695 = vmatpush1.msra.mxu0 0.0
  %696 = vmatprep.subr.mxu0 0.0
  %v697 = vand.u32 %v579, 4294901760
  %v698 = vsub.f32 %v579, %v697
  %v699 = vand.u32 %v698, 4294901760
  %v700 = vsub.f32 %v698, %v699
  %v701 = vand.u32 %v700, 4294901760
  %702 = vmatpush1.msra.mxu0 %v701
  %703 = vmatprep.subr.mxu0 0.0
  %v704 = vand.u32 %v578, 4294901760
  %v705 = vsub.f32 %v578, %v704
  %v706 = vand.u32 %v705, 4294901760
  %v707 = vsub.f32 %v705, %v706
  %v708 = vand.u32 %v707, 4294901760
  %709 = vmatpush1.msra.mxu0 %v708
  %710 = vmatprep.subr.mxu0 0.0
  %v711 = vand.u32 %v577, 4294901760
  %v712 = vsub.f32 %v577, %v711
  %v713 = vand.u32 %v712, 4294901760
  %v714 = vsub.f32 %v712, %v713
  %v715 = vand.u32 %v714, 4294901760
  %716 = vmatpush1.msra.mxu0 %v715
  %717 = vmatprep.subr.mxu0 0.0
  %v718 = vand.u32 %v576, 4294901760
  %v719 = vsub.f32 %v576, %v718
  %v720 = vand.u32 %v719, 4294901760
  %v721 = vsub.f32 %v719, %v720
  %v722 = vand.u32 %v721, 4294901760
  %723 = vmatpush1.msra.mxu0 %v722
  %724 = vmatprep.subr.mxu0 0.0
  %v725 = vand.u32 %v575, 4294901760
  %v726 = vsub.f32 %v575, %v725
  %v727 = vand.u32 %v726, 4294901760
  %v728 = vsub.f32 %v726, %v727
  %v729 = vand.u32 %v728, 4294901760
  %730 = vmatpush1.msra.mxu0 %v729
  %731 = vmatprep.subr.mxu0 0.0
  %v732 = vand.u32 %v574, 4294901760
  %v733 = vsub.f32 %v574, %v732
  %v734 = vand.u32 %v733, 4294901760
  %v735 = vsub.f32 %v733, %v734
  %v736 = vand.u32 %v735, 4294901760
  %737 = vmatpush1.msra.mxu0 %v736
  %738 = vmatprep.subr.mxu0 0.0
  %v739 = vand.u32 %v573, 4294901760
  %v740 = vsub.f32 %v573, %v739
  %v741 = vand.u32 %v740, 4294901760
  %v742 = vsub.f32 %v740, %v741
  %v743 = vand.u32 %v742, 4294901760
  %744 = vmatpush1.msra.mxu0 %v743
  %745 = vmatprep.subr.mxu0 0.0
  %v746 = vand.u32 %v572, 4294901760
  %v747 = vsub.f32 %v572, %v746
  %v748 = vand.u32 %v747, 4294901760
  %v749 = vsub.f32 %v747, %v748
  %v750 = vand.u32 %v749, 4294901760
  %751 = vmatpush1.msra.mxu0 %v750
  %752 = vmatprep.subr.mxu0 0.0
  %753 = vmatpush2.msra.mxu0 0.0
  %754 = vmatprep.subr.mxu0 0.0
  %755 = vmatpush2.msra.mxu0 0.0
  %756 = vmatprep.subr.mxu0 0.0
  %757 = vmatpush2.msra.mxu0 0.0
  %758 = vmatprep.subr.mxu0 0.0
  %759 = vmatpush2.msra.mxu0 0.0
  %760 = vmatprep.subr.mxu0 0.0
  %761 = vmatpush2.msra.mxu0 0.0
  %762 = vmatprep.subr.mxu0 0.0
  %763 = vmatpush2.msra.mxu0 0.0
  %764 = vmatprep.subr.mxu0 0.0
  %765 = vmatpush2.msra.mxu0 0.0
  %766 = vmatprep.subr.mxu0 0.0
  %767 = vmatpush2.msra.mxu0 0.0
  %768 = vmatprep.subr.mxu0 0.0
  %769 = vmatpush2.msra.mxu0 0.0
  %770 = vmatprep.subr.mxu0 0.0
  %771 = vmatpush2.msra.mxu0 0.0
  %772 = vmatprep.subr.mxu0 0.0
  %773 = vmatpush2.msra.mxu0 0.0
  %774 = vmatprep.subr.mxu0 0.0
  %775 = vmatpush2.msra.mxu0 0.0
  %776 = vmatprep.subr.mxu0 0.0
  %777 = vmatpush2.msra.mxu0 0.0
  %778 = vmatprep.subr.mxu0 0.0
  %779 = vmatpush2.msra.mxu0 0.0
  %780 = vmatprep.subr.mxu0 0.0
  %781 = vmatpush2.msra.mxu0 0.0
  %782 = vmatprep.subr.mxu0 0.0
  %783 = vmatpush2.msra.mxu0 0.0
  %784 = vmatprep.mubr.f32.mxu0 0.0
  %v785 = vand.u32 %v582, 4294901760
  %786 = vmatmul.mubr.f32.gmra.mxu0 %v785
  %v787 = vpop.f32.mrf.mxu0
  %v788 = vadd.f32 %v667, %v787
  %v789 = vpop.f32.mrf.mxu0
  %790 = vmatprep.mubr.f32.mxu0 0.0
  %v791 = vand.u32 %v585, 4294901760
  %792 = vmatmul.mubr.f32.gmra.mxu0 %v791
  %v793 = vpop.f32.mrf.mxu0
  %v794 = vadd.f32 %v677, %v793
  %v795 = vpop.f32.mrf.mxu0
  %796 = vdwg.mxu0
  %797 = vmatprep.subr.mxu0 0.0
  %798 = vmatpush1.msra.mxu0 0.0
  %799 = vmatprep.subr.mxu0 0.0
  %800 = vmatpush1.msra.mxu0 0.0
  %801 = vmatprep.subr.mxu0 0.0
  %802 = vmatpush1.msra.mxu0 0.0
  %803 = vmatprep.subr.mxu0 0.0
  %804 = vmatpush1.msra.mxu0 0.0
  %805 = vmatprep.subr.mxu0 0.0
  %806 = vmatpush1.msra.mxu0 0.0
  %807 = vmatprep.subr.mxu0 0.0
  %808 = vmatpush1.msra.mxu0 0.0
  %809 = vmatprep.subr.mxu0 0.0
  %810 = vmatpush1.msra.mxu0 0.0
  %811 = vmatprep.subr.mxu0 0.0
  %812 = vmatpush1.msra.mxu0 0.0
  %813 = vmatprep.subr.mxu0 0.0
  %v814 = vand.u32 %v579, 4294901760
  %v815 = vsub.f32 %v579, %v814
  %816 = vmatpush1.msra.mxu0 %v815
  %817 = vmatprep.subr.mxu0 0.0
  %v818 = vand.u32 %v578, 4294901760
  %v819 = vsub.f32 %v578, %v818
  %820 = vmatpush1.msra.mxu0 %v819
  %821 = vmatprep.subr.mxu0 0.0
  %v822 = vand.u32 %v577, 4294901760
  %v823 = vsub.f32 %v577, %v822
  %824 = vmatpush1.msra.mxu0 %v823
  %825 = vmatprep.subr.mxu0 0.0
  %v826 = vand.u32 %v576, 4294901760
  %v827 = vsub.f32 %v576, %v826
  %828 = vmatpush1.msra.mxu0 %v827
  %829 = vmatprep.subr.mxu0 0.0
  %v830 = vand.u32 %v575, 4294901760
  %v831 = vsub.f32 %v575, %v830
  %832 = vmatpush1.msra.mxu0 %v831
  %833 = vmatprep.subr.mxu0 0.0
  %v834 = vand.u32 %v574, 4294901760
  %v835 = vsub.f32 %v574, %v834
  %836 = vmatpush1.msra.mxu0 %v835
  %837 = vmatprep.subr.mxu0 0.0
  %v838 = vand.u32 %v573, 4294901760
  %v839 = vsub.f32 %v573, %v838
  %840 = vmatpush1.msra.mxu0 %v839
  %841 = vmatprep.subr.mxu0 0.0
  %v842 = vand.u32 %v572, 4294901760
  %v843 = vsub.f32 %v572, %v842
  %844 = vmatpush1.msra.mxu0 %v843
  %845 = vmatprep.subr.mxu0 0.0
  %846 = vmatpush2.msra.mxu0 0.0
  %847 = vmatprep.subr.mxu0 0.0
  %848 = vmatpush2.msra.mxu0 0.0
  %849 = vmatprep.subr.mxu0 0.0
  %850 = vmatpush2.msra.mxu0 0.0
  %851 = vmatprep.subr.mxu0 0.0
  %852 = vmatpush2.msra.mxu0 0.0
  %853 = vmatprep.subr.mxu0 0.0
  %854 = vmatpush2.msra.mxu0 0.0
  %855 = vmatprep.subr.mxu0 0.0
  %856 = vmatpush2.msra.mxu0 0.0
  %857 = vmatprep.subr.mxu0 0.0
  %858 = vmatpush2.msra.mxu0 0.0
  %859 = vmatprep.subr.mxu0 0.0
  %860 = vmatpush2.msra.mxu0 0.0
  %861 = vmatprep.subr.mxu0 0.0
  %862 = vmatpush2.msra.mxu0 0.0
  %863 = vmatprep.subr.mxu0 0.0
  %864 = vmatpush2.msra.mxu0 0.0
  %865 = vmatprep.subr.mxu0 0.0
  %866 = vmatpush2.msra.mxu0 0.0
  %867 = vmatprep.subr.mxu0 0.0
  %868 = vmatpush2.msra.mxu0 0.0
  %869 = vmatprep.subr.mxu0 0.0
  %870 = vmatpush2.msra.mxu0 0.0
  %871 = vmatprep.subr.mxu0 0.0
  %872 = vmatpush2.msra.mxu0 0.0
  %873 = vmatprep.subr.mxu0 0.0
  %874 = vmatpush2.msra.mxu0 0.0
  %875 = vmatprep.subr.mxu0 0.0
  %876 = vmatpush2.msra.mxu0 0.0
  %877 = vmatprep.mubr.f32.mxu0 0.0
  %v878 = vand.u32 %v582, 4294901760
  %v879 = vsub.f32 %v582, %v878
  %880 = vmatmul.mubr.f32.gmra.mxu0 %v879
  %v881 = vpop.f32.mrf.mxu0
  %v882 = vadd.f32 %v788, %v881
  %v883 = vpop.f32.mrf.mxu0
  %884 = vmatprep.mubr.f32.mxu0 0.0
  %v885 = vand.u32 %v585, 4294901760
  %v886 = vsub.f32 %v585, %v885
  %887 = vmatmul.mubr.f32.gmra.mxu0 %v886
  %v888 = vpop.f32.mrf.mxu0
  %v889 = vadd.f32 %v794, %v888
  %v890 = vpop.f32.mrf.mxu0
  %891 = vdwg.mxu0
  %892 = vmatprep.subr.mxu0 0.0
  %893 = vmatpush1.msra.mxu0 0.0
  %894 = vmatprep.subr.mxu0 0.0
  %895 = vmatpush1.msra.mxu0 0.0
  %896 = vmatprep.subr.mxu0 0.0
  %897 = vmatpush1.msra.mxu0 0.0
  %898 = vmatprep.subr.mxu0 0.0
  %899 = vmatpush1.msra.mxu0 0.0
  %900 = vmatprep.subr.mxu0 0.0
  %901 = vmatpush1.msra.mxu0 0.0
  %902 = vmatprep.subr.mxu0 0.0
  %903 = vmatpush1.msra.mxu0 0.0
  %904 = vmatprep.subr.mxu0 0.0
  %905 = vmatpush1.msra.mxu0 0.0
  %906 = vmatprep.subr.mxu0 0.0
  %907 = vmatpush1.msra.mxu0 0.0
  %908 = vmatprep.subr.mxu0 0.0
  %v909 = vand.u32 %v579, 4294901760
  %910 = vmatpush1.msra.mxu0 %v909
  %911 = vmatprep.subr.mxu0 0.0
  %v912 = vand.u32 %v578, 4294901760
  %913 = vmatpush1.msra.mxu0 %v912
  %914 = vmatprep.subr.mxu0 0.0
  %v915 = vand.u32 %v577, 4294901760
  %916 = vmatpush1.msra.mxu0 %v915
  %917 = vmatprep.subr.mxu0 0.0
  %v918 = vand.u32 %v576, 4294901760
  %919 = vmatpush1.msra.mxu0 %v918
  %920 = vmatprep.subr.mxu0 0.0
  %v921 = vand.u32 %v575, 4294901760
  %922 = vmatpush1.msra.mxu0 %v921
  %923 = vmatprep.subr.mxu0 0.0
  %v924 = vand.u32 %v574, 4294901760
  %925 = vmatpush1.msra.mxu0 %v924
  %926 = vmatprep.subr.mxu0 0.0
  %v927 = vand.u32 %v573, 4294901760
  %928 = vmatpush1.msra.mxu0 %v927
  %929 = vmatprep.subr.mxu0 0.0
  %v930 = vand.u32 %v572, 4294901760
  %931 = vmatpush1.msra.mxu0 %v930
  %932 = vmatprep.subr.mxu0 0.0
  %933 = vmatpush2.msra.mxu0 0.0
  %934 = vmatprep.subr.mxu0 0.0
  %935 = vmatpush2.msra.mxu0 0.0
  %936 = vmatprep.subr.mxu0 0.0
  %937 = vmatpush2.msra.mxu0 0.0
  %938 = vmatprep.subr.mxu0 0.0
  %939 = vmatpush2.msra.mxu0 0.0
  %940 = vmatprep.subr.mxu0 0.0
  %941 = vmatpush2.msra.mxu0 0.0
  %942 = vmatprep.subr.mxu0 0.0
  %943 = vmatpush2.msra.mxu0 0.0
  %944 = vmatprep.subr.mxu0 0.0
  %945 = vmatpush2.msra.mxu0 0.0
  %946 = vmatprep.subr.mxu0 0.0
  %947 = vmatpush2.msra.mxu0 0.0
  %948 = vmatprep.subr.mxu0 0.0
  %949 = vmatpush2.msra.mxu0 0.0
  %950 = vmatprep.subr.mxu0 0.0
  %951 = vmatpush2.msra.mxu0 0.0
  %952 = vmatprep.subr.mxu0 0.0
  %953 = vmatpush2.msra.mxu0 0.0
  %954 = vmatprep.subr.mxu0 0.0
  %955 = vmatpush2.msra.mxu0 0.0
  %956 = vmatprep.subr.mxu0 0.0
  %957 = vmatpush2.msra.mxu0 0.0
  %958 = vmatprep.subr.mxu0 0.0
  %959 = vmatpush2.msra.mxu0 0.0
  %960 = vmatprep.subr.mxu0 0.0
  %961 = vmatpush2.msra.mxu0 0.0
  %962 = vmatprep.subr.mxu0 0.0
  %963 = vmatpush2.msra.mxu0 0.0
  %964 = vmatprep.mubr.f32.mxu0 0.0
  %v965 = vand.u32 %v582, 4294901760
  %v966 = vsub.f32 %v582, %v965
  %v967 = vand.u32 %v966, 4294901760
  %968 = vmatmul.mubr.f32.gmra.mxu0 %v967
  %v969 = vpop.f32.mrf.mxu0
  %v970 = vadd.f32 %v882, %v969
  %v971 = vpop.f32.mrf.mxu0
  %972 = vmatprep.mubr.f32.mxu0 0.0
  %v973 = vand.u32 %v585, 4294901760
  %v974 = vsub.f32 %v585, %v973
  %v975 = vand.u32 %v974, 4294901760
  %976 = vmatmul.mubr.f32.gmra.mxu0 %v975
  %v977 = vpop.f32.mrf.mxu0
  %v978 = vadd.f32 %v889, %v977
  %v979 = vpop.f32.mrf.mxu0
  %980 = vdwg.mxu0
  %981 = vmatprep.subr.mxu0 0.0
  %982 = vmatpush1.msra.mxu0 0.0
  %983 = vmatprep.subr.mxu0 0.0
  %984 = vmatpush1.msra.mxu0 0.0
  %985 = vmatprep.subr.mxu0 0.0
  %986 = vmatpush1.msra.mxu0 0.0
  %987 = vmatprep.subr.mxu0 0.0
  %988 = vmatpush1.msra.mxu0 0.0
  %989 = vmatprep.subr.mxu0 0.0
  %990 = vmatpush1.msra.mxu0 0.0
  %991 = vmatprep.subr.mxu0 0.0
  %992 = vmatpush1.msra.mxu0 0.0
  %993 = vmatprep.subr.mxu0 0.0
  %994 = vmatpush1.msra.mxu0 0.0
  %995 = vmatprep.subr.mxu0 0.0
  %996 = vmatpush1.msra.mxu0 0.0
  %997 = vmatprep.subr.mxu0 0.0
  %v998 = vand.u32 %v579, 4294901760
  %v999 = vsub.f32 %v579, %v998
  %v1000 = vand.u32 %v999, 4294901760
  %1001 = vmatpush1.msra.mxu0 %v1000
  %1002 = vmatprep.subr.mxu0 0.0
  %v1003 = vand.u32 %v578, 4294901760
  %v1004 = vsub.f32 %v578, %v1003
  %v1005 = vand.u32 %v1004, 4294901760
  %1006 = vmatpush1.msra.mxu0 %v1005
  %1007 = vmatprep.subr.mxu0 0.0
  %v1008 = vand.u32 %v577, 4294901760
  %v1009 = vsub.f32 %v577, %v1008
  %v1010 = vand.u32 %v1009, 4294901760
  %1011 = vmatpush1.msra.mxu0 %v1010
  %1012 = vmatprep.subr.mxu0 0.0
  %v1013 = vand.u32 %v576, 4294901760
  %v1014 = vsub.f32 %v576, %v1013
  %v1015 = vand.u32 %v1014, 4294901760
  %1016 = vmatpush1.msra.mxu0 %v1015
  %1017 = vmatprep.subr.mxu0 0.0
  %v1018 = vand.u32 %v575, 4294901760
  %v1019 = vsub.f32 %v575, %v1018
  %v1020 = vand.u32 %v1019, 4294901760
  %1021 = vmatpush1.msra.mxu0 %v1020
  %1022 = vmatprep.subr.mxu0 0.0
  %v1023 = vand.u32 %v574, 4294901760
  %v1024 = vsub.f32 %v574, %v1023
  %v1025 = vand.u32 %v1024, 4294901760
  %1026 = vmatpush1.msra.mxu0 %v1025
  %1027 = vmatprep.subr.mxu0 0.0
  %v1028 = vand.u32 %v573, 4294901760
  %v1029 = vsub.f32 %v573, %v1028
  %v1030 = vand.u32 %v1029, 4294901760
  %1031 = vmatpush1.msra.mxu0 %v1030
  %1032 = vmatprep.subr.mxu0 0.0
  %v1033 = vand.u32 %v572, 4294901760
  %v1034 = vsub.f32 %v572, %v1033
  %v1035 = vand.u32 %v1034, 4294901760
  %1036 = vmatpush1.msra.mxu0 %v1035
  %1037 = vmatprep.subr.mxu0 0.0
  %1038 = vmatpush2.msra.mxu0 0.0
  %1039 = vmatprep.subr.mxu0 0.0
  %1040 = vmatpush2.msra.mxu0 0.0
  %1041 = vmatprep.subr.mxu0 0.0
  %1042 = vmatpush2.msra.mxu0 0.0
  %1043 = vmatprep.subr.mxu0 0.0
  %1044 = vmatpush2.msra.mxu0 0.0
  %1045 = vmatprep.subr.mxu0 0.0
  %1046 = vmatpush2.msra.mxu0 0.0
  %1047 = vmatprep.subr.mxu0 0.0
  %1048 = vmatpush2.msra.mxu0 0.0
  %1049 = vmatprep.subr.mxu0 0.0
  %1050 = vmatpush2.msra.mxu0 0.0
  %1051 = vmatprep.subr.mxu0 0.0
  %1052 = vmatpush2.msra.mxu0 0.0
  %1053 = vmatprep.subr.mxu0 0.0
  %1054 = vmatpush2.msra.mxu0 0.0
  %1055 = vmatprep.subr.mxu0 0.0
  %1056 = vmatpush2.msra.mxu0 0.0
  %1057 = vmatprep.subr.mxu0 0.0
  %1058 = vmatpush2.msra.mxu0 0.0
  %1059 = vmatprep.subr.mxu0 0.0
  %1060 = vmatpush2.msra.mxu0 0.0
  %1061 = vmatprep.subr.mxu0 0.0
  %1062 = vmatpush2.msra.mxu0 0.0
  %1063 = vmatprep.subr.mxu0 0.0
  %1064 = vmatpush2.msra.mxu0 0.0
  %1065 = vmatprep.subr.mxu0 0.0
  %1066 = vmatpush2.msra.mxu0 0.0
  %1067 = vmatprep.subr.mxu0 0.0
  %1068 = vmatpush2.msra.mxu0 0.0
  %1069 = vmatprep.mubr.f32.mxu0 0.0
  %v1070 = vand.u32 %v582, 4294901760
  %1071 = vmatmul.mubr.f32.gmra.mxu0 %v1070
  %v1072 = vpop.f32.mrf.mxu0
  %v1073 = vadd.f32 %v970, %v1072
  %v1074 = vpop.f32.mrf.mxu0
  %1075 = vmatprep.mubr.f32.mxu0 0.0
  %v1076 = vand.u32 %v585, 4294901760
  %1077 = vmatmul.mubr.f32.gmra.mxu0 %v1076
  %v1078 = vpop.f32.mrf.mxu0
  %v1079 = vadd.f32 %v978, %v1078
  %v1080 = vpop.f32.mrf.mxu0
  %1081 = vdwg.mxu0
  %1082 = vmatprep.subr.mxu0 0.0
  %1083 = vmatpush1.msra.mxu0 0.0
  %1084 = vmatprep.subr.mxu0 0.0
  %1085 = vmatpush1.msra.mxu0 0.0
  %1086 = vmatprep.subr.mxu0 0.0
  %1087 = vmatpush1.msra.mxu0 0.0
  %1088 = vmatprep.subr.mxu0 0.0
  %1089 = vmatpush1.msra.mxu0 0.0
  %1090 = vmatprep.subr.mxu0 0.0
  %1091 = vmatpush1.msra.mxu0 0.0
  %1092 = vmatprep.subr.mxu0 0.0
  %1093 = vmatpush1.msra.mxu0 0.0
  %1094 = vmatprep.subr.mxu0 0.0
  %1095 = vmatpush1.msra.mxu0 0.0
  %1096 = vmatprep.subr.mxu0 0.0
  %1097 = vmatpush1.msra.mxu0 0.0
  %1098 = vmatprep.subr.mxu0 0.0
  %v1099 = vand.u32 %v579, 4294901760
  %1100 = vmatpush1.msra.mxu0 %v1099
  %1101 = vmatprep.subr.mxu0 0.0
  %v1102 = vand.u32 %v578, 4294901760
  %1103 = vmatpush1.msra.mxu0 %v1102
  %1104 = vmatprep.subr.mxu0 0.0
  %v1105 = vand.u32 %v577, 4294901760
  %1106 = vmatpush1.msra.mxu0 %v1105
  %1107 = vmatprep.subr.mxu0 0.0
  %v1108 = vand.u32 %v576, 4294901760
  %1109 = vmatpush1.msra.mxu0 %v1108
  %1110 = vmatprep.subr.mxu0 0.0
  %v1111 = vand.u32 %v575, 4294901760
  %1112 = vmatpush1.msra.mxu0 %v1111
  %1113 = vmatprep.subr.mxu0 0.0
  %v1114 = vand.u32 %v574, 4294901760
  %1115 = vmatpush1.msra.mxu0 %v1114
  %1116 = vmatprep.subr.mxu0 0.0
  %v1117 = vand.u32 %v573, 4294901760
  %1118 = vmatpush1.msra.mxu0 %v1117
  %1119 = vmatprep.subr.mxu0 0.0
  %v1120 = vand.u32 %v572, 4294901760
  %1121 = vmatpush1.msra.mxu0 %v1120
  %1122 = vmatprep.subr.mxu0 0.0
  %1123 = vmatpush2.msra.mxu0 0.0
  %1124 = vmatprep.subr.mxu0 0.0
  %1125 = vmatpush2.msra.mxu0 0.0
  %1126 = vmatprep.subr.mxu0 0.0
  %1127 = vmatpush2.msra.mxu0 0.0
  %1128 = vmatprep.subr.mxu0 0.0
  %1129 = vmatpush2.msra.mxu0 0.0
  %1130 = vmatprep.subr.mxu0 0.0
  %1131 = vmatpush2.msra.mxu0 0.0
  %1132 = vmatprep.subr.mxu0 0.0
  %1133 = vmatpush2.msra.mxu0 0.0
  %1134 = vmatprep.subr.mxu0 0.0
  %1135 = vmatpush2.msra.mxu0 0.0
  %1136 = vmatprep.subr.mxu0 0.0
  %1137 = vmatpush2.msra.mxu0 0.0
  %1138 = vmatprep.subr.mxu0 0.0
  %1139 = vmatpush2.msra.mxu0 0.0
  %1140 = vmatprep.subr.mxu0 0.0
  %1141 = vmatpush2.msra.mxu0 0.0
  %1142 = vmatprep.subr.mxu0 0.0
  %1143 = vmatpush2.msra.mxu0 0.0
  %1144 = vmatprep.subr.mxu0 0.0
  %1145 = vmatpush2.msra.mxu0 0.0
  %1146 = vmatprep.subr.mxu0 0.0
  %1147 = vmatpush2.msra.mxu0 0.0
  %1148 = vmatprep.subr.mxu0 0.0
  %1149 = vmatpush2.msra.mxu0 0.0
  %1150 = vmatprep.subr.mxu0 0.0
  %1151 = vmatpush2.msra.mxu0 0.0
  %1152 = vmatprep.subr.mxu0 0.0
  %1153 = vmatpush2.msra.mxu0 0.0
  %1154 = vmatprep.mubr.f32.mxu0 0.0
  %v1155 = vand.u32 %v582, 4294901760
  %1156 = vmatmul.mubr.f32.gmra.mxu0 %v1155
  %v1157 = vpop.f32.mrf.mxu0
  %v1158 = vadd.f32 %v1073, %v1157
  %v1159 = vpop.f32.mrf.mxu0
  %1160 = vmatprep.mubr.f32.mxu0 0.0
  %v1161 = vand.u32 %v585, 4294901760
  %1162 = vmatmul.mubr.f32.gmra.mxu0 %v1161
  %v1163 = vpop.f32.mrf.mxu0
  %v1164 = vadd.f32 %v1079, %v1163
  %v1165 = vpop.f32.mrf.mxu0
  %1166 = vdwg.mxu0
  %v1167 = vadd.f32 %v570, %v1158
  %v1168 = vadd.f32 %v571, %v1164
  %1169 = vst.msk [vmem:[#allocation2] sm:$0xff] %vm33, %v1167
  %1170 = vst.msk [vmem:[#allocation2 + $0x8] sm:$0xff] %vm33, %v1168
  // Predicated region
  $region26: #{gpt_softmax10x_forward.6} parent=0 // pred_check
    %p1171 = pneg %p20
  $region27: #{gpt_softmax10x_forward.6} parent=0 // pred_check_branch
    %1173 = sbr.rel (%p1171) target = $region29
  $region28: #{gpt_softmax10x_forward.6} parent=0 // pred_region
    %v1174 = vld [vmem:[#allocation2] sm:$0xff]
    %v1175 = vld [vmem:[#allocation2 + $0x8] sm:$0xff]
    %v1176 = vadd.f32 %v1174, %v27
    %v1177 = vadd.f32 %v1175, %v28
    %v1178 = vld [vmem:[%s3] sm:$0x1]
    %v1179 = vld [vmem:[%s4] sm:$0x1]
    %v1180 = vsel %vm33, %v1176, 0.0
    %1181 = vadd.xlane.f32.xlu0 %v1180
    %v1182 = vpop.xlane.xlu0 %1181
    %v1183 = vsel %vm33, %v1177, 0.0
    %1184 = vadd.xlane.f32.xlu0 %v1183
    %v1185 = vpop.xlane.xlu0 %1184
    %v1186 = vrcp.pop 32.0
    %v1187 = vmul.f32 %v1182, %v1186
    %v1188 = vmul.f32 %v1185, %v1186
    %v1189 = vsub.f32 %v1176, %v1187
    %v1190 = vsub.f32 %v1177, %v1188
    %v1191 = vmul.f32 %v1189, %v1189
    %v1192 = vmul.f32 %v1190, %v1190
    %v1193 = vsel %vm33, %v1191, 0.0
    %1194 = vadd.xlane.f32.xlu0 %v1193
    %v1195 = vpop.xlane.xlu0 %1194
    %v1196 = vsel %vm33, %v1192, 0.0
    %1197 = vadd.xlane.f32.xlu0 %v1196
    %v1198 = vpop.xlane.xlu0 %1197
    %v1199 = vmul.f32 %v1195, %v1186
    %v1200 = vmul.f32 %v1198, %v1186
    %v1201 = vadd.f32 %v1199, 1e-05
    %v1202 = vadd.f32 %v1200, 1e-05
    %v1203 = vrsqrt.pop %v1201
    %v1204 = vrsqrt.pop %v1202
    %v1205 = vmul.f32 %v1189, %v1203
    %v1206 = vmul.f32 %v1190, %v1204
    %v1208 = vlaneseq
    %v1209 = vshrl.u32 %v1208, 7
    %v1210 = vsub.s32 0, %v1209
    %v1211 = vrot.slane %v1178, %v1210
    %v1213 = vmul.f32 %v1205, %v1211
    %v1214 = vmul.f32 %v1206, %v1211
    %v1216 = vlaneseq
    %v1217 = vshrl.u32 %v1216, 7
    %v1218 = vsub.s32 0, %v1217
    %v1219 = vrot.slane %v1179, %v1218
    %v1221 = vadd.f32 %v1213, %v1219
    %v1222 = vadd.f32 %v1214, %v1219
    %1223 = vst.msk [vmem:[%s5] sm:$0xff] %vm33, %v1221
    %1224 = vst.msk [vmem:[%s5 + $0x8] sm:$0xff] %vm33, %v1222
  $region29: #{gpt_softmax10x_forward.6} parent=0 // pred_fallthru
    _
  // Predicated region
  $region30: #{gpt_softmax10x_forward.6} parent=0 // pred_check
    _
  $region31: #{gpt_softmax10x_forward.6} parent=0 // pred_check_branch
    %1226 = sbr.rel (0) target = $region33
  $region32: #{gpt_softmax10x_forward.6} parent=0 // pred_region
    _
  $region33: #{gpt_softmax10x_forward.6} parent=0 // pred_fallthru
    _
  // Predicated region
  $region34: #{gpt_softmax10x_forward.6} parent=0 // pred_check
    _
  $region35: #{gpt_softmax10x_forward.6} parent=0 // pred_check_branch
    %1228 = sbr.rel (0) target = $region37
  $region36: #{gpt_softmax10x_forward.6} parent=0 // pred_region
    _
  $region37: #{gpt_softmax10x_forward.6} parent=0 // pred_fallthru
    _

// kernel: gpt_softmax10x_forward.5
$region0: #{gpt_softmax10x_forward.5}
  #allocation0 [shape = 'u32[]', space=smem, size = 0x4, offset = 0x4, fixed_abs, tag = 'smem constant byte address 0x4 - core index']
  #allocation1 [shape = 'u32[144,128]{1,0:T(1,128)}', space=vmem, size = 0x12000, scoped, tag = 'internal scratch']
  #allocation2 [shape = 'f32[8,32]{1,0:T(8,128)}', space=vmem, size = 0x1000, scoped, tag = 'scratch operand']
  %s0 = inlined_call_operand.vmem [shape: f32[2,8,32], index: 0, kind: input, shape index: {}]
  %s1 = inlined_call_operand.vmem [shape: f32[2,32,16], index: 1, kind: input, shape index: {}]
  %s2 = inlined_call_operand.vmem [shape: f32[2,32,16], index: 2, kind: input, shape index: {}]
  %s3 = inlined_call_operand.vmem [shape: f32[2,32,16], index: 3, kind: input, shape index: {}]
  %s4 = inlined_call_operand.vmem [shape: f32[2,16,32], index: 4, kind: input, shape index: {}]
  %s5 = inlined_call_operand.vmem [shape: f32[2,8,8], index: 5, kind: input, shape index: {}]
  %s6 = inlined_call_operand.vmem [shape: f32[1,32], index: 6, kind: input, shape index: {}]
  %s7 = inlined_call_operand.vmem [shape: f32[1,32], index: 7, kind: input, shape index: {}]
  %s8 = inlined_call_operand.vmem [shape: f32[2,8,32], index: 8, kind: output, shape index: {0}]
  %s9 = inlined_call_operand.hbm [shape: f32[2,2,8,8], index: 9, kind: output, shape index: {1}]
  %10 = xla_tuple %s8, %s9
  %s11 = sld [smem:[#allocation0]]
  $region81: #{gpt_softmax10x_forward.5} parent=0
    _
  %s13 = ssub.s32 1, %s11
  %s14 = scalar_select 0, %s13, %s11
  $region1: #{gpt_softmax10x_forward.5} parent=0
    #allocation3 [shape = 'u8[8192]{0}', space=vmem, size = 0x2000, scoped, tag = 'output window, operand 1']
    #allocation4 [shape = 's32[2]{0}', space=sflag, size = 0x8, scoped, tag = 'scoped memory for gpt_softmax10x_forward.5']
    %15 = vsyncpa [#allocation4], 0
    %s16 = scalar_lea.sflag [#allocation4], 1
    %17 = vsyncpa %s16, 0
    loop: start=0, step=1, limit=6
    $region2: #{gpt_softmax10x_forward.5} parent=1 // loop_pre_header
      _
    $region3: #{gpt_softmax10x_forward.5} parent=1 // loop_header
      %s19 = sphi 0, %s23
      %p20 = scmp.ge.s32.totalorder %s19, 6
      %s26 = sphi 0, %s38
      %s27 = sphi 0, %s34
      %s28 = sphi 0, %s26
      %s29 = sphi 0, %s27
      %s30 = sphi 0, %s28
      %s31 = sphi 0, %s29
      %s41 = sphi 0, %s43
      %s44 = sphi 0, %s41
      %s45 = sphi 0, %s44
      %s61 = sphi 0, %s45
      %s67 = sphi 0, %s69
      %s70 = sphi 0, %s67
      %s71 = sphi 0, %s70
      %s87 = sphi 0, %s71
      %s93 = sphi 0, %s95
      %s96 = sphi 0, %s93
      %s97 = sphi 0, %s96
      %s113 = sphi 0, %s97
      %s119 = sphi 0, %s121
      %s122 = sphi 0, %s119
      %s123 = sphi 0, %s122
      %s139 = sphi 0, %s123
      %s145 = sphi 0, %s147
      %s148 = sphi 0, %s145
      %s149 = sphi 0, %s148
      %s165 = sphi 0, %s149
      %s171 = sphi 0, %s173
      %s174 = sphi 0, %s171
      %s175 = sphi 0, %s174
      %s191 = sphi 0, %s175
      %s195 = sphi 0, %s195
      %s197 = sphi 0, %s195
      %s198 = sphi 0, %s197
      %s212 = sphi 0, %s198
      %s216 = sphi 0, %s216
      %s218 = sphi 0, %s216
      %s219 = sphi 0, %s218
      %s233 = sphi 0, %s219
      %s239 = sphi 0, %s241
      %s242 = sphi 0, %s239
      %s243 = sphi 0, %s242
      %s259 = sphi 0, %s243
      %s267 = sphi 0, %s269
      %s270 = sphi 0, %s267
      %s271 = sphi 0, %s270
      %s287 = sphi 0, %s271
    $region4: #{gpt_softmax10x_forward.5} parent=1 // loop_header_branch
      %22 = sbr.rel (%p20) target = $region8
    $region5: #{gpt_softmax10x_forward.5} parent=1 // loop_body
      %s24 = ssub.s32 %s19, 1
      %s25 = ssub.s32 %s19, 2
      %s32 = sadd.s32 1, %s27
      %p33 = scmp.ge.s32.totalorder %s32, 2
      %s34 = scalar_select %p33, 0, %s32
      %s35 = sadd.s32 1, %s26
      %s36 = scalar_select %p33, %s35, %s26
      %p37 = scmp.ge.s32.totalorder %s36, 2
      %s38 = scalar_select %p37, 0, %s36
      %s39 = ssub.s32 %s26, %s38
      %p40 = scmp.eq.s32.totalorder %s39, 0
      %s42 = sadd.s32 %s41, 1
      %s43 = scalar_select %p40, %s41, %s42
      %p46 = pneg %p40
      %p47 = scmp.eq.s32.totalorder %s19, 3
      %p48 = por %p46, %p47
      %p49 = scmp.ne.s32.totalorder %s41, %s44
      %p50 = scmp.eq.s32.totalorder %s19, 0
      %p51 = por %p49, %p50
      %p52 = scmp.ne.s32.totalorder %s41, %s44
      %p53 = scmp.eq.s32.totalorder %s24, 3
      %p54 = por %p52, %p53
      %p55 = scmp.ne.s32.totalorder %s44, %s45
      %p56 = scmp.eq.s32.totalorder %s24, 0
      %p57 = por %p55, %p56
      %p58 = scmp.ne.s32.totalorder %s44, %s45
      %p59 = scmp.eq.s32.totalorder %s25, 3
      %p60 = por %p58, %p59
      %p62 = scmp.ne.s32.totalorder %s45, %s61
      %p63 = scmp.eq.s32.totalorder %s25, 0
      %p64 = por %p62, %p63
      %s65 = ssub.s32 %s27, %s34
      %p66 = scmp.eq.s32.totalorder %s65, 0
      %s68 = sadd.s32 %s67, 1
      %s69 = scalar_select %p66, %s67, %s68
      %p72 = pneg %p66
      %p73 = scmp.eq.s32.totalorder %s19, 3
      %p74 = por %p72, %p73
      %p75 = scmp.ne.s32.totalorder %s67, %s70
      %p76 = scmp.eq.s32.totalorder %s19, 0
      %p77 = por %p75, %p76
      %p78 = scmp.ne.s32.totalorder %s67, %s70
      %p79 = scmp.eq.s32.totalorder %s24, 3
      %p80 = por %p78, %p79
      %p81 = scmp.ne.s32.totalorder %s70, %s71
      %p82 = scmp.eq.s32.totalorder %s24, 0
      %p83 = por %p81, %p82
      %p84 = scmp.ne.s32.totalorder %s70, %s71
      %p85 = scmp.eq.s32.totalorder %s25, 3
      %p86 = por %p84, %p85
      %p88 = scmp.ne.s32.totalorder %s71, %s87
      %p89 = scmp.eq.s32.totalorder %s25, 0
      %p90 = por %p88, %p89
      %s91 = ssub.s32 %s27, %s34
      %p92 = scmp.eq.s32.totalorder %s91, 0
      %s94 = sadd.s32 %s93, 1
      %s95 = scalar_select %p92, %s93, %s94
      %p98 = pneg %p92
      %p99 = scmp.eq.s32.totalorder %s19, 3
      %p100 = por %p98, %p99
      %p101 = scmp.ne.s32.totalorder %s93, %s96
      %p102 = scmp.eq.s32.totalorder %s19, 0
      %p103 = por %p101, %p102
      %p104 = scmp.ne.s32.totalorder %s93, %s96
      %p105 = scmp.eq.s32.totalorder %s24, 3
      %p106 = por %p104, %p105
      %p107 = scmp.ne.s32.totalorder %s96, %s97
      %p108 = scmp.eq.s32.totalorder %s24, 0
      %p109 = por %p107, %p108
      %p110 = scmp.ne.s32.totalorder %s96, %s97
      %p111 = scmp.eq.s32.totalorder %s25, 3
      %p112 = por %p110, %p111
      %p114 = scmp.ne.s32.totalorder %s97, %s113
      %p115 = scmp.eq.s32.totalorder %s25, 0
      %p116 = por %p114, %p115
      %s117 = ssub.s32 %s27, %s34
      %p118 = scmp.eq.s32.totalorder %s117, 0
      %s120 = sadd.s32 %s119, 1
      %s121 = scalar_select %p118, %s119, %s120
      %p124 = pneg %p118
      %p125 = scmp.eq.s32.totalorder %s19, 3
      %p126 = por %p124, %p125
      %p127 = scmp.ne.s32.totalorder %s119, %s122
      %p128 = scmp.eq.s32.totalorder %s19, 0
      %p129 = por %p127, %p128
      %p130 = scmp.ne.s32.totalorder %s119, %s122
      %p131 = scmp.eq.s32.totalorder %s24, 3
      %p132 = por %p130, %p131
      %p133 = scmp.ne.s32.totalorder %s122, %s123
      %p134 = scmp.eq.s32.totalorder %s24, 0
      %p135 = por %p133, %p134
      %p136 = scmp.ne.s32.totalorder %s122, %s123
      %p137 = scmp.eq.s32.totalorder %s25, 3
      %p138 = por %p136, %p137
      %p140 = scmp.ne.s32.totalorder %s123, %s139
      %p141 = scmp.eq.s32.totalorder %s25, 0
      %p142 = por %p140, %p141
      %s143 = ssub.s32 %s27, %s34
      %p144 = scmp.eq.s32.totalorder %s143, 0
      %s146 = sadd.s32 %s145, 1
      %s147 = scalar_select %p144, %s145, %s146
      %p150 = pneg %p144
      %p151 = scmp.eq.s32.totalorder %s19, 3
      %p152 = por %p150, %p151
      %p153 = scmp.ne.s32.totalorder %s145, %s148
      %p154 = scmp.eq.s32.totalorder %s19, 0
      %p155 = por %p153, %p154
      %p156 = scmp.ne.s32.totalorder %s145, %s148
      %p157 = scmp.eq.s32.totalorder %s24, 3
      %p158 = por %p156, %p157
      %p159 = scmp.ne.s32.totalorder %s148, %s149
      %p160 = scmp.eq.s32.totalorder %s24, 0
      %p161 = por %p159, %p160
      %p162 = scmp.ne.s32.totalorder %s148, %s149
      %p163 = scmp.eq.s32.totalorder %s25, 3
      %p164 = por %p162, %p163
      %p166 = scmp.ne.s32.totalorder %s149, %s165
      %p167 = scmp.eq.s32.totalorder %s25, 0
      %p168 = por %p166, %p167
      %s169 = ssub.s32 %s26, %s38
      %p170 = scmp.eq.s32.totalorder %s169, 0
      %s172 = sadd.s32 %s171, 1
      %s173 = scalar_select %p170, %s171, %s172
      %p176 = pneg %p170
      %p177 = scmp.eq.s32.totalorder %s19, 3
      %p178 = por %p176, %p177
      %p179 = scmp.ne.s32.totalorder %s171, %s174
      %p180 = scmp.eq.s32.totalorder %s19, 0
      %p181 = por %p179, %p180
      %p182 = scmp.ne.s32.totalorder %s171, %s174
      %p183 = scmp.eq.s32.totalorder %s24, 3
      %p184 = por %p182, %p183
      %p185 = scmp.ne.s32.totalorder %s174, %s175
      %p186 = scmp.eq.s32.totalorder %s24, 0
      %p187 = por %p185, %p186
      %p188 = scmp.ne.s32.totalorder %s174, %s175
      %p189 = scmp.eq.s32.totalorder %s25, 3
      %p190 = por %p188, %p189
      %p192 = scmp.ne.s32.totalorder %s175, %s191
      %p193 = scmp.eq.s32.totalorder %s25, 0
      %p194 = por %p192, %p193
      %s196 = sadd.s32 %s195, 1
      %p199 = scmp.eq.s32.totalorder %s19, 3
      %p200 = scmp.ne.s32.totalorder %s195, %s197
      %p201 = scmp.eq.s32.totalorder %s19, 0
      %p202 = por %p200, %p201
      %p203 = scmp.ne.s32.totalorder %s195, %s197
      %p204 = scmp.eq.s32.totalorder %s24, 3
      %p205 = por %p203, %p204
      %p206 = scmp.ne.s32.totalorder %s197, %s198
      %p207 = scmp.eq.s32.totalorder %s24, 0
      %p208 = por %p206, %p207
      %p209 = scmp.ne.s32.totalorder %s197, %s198
      %p210 = scmp.eq.s32.totalorder %s25, 3
      %p211 = por %p209, %p210
      %p213 = scmp.ne.s32.totalorder %s198, %s212
      %p214 = scmp.eq.s32.totalorder %s25, 0
      %p215 = por %p213, %p214
      %s217 = sadd.s32 %s216, 1
      %p220 = scmp.eq.s32.totalorder %s19, 3
      %p221 = scmp.ne.s32.totalorder %s216, %s218
      %p222 = scmp.eq.s32.totalorder %s19, 0
      %p223 = por %p221, %p222
      %p224 = scmp.ne.s32.totalorder %s216, %s218
      %p225 = scmp.eq.s32.totalorder %s24, 3
      %p226 = por %p224, %p225
      %p227 = scmp.ne.s32.totalorder %s218, %s219
      %p228 = scmp.eq.s32.totalorder %s24, 0
      %p229 = por %p227, %p228
      %p230 = scmp.ne.s32.totalorder %s218, %s219
      %p231 = scmp.eq.s32.totalorder %s25, 3
      %p232 = por %p230, %p231
      %p234 = scmp.ne.s32.totalorder %s219, %s233
      %p235 = scmp.eq.s32.totalorder %s25, 0
      %p236 = por %p234, %p235
      %s237 = ssub.s32 %s26, %s38
      %p238 = scmp.eq.s32.totalorder %s237, 0
      %s240 = sadd.s32 %s239, 1
      %s241 = scalar_select %p238, %s239, %s240
      %p244 = pneg %p238
      %p245 = scmp.eq.s32.totalorder %s19, 3
      %p246 = por %p244, %p245
      %p247 = scmp.ne.s32.totalorder %s239, %s242
      %p248 = scmp.eq.s32.totalorder %s19, 0
      %p249 = por %p247, %p248
      %p250 = scmp.ne.s32.totalorder %s239, %s242
      %p251 = scmp.eq.s32.totalorder %s24, 3
      %p252 = por %p250, %p251
      %p253 = scmp.ne.s32.totalorder %s242, %s243
      %p254 = scmp.eq.s32.totalorder %s24, 0
      %p255 = por %p253, %p254
      %p256 = scmp.ne.s32.totalorder %s242, %s243
      %p257 = scmp.eq.s32.totalorder %s25, 3
      %p258 = por %p256, %p257
      %p260 = scmp.ne.s32.totalorder %s243, %s259
      %p261 = scmp.eq.s32.totalorder %s25, 0
      %p262 = por %p260, %p261
      %s263 = ssub.s32 %s26, %s38
      %s264 = ssub.s32 %s27, %s34
      %s265 = sor.u32 %s263, %s264
      %p266 = scmp.eq.s32.totalorder %s265, 0
      %s268 = sadd.s32 %s267, 1
      %s269 = scalar_select %p266, %s267, %s268
      %p272 = pneg %p266
      %p273 = scmp.eq.s32.totalorder %s19, 3
      %p274 = por %p272, %p273
      %p275 = scmp.ne.s32.totalorder %s267, %s270
      %p276 = scmp.eq.s32.totalorder %s19, 0
      %p277 = por %p275, %p276
      %p278 = scmp.ne.s32.totalorder %s267, %s270
      %p279 = scmp.eq.s32.totalorder %s24, 3
      %p280 = por %p278, %p279
      %p281 = scmp.ne.s32.totalorder %s270, %s271
      %p282 = scmp.eq.s32.totalorder %s24, 0
      %p283 = por %p281, %p282
      %p284 = scmp.ne.s32.totalorder %s270, %s271
      %p285 = scmp.eq.s32.totalorder %s25, 3
      %p286 = por %p284, %p285
      %p288 = scmp.ne.s32.totalorder %s271, %s287
      %p289 = scmp.eq.s32.totalorder %s25, 0
      %p290 = por %p288, %p289
      %p291 = scmp.le.s32.totalorder 1, %s19
      %p292 = scmp.lt.s32.totalorder %s19, 5
      %p293 = pnand %p291, %p292
      %p294 = pneg %p293
      // Predicated region
      $region9: #{gpt_softmax10x_forward.5} parent=5 // pred_check
        _
      $region10: #{gpt_softmax10x_forward.5} parent=5 // pred_check_branch
        %296 = sbr.rel (%p293) target = $region12
      $region11: #{gpt_softmax10x_forward.5} parent=5 // pred_region
        %s297 = ssub.s32 %s19, 1
        // Predicated region
        $region13: #{gpt_softmax10x_forward.5} parent=11 // pred_check
          %p298 = pneg %p208
        $region14: #{gpt_softmax10x_forward.5} parent=11 // pred_check_branch
          %300 = sbr.rel (%p298) target = $region16
        $region15: #{gpt_softmax10x_forward.5} parent=11 // pred_region
          _
        $region16: #{gpt_softmax10x_forward.5} parent=11 // pred_fallthru
          _
        // Predicated region
        $region17: #{gpt_softmax10x_forward.5} parent=11 // pred_check
          %p301 = pneg %p229
        $region18: #{gpt_softmax10x_forward.5} parent=11 // pred_check_branch
          %303 = sbr.rel (%p301) target = $region20
        $region19: #{gpt_softmax10x_forward.5} parent=11 // pred_region
          _
        $region20: #{gpt_softmax10x_forward.5} parent=11 // pred_fallthru
          _
      $region12: #{gpt_softmax10x_forward.5} parent=5 // pred_fallthru
        _
      %p304 = scmp.lt.s32.totalorder %s19, 4
      // Predicated region
      $region21: #{gpt_softmax10x_forward.5} parent=5 // pred_check
        %p305 = pneg %p304
      $region22: #{gpt_softmax10x_forward.5} parent=5 // pred_check_branch
        %307 = sbr.rel (%p305) target = $region24
      $region23: #{gpt_softmax10x_forward.5} parent=5 // pred_region
        // Predicated region
        $region25: #{gpt_softmax10x_forward.5} parent=23 // pred_check
          %p308 = pneg %p51
        $region26: #{gpt_softmax10x_forward.5} parent=23 // pred_check_branch
          %310 = sbr.rel (%p308) target = $region28
        $region27: #{gpt_softmax10x_forward.5} parent=23 // pred_region
          %p311 = scmp.lt.s32.totalorder %s26, 1
          %s312 = scalar_select %p311, %s26, 1
          %s313 = smul.addr %s312, 8
          %s314 = scalar_lea.vmem %s0, %s313
        $region28: #{gpt_softmax10x_forward.5} parent=23 // pred_fallthru
          _
        // Predicated region
        $region29: #{gpt_softmax10x_forward.5} parent=23 // pred_check
          %p315 = pneg %p77
        $region30: #{gpt_softmax10x_forward.5} parent=23 // pred_check_branch
          %317 = sbr.rel (%p315) target = $region32
        $region31: #{gpt_softmax10x_forward.5} parent=23 // pred_region
          %p318 = scmp.lt.s32.totalorder %s27, 1
          %s319 = scalar_select %p318, %s27, 1
          %s320 = smul.addr %s319, 4
          %s321 = smul.addr %s320, 8
          %s322 = scalar_lea.vmem %s1, %s321
        $region32: #{gpt_softmax10x_forward.5} parent=23 // pred_fallthru
          _
        // Predicated region
        $region33: #{gpt_softmax10x_forward.5} parent=23 // pred_check
          %p323 = pneg %p103
        $region34: #{gpt_softmax10x_forward.5} parent=23 // pred_check_branch
          %325 = sbr.rel (%p323) target = $region36
        $region35: #{gpt_softmax10x_forward.5} parent=23 // pred_region
          %p326 = scmp.lt.s32.totalorder %s27, 1
          %s327 = scalar_select %p326, %s27, 1
          %s328 = smul.addr %s327, 4
          %s329 = smul.addr %s328, 8
          %s330 = scalar_lea.vmem %s2, %s329
        $region36: #{gpt_softmax10x_forward.5} parent=23 // pred_fallthru
          _
        // Predicated region
        $region37: #{gpt_softmax10x_forward.5} parent=23 // pred_check
          %p331 = pneg %p129
        $region38: #{gpt_softmax10x_forward.5} parent=23 // pred_check_branch
          %333 = sbr.rel (%p331) target = $region40
        $region39: #{gpt_softmax10x_forward.5} parent=23 // pred_region
          %p334 = scmp.lt.s32.totalorder %s27, 1
          %s335 = scalar_select %p334, %s27, 1
          %s336 = smul.addr %s335, 4
          %s337 = smul.addr %s336, 8
          %s338 = scalar_lea.vmem %s3, %s337
        $region40: #{gpt_softmax10x_forward.5} parent=23 // pred_fallthru
          _
        // Predicated region
        $region41: #{gpt_softmax10x_forward.5} parent=23 // pred_check
          %p339 = pneg %p155
        $region42: #{gpt_softmax10x_forward.5} parent=23 // pred_check_branch
          %341 = sbr.rel (%p339) target = $region44
        $region43: #{gpt_softmax10x_forward.5} parent=23 // pred_region
          %p342 = scmp.lt.s32.totalorder %s27, 1
          %s343 = scalar_select %p342, %s27, 1
          %s344 = smul.addr %s343, 2
          %s345 = smul.addr %s344, 8
          %s346 = scalar_lea.vmem %s4, %s345
        $region44: #{gpt_softmax10x_forward.5} parent=23 // pred_fallthru
          _
        // Predicated region
        $region45: #{gpt_softmax10x_forward.5} parent=23 // pred_check
          %p347 = pneg %p181
        $region46: #{gpt_softmax10x_forward.5} parent=23 // pred_check_branch
          %349 = sbr.rel (%p347) target = $region48
        $region47: #{gpt_softmax10x_forward.5} parent=23 // pred_region
          %p350 = scmp.lt.s32.totalorder %s26, 1
          %s351 = scalar_select %p350, %s26, 1
          %s352 = smul.addr %s351, 8
          %s353 = scalar_lea.vmem %s5, %s352
        $region48: #{gpt_softmax10x_forward.5} parent=23 // pred_fallthru
          _
      $region24: #{gpt_softmax10x_forward.5} parent=5 // pred_fallthru
        _
      %p354 = scmp.le.s32.totalorder 1, %s19
      %p355 = scmp.lt.s32.totalorder %s19, 5
      %p356 = pnand %p354, %p355
      %p357 = pneg %p356
      // Predicated region
      $region49: #{gpt_softmax10x_forward.5} parent=5 // pred_check
        _
      $region50: #{gpt_softmax10x_forward.5} parent=5 // pred_check_branch
        %359 = sbr.rel (%p356) target = $region52
      $region51: #{gpt_softmax10x_forward.5} parent=5 // pred_region
        %s360 = ssub.s32 %s19, 1
        %p361 = scmp.lt.s32.totalorder %s28, 1
        %s362 = scalar_select %p361, %s28, 1
        %s363 = smul.addr %s362, 8
        %s364 = scalar_lea.vmem %s0, %s363
        %p365 = pneg %p57
        %p366 = pneg %p54
        %p367 = scmp.lt.s32.totalorder %s29, 1
        %s368 = scalar_select %p367, %s29, 1
        %s369 = smul.addr %s368, 4
        %s370 = smul.addr %s369, 8
        %s371 = scalar_lea.vmem %s1, %s370
        %p372 = pneg %p83
        %p373 = pneg %p80
        %p374 = scmp.lt.s32.totalorder %s29, 1
        %s375 = scalar_select %p374, %s29, 1
        %s376 = smul.addr %s375, 4
        %s377 = smul.addr %s376, 8
        %s378 = scalar_lea.vmem %s2, %s377
        %p379 = pneg %p109
        %p380 = pneg %p106
        %p381 = scmp.lt.s32.totalorder %s29, 1
        %s382 = scalar_select %p381, %s29, 1
        %s383 = smul.addr %s382, 4
        %s384 = smul.addr %s383, 8
        %s385 = scalar_lea.vmem %s3, %s384
        %p386 = pneg %p135
        %p387 = pneg %p132
        %p388 = scmp.lt.s32.totalorder %s29, 1
        %s389 = scalar_select %p388, %s29, 1
        %s390 = smul.addr %s389, 2
        %s391 = smul.addr %s390, 8
        %s392 = scalar_lea.vmem %s4, %s391
        %p393 = pneg %p161
        %p394 = pneg %p158
        %p395 = scmp.lt.s32.totalorder %s28, 1
        %s396 = scalar_select %p395, %s28, 1
        %s397 = smul.addr %s396, 8
        %s398 = scalar_lea.vmem %s5, %s397
        %p399 = pneg %p187
        %p400 = pneg %p184
        %p401 = pneg %p208
        %p402 = pneg %p205
        %p403 = pneg %p229
        %p404 = pneg %p226
        %p405 = pneg %p255
        %p406 = pneg %p252
        %p407 = scmp.lt.s32.totalorder %s28, 1
        %s408 = scalar_select %p407, %s28, 1
        %s409 = smul.addr %s408, 8
        %s410 = scalar_lea.vmem %s8, %s409
        %p411 = pneg %p283
        %p412 = pneg %p280
        %s413 = sand.u32 %s270, 1
        %s414 = scalar_lea.sflag [#allocation4], %s413
        %s415 = sand.u32 %s270, 1
        %s416 = smul.addr %s415, 8
        %s417 = scalar_lea.vmem [#allocation3], %s416
        %p418 = scmp.lt.s32.totalorder %s28, 1
        %s419 = scalar_select %p418, %s28, 1
        %s420 = smul.addr %s419, 8
        %s421 = scalar_lea.vmem %s0, %s420
        %p422 = scmp.lt.s32.totalorder %s29, 1
        %s423 = scalar_select %p422, %s29, 1
        %s424 = smul.addr %s423, 4
        %s425 = smul.addr %s424, 8
        %s426 = scalar_lea.vmem %s1, %s425
        %p427 = scmp.lt.s32.totalorder %s29, 1
        %s428 = scalar_select %p427, %s29, 1
        %s429 = smul.addr %s428, 4
        %s430 = smul.addr %s429, 8
        %s431 = scalar_lea.vmem %s2, %s430
        %p432 = scmp.lt.s32.totalorder %s29, 1
        %s433 = scalar_select %p432, %s29, 1
        %s434 = smul.addr %s433, 4
        %s435 = smul.addr %s434, 8
        %s436 = scalar_lea.vmem %s3, %s435
        %p437 = scmp.lt.s32.totalorder %s29, 1
        %s438 = scalar_select %p437, %s29, 1
        %s439 = smul.addr %s438, 2
        %s440 = smul.addr %s439, 8
        %s441 = scalar_lea.vmem %s4, %s440
        %p442 = scmp.lt.s32.totalorder %s28, 1
        %s443 = scalar_select %p442, %s28, 1
        %s444 = smul.addr %s443, 8
        %s445 = scalar_lea.vmem %s5, %s444
        %p446 = scmp.lt.s32.totalorder %s28, 1
        %s447 = scalar_select %p446, %s28, 1
        %s448 = smul.addr %s447, 8
        %s449 = scalar_lea.vmem %s8, %s448
        %p450 = scmp.eq.s32.totalorder %s29, 0
        // Predicated region
        $region53: #{gpt_softmax10x_forward.5} parent=51 // pred_check
          %p451 = pneg %p450
        $region54: #{gpt_softmax10x_forward.5} parent=51 // pred_check_branch
          %453 = sbr.rel (%p451) target = $region56
        $region55: #{gpt_softmax10x_forward.5} parent=51 // pred_region
          %vm454 = vcmask 261120
          %455 = vst.msk [vmem:[#allocation2] sm:$0xff] %vm454, 0.0
        $region56: #{gpt_softmax10x_forward.5} parent=51 // pred_fallthru
          _
        %v456 = vld [vmem:[%s421] sm:$0xff]
        %v457 = vld [vmem:[%s426] sm:$0xff]
        %v458 = vld [vmem:[%s426 + $0x8] sm:$0xff]
        %v459 = vld [vmem:[%s426 + $0x10] sm:$0xff]
        %v460 = vld [vmem:[%s426 + $0x18] sm:$0xff]
        %vm461 = vcmask 261120
        %v463 = vsel %vm461, %v456, 0
        %465 = vmatprep.subr.mxu0 0.0
        %466 = vmatpush1.msra.mxu0 0.0
        %467 = vmatprep.subr.mxu0 0.0
        %468 = vmatpush1.msra.mxu0 0.0
        %469 = vmatprep.subr.mxu0 0.0
        %470 = vmatpush1.msra.mxu0 0.0
        %471 = vmatprep.subr.mxu0 0.0
        %472 = vmatpush1.msra.mxu0 0.0
        %473 = vmatprep.subr.mxu0 0.0
        %474 = vmatpush1.msra.mxu0 0.0
        %475 = vmatprep.subr.mxu0 0.0
        %476 = vmatpush1.msra.mxu0 0.0
        %477 = vmatprep.subr.mxu0 0.0
        %478 = vmatpush1.msra.mxu0 0.0
        %479 = vmatprep.subr.mxu0 0.0
        %480 = vmatpush1.msra.mxu0 0.0
        %481 = vmatprep.subr.mxu0 0.0
        %482 = vmatpush1.msra.mxu0 0.0
        %483 = vmatprep.subr.mxu0 0.0
        %484 = vmatpush1.msra.mxu0 0.0
        %485 = vmatprep.subr.mxu0 0.0
        %486 = vmatpush1.msra.mxu0 0.0
        %487 = vmatprep.subr.mxu0 0.0
        %488 = vmatpush1.msra.mxu0 0.0
        %489 = vmatprep.subr.mxu0 0.0
        %v490 = vand.u32 %v460, 4294901760
        %491 = vmatpush1.msra.mxu0 %v490
        %492 = vmatprep.subr.mxu0 0.0
        %v493 = vand.u32 %v459, 4294901760
        %494 = vmatpush1.msra.mxu0 %v493
        %495 = vmatprep.subr.mxu0 0.0
        %v496 = vand.u32 %v458, 4294901760
        %497 = vmatpush1.msra.mxu0 %v496
        %498 = vmatprep.subr.mxu0 0.0
        %v499 = vand.u32 %v457, 4294901760
        %500 = vmatpush1.msra.mxu0 %v499
        %501 = vmatprep.subr.mxu0 0.0
        %502 = vmatpush2.msra.mxu0 0.0
        %503 = vmatprep.subr.mxu0 0.0
        %504 = vmatpush2.msra.mxu0 0.0
        %505 = vmatprep.subr.mxu0 0.0
        %506 = vmatpush2.msra.mxu0 0.0
        %507 = vmatprep.subr.mxu0 0.0
        %508 = vmatpush2.msra.mxu0 0.0
        %509 = vmatprep.subr.mxu0 0.0
        %510 = vmatpush2.msra.mxu0 0.0
        %511 = vmatprep.subr.mxu0 0.0
        %512 = vmatpush2.msra.mxu0 0.0
        %513 = vmatprep.subr.mxu0 0.0
        %514 = vmatpush2.msra.mxu0 0.0
        %515 = vmatprep.subr.mxu0 0.0
        %516 = vmatpush2.msra.mxu0 0.0
        %517 = vmatprep.subr.mxu0 0.0
        %518 = vmatpush2.msra.mxu0 0.0
        %519 = vmatprep.subr.mxu0 0.0
        %520 = vmatpush2.msra.mxu0 0.0
        %521 = vmatprep.subr.mxu0 0.0
        %522 = vmatpush2.msra.mxu0 0.0
        %523 = vmatprep.subr.mxu0 0.0
        %524 = vmatpush2.msra.mxu0 0.0
        %525 = vmatprep.subr.mxu0 0.0
        %526 = vmatpush2.msra.mxu0 0.0
        %527 = vmatprep.subr.mxu0 0.0
        %528 = vmatpush2.msra.mxu0 0.0
        %529 = vmatprep.subr.mxu0 0.0
        %530 = vmatpush2.msra.mxu0 0.0
        %531 = vmatprep.subr.mxu0 0.0
        %532 = vmatpush2.msra.mxu0 0.0
        %533 = vmatprep.mubr.f32.mxu0 0.0
        %v534 = vand.u32 %v463, 4294901760
        %v535 = vsub.f32 %v463, %v534
        %v536 = vand.u32 %v535, 4294901760
        %v537 = vsub.f32 %v535, %v536
        %v538 = vand.u32 %v537, 4294901760
        %539 = vmatmul.mubr.f32.gmra.mxu0 %v538
        %v540 = vpop.f32.mrf.mxu0
        %v541 = vadd.f32 0.0, %v540
        %v542 = vpop.f32.mrf.mxu0
        %543 = vdwg.mxu0
        %544 = vmatprep.subr.mxu0 0.0
        %545 = vmatpush1.msra.mxu0 0.0
        %546 = vmatprep.subr.mxu0 0.0
        %547 = vmatpush1.msra.mxu0 0.0
        %548 = vmatprep.subr.mxu0 0.0
        %549 = vmatpush1.msra.mxu0 0.0
        %550 = vmatprep.subr.mxu0 0.0
        %551 = vmatpush1.msra.mxu0 0.0
        %552 = vmatprep.subr.mxu0 0.0
        %553 = vmatpush1.msra.mxu0 0.0
        %554 = vmatprep.subr.mxu0 0.0
        %555 = vmatpush1.msra.mxu0 0.0
        %556 = vmatprep.subr.mxu0 0.0
        %557 = vmatpush1.msra.mxu0 0.0
        %558 = vmatprep.subr.mxu0 0.0
        %559 = vmatpush1.msra.mxu0 0.0
        %560 = vmatprep.subr.mxu0 0.0
        %561 = vmatpush1.msra.mxu0 0.0
        %562 = vmatprep.subr.mxu0 0.0
        %563 = vmatpush1.msra.mxu0 0.0
        %564 = vmatprep.subr.mxu0 0.0
        %565 = vmatpush1.msra.mxu0 0.0
        %566 = vmatprep.subr.mxu0 0.0
        %567 = vmatpush1.msra.mxu0 0.0
        %568 = vmatprep.subr.mxu0 0.0
        %v569 = vand.u32 %v460, 4294901760
        %v570 = vsub.f32 %v460, %v569
        %v571 = vand.u32 %v570, 4294901760
        %v572 = vsub.f32 %v570, %v571
        %v573 = vand.u32 %v572, 4294901760
        %574 = vmatpush1.msra.mxu0 %v573
        %575 = vmatprep.subr.mxu0 0.0
        %v576 = vand.u32 %v459, 4294901760
        %v577 = vsub.f32 %v459, %v576
        %v578 = vand.u32 %v577, 4294901760
        %v579 = vsub.f32 %v577, %v578
        %v580 = vand.u32 %v579, 4294901760
        %581 = vmatpush1.msra.mxu0 %v580
        %582 = vmatprep.subr.mxu0 0.0
        %v583 = vand.u32 %v458, 4294901760
        %v584 = vsub.f32 %v458, %v583
        %v585 = vand.u32 %v584, 4294901760
        %v586 = vsub.f32 %v584, %v585
        %v587 = vand.u32 %v586, 4294901760
        %588 = vmatpush1.msra.mxu0 %v587
        %589 = vmatprep.subr.mxu0 0.0
        %v590 = vand.u32 %v457, 4294901760
        %v591 = vsub.f32 %v457, %v590
        %v592 = vand.u32 %v591, 4294901760
        %v593 = vsub.f32 %v591, %v592
        %v594 = vand.u32 %v593, 4294901760
        %595 = vmatpush1.msra.mxu0 %v594
        %596 = vmatprep.subr.mxu0 0.0
        %597 = vmatpush2.msra.mxu0 0.0
        %598 = vmatprep.subr.mxu0 0.0
        %599 = vmatpush2.msra.mxu0 0.0
        %600 = vmatprep.subr.mxu0 0.0
        %601 = vmatpush2.msra.mxu0 0.0
        %602 = vmatprep.subr.mxu0 0.0
        %603 = vmatpush2.msra.mxu0 0.0
        %604 = vmatprep.subr.mxu0 0.0
        %605 = vmatpush2.msra.mxu0 0.0
        %606 = vmatprep.subr.mxu0 0.0
        %607 = vmatpush2.msra.mxu0 0.0
        %608 = vmatprep.subr.mxu0 0.0
        %609 = vmatpush2.msra.mxu0 0.0
        %610 = vmatprep.subr.mxu0 0.0
        %611 = vmatpush2.msra.mxu0 0.0
        %612 = vmatprep.subr.mxu0 0.0
        %613 = vmatpush2.msra.mxu0 0.0
        %614 = vmatprep.subr.mxu0 0.0
        %615 = vmatpush2.msra.mxu0 0.0
        %616 = vmatprep.subr.mxu0 0.0
        %617 = vmatpush2.msra.mxu0 0.0
        %618 = vmatprep.subr.mxu0 0.0
        %619 = vmatpush2.msra.mxu0 0.0
        %620 = vmatprep.subr.mxu0 0.0
        %621 = vmatpush2.msra.mxu0 0.0
        %622 = vmatprep.subr.mxu0 0.0
        %623 = vmatpush2.msra.mxu0 0.0
        %624 = vmatprep.subr.mxu0 0.0
        %625 = vmatpush2.msra.mxu0 0.0
        %626 = vmatprep.subr.mxu0 0.0
        %627 = vmatpush2.msra.mxu0 0.0
        %628 = vmatprep.mubr.f32.mxu0 0.0
        %v629 = vand.u32 %v463, 4294901760
        %630 = vmatmul.mubr.f32.gmra.mxu0 %v629
        %v631 = vpop.f32.mrf.mxu0
        %v632 = vadd.f32 %v541, %v631
        %v633 = vpop.f32.mrf.mxu0
        %634 = vdwg.mxu0
        %635 = vmatprep.subr.mxu0 0.0
        %636 = vmatpush1.msra.mxu0 0.0
        %637 = vmatprep.subr.mxu0 0.0
        %638 = vmatpush1.msra.mxu0 0.0
        %639 = vmatprep.subr.mxu0 0.0
        %640 = vmatpush1.msra.mxu0 0.0
        %641 = vmatprep.subr.mxu0 0.0
        %642 = vmatpush1.msra.mxu0 0.0
        %643 = vmatprep.subr.mxu0 0.0
        %644 = vmatpush1.msra.mxu0 0.0
        %645 = vmatprep.subr.mxu0 0.0
        %646 = vmatpush1.msra.mxu0 0.0
        %647 = vmatprep.subr.mxu0 0.0
        %648 = vmatpush1.msra.mxu0 0.0
        %649 = vmatprep.subr.mxu0 0.0
        %650 = vmatpush1.msra.mxu0 0.0
        %651 = vmatprep.subr.mxu0 0.0
        %652 = vmatpush1.msra.mxu0 0.0
        %653 = vmatprep.subr.mxu0 0.0
        %654 = vmatpush1.msra.mxu0 0.0
        %655 = vmatprep.subr.mxu0 0.0
        %656 = vmatpush1.msra.mxu0 0.0
        %657 = vmatprep.subr.mxu0 0.0
        %658 = vmatpush1.msra.mxu0 0.0
        %659 = vmatprep.subr.mxu0 0.0
        %v660 = vand.u32 %v460, 4294901760
        %v661 = vsub.f32 %v460, %v660
        %662 = vmatpush1.msra.mxu0 %v661
        %663 = vmatprep.subr.mxu0 0.0
        %v664 = vand.u32 %v459, 4294901760
        %v665 = vsub.f32 %v459, %v664
        %666 = vmatpush1.msra.mxu0 %v665
        %667 = vmatprep.subr.mxu0 0.0
        %v668 = vand.u32 %v458, 4294901760
        %v669 = vsub.f32 %v458, %v668
        %670 = vmatpush1.msra.mxu0 %v669
        %671 = vmatprep.subr.mxu0 0.0
        %v672 = vand.u32 %v457, 4294901760
        %v673 = vsub.f32 %v457, %v672
        %674 = vmatpush1.msra.mxu0 %v673
        %675 = vmatprep.subr.mxu0 0.0
        %676 = vmatpush2.msra.mxu0 0.0
        %677 = vmatprep.subr.mxu0 0.0
        %678 = vmatpush2.msra.mxu0 0.0
        %679 = vmatprep.subr.mxu0 0.0
        %680 = vmatpush2.msra.mxu0 0.0
        %681 = vmatprep.subr.mxu0 0.0
        %682 = vmatpush2.msra.mxu0 0.0
        %683 = vmatprep.subr.mxu0 0.0
        %684 = vmatpush2.msra.mxu0 0.0
        %685 = vmatprep.subr.mxu0 0.0
        %686 = vmatpush2.msra.mxu0 0.0
        %687 = vmatprep.subr.mxu0 0.0
        %688 = vmatpush2.msra.mxu0 0.0
        %689 = vmatprep.subr.mxu0 0.0
        %690 = vmatpush2.msra.mxu0 0.0
        %691 = vmatprep.subr.mxu0 0.0
        %692 = vmatpush2.msra.mxu0 0.0
        %693 = vmatprep.subr.mxu0 0.0
        %694 = vmatpush2.msra.mxu0 0.0
        %695 = vmatprep.subr.mxu0 0.0
        %696 = vmatpush2.msra.mxu0 0.0
        %697 = vmatprep.subr.mxu0 0.0
        %698 = vmatpush2.msra.mxu0 0.0
        %699 = vmatprep.subr.mxu0 0.0
        %700 = vmatpush2.msra.mxu0 0.0
        %701 = vmatprep.subr.mxu0 0.0
        %702 = vmatpush2.msra.mxu0 0.0
        %703 = vmatprep.subr.mxu0 0.0
        %704 = vmatpush2.msra.mxu0 0.0
        %705 = vmatprep.subr.mxu0 0.0
        %706 = vmatpush2.msra.mxu0 0.0
        %707 = vmatprep.mubr.f32.mxu0 0.0
        %v708 = vand.u32 %v463, 4294901760
        %v709 = vsub.f32 %v463, %v708
        %710 = vmatmul.mubr.f32.gmra.mxu0 %v709
        %v711 = vpop.f32.mrf.mxu0
        %v712 = vadd.f32 %v632, %v711
        %v713 = vpop.f32.mrf.mxu0
        %714 = vdwg.mxu0
        %715 = vmatprep.subr.mxu0 0.0
        %716 = vmatpush1.msra.mxu0 0.0
        %717 = vmatprep.subr.mxu0 0.0
        %718 = vmatpush1.msra.mxu0 0.0
        %719 = vmatprep.subr.mxu0 0.0
        %720 = vmatpush1.msra.mxu0 0.0
        %721 = vmatprep.subr.mxu0 0.0
        %722 = vmatpush1.msra.mxu0 0.0
        %723 = vmatprep.subr.mxu0 0.0
        %724 = vmatpush1.msra.mxu0 0.0
        %725 = vmatprep.subr.mxu0 0.0
        %726 = vmatpush1.msra.mxu0 0.0
        %727 = vmatprep.subr.mxu0 0.0
        %728 = vmatpush1.msra.mxu0 0.0
        %729 = vmatprep.subr.mxu0 0.0
        %730 = vmatpush1.msra.mxu0 0.0
        %731 = vmatprep.subr.mxu0 0.0
        %732 = vmatpush1.msra.mxu0 0.0
        %733 = vmatprep.subr.mxu0 0.0
        %734 = vmatpush1.msra.mxu0 0.0
        %735 = vmatprep.subr.mxu0 0.0
        %736 = vmatpush1.msra.mxu0 0.0
        %737 = vmatprep.subr.mxu0 0.0
        %738 = vmatpush1.msra.mxu0 0.0
        %739 = vmatprep.subr.mxu0 0.0
        %v740 = vand.u32 %v460, 4294901760
        %741 = vmatpush1.msra.mxu0 %v740
        %742 = vmatprep.subr.mxu0 0.0
        %v743 = vand.u32 %v459, 4294901760
        %744 = vmatpush1.msra.mxu0 %v743
        %745 = vmatprep.subr.mxu0 0.0
        %v746 = vand.u32 %v458, 4294901760
        %747 = vmatpush1.msra.mxu0 %v746
        %748 = vmatprep.subr.mxu0 0.0
        %v749 = vand.u32 %v457, 4294901760
        %750 = vmatpush1.msra.mxu0 %v749
        %751 = vmatprep.subr.mxu0 0.0
        %752 = vmatpush2.msra.mxu0 0.0
        %753 = vmatprep.subr.mxu0 0.0
        %754 = vmatpush2.msra.mxu0 0.0
        %755 = vmatprep.subr.mxu0 0.0
        %756 = vmatpush2.msra.mxu0 0.0
        %757 = vmatprep.subr.mxu0 0.0
        %758 = vmatpush2.msra.mxu0 0.0
        %759 = vmatprep.subr.mxu0 0.0
        %760 = vmatpush2.msra.mxu0 0.0
        %761 = vmatprep.subr.mxu0 0.0
        %762 = vmatpush2.msra.mxu0 0.0
        %763 = vmatprep.subr.mxu0 0.0
        %764 = vmatpush2.msra.mxu0 0.0
        %765 = vmatprep.subr.mxu0 0.0
        %766 = vmatpush2.msra.mxu0 0.0
        %767 = vmatprep.subr.mxu0 0.0
        %768 = vmatpush2.msra.mxu0 0.0
        %769 = vmatprep.subr.mxu0 0.0
        %770 = vmatpush2.msra.mxu0 0.0
        %771 = vmatprep.subr.mxu0 0.0
        %772 = vmatpush2.msra.mxu0 0.0
        %773 = vmatprep.subr.mxu0 0.0
        %774 = vmatpush2.msra.mxu0 0.0
        %775 = vmatprep.subr.mxu0 0.0
        %776 = vmatpush2.msra.mxu0 0.0
        %777 = vmatprep.subr.mxu0 0.0
        %778 = vmatpush2.msra.mxu0 0.0
        %779 = vmatprep.subr.mxu0 0.0
        %780 = vmatpush2.msra.mxu0 0.0
        %781 = vmatprep.subr.mxu0 0.0
        %782 = vmatpush2.msra.mxu0 0.0
        %783 = vmatprep.mubr.f32.mxu0 0.0
        %v784 = vand.u32 %v463, 4294901760
        %v785 = vsub.f32 %v463, %v784
        %v786 = vand.u32 %v785, 4294901760
        %787 = vmatmul.mubr.f32.gmra.mxu0 %v786
        %v788 = vpop.f32.mrf.mxu0
        %v789 = vadd.f32 %v712, %v788
        %v790 = vpop.f32.mrf.mxu0
        %791 = vdwg.mxu0
        %792 = vmatprep.subr.mxu0 0.0
        %793 = vmatpush1.msra.mxu0 0.0
        %794 = vmatprep.subr.mxu0 0.0
        %795 = vmatpush1.msra.mxu0 0.0
        %796 = vmatprep.subr.mxu0 0.0
        %797 = vmatpush1.msra.mxu0 0.0
        %798 = vmatprep.subr.mxu0 0.0
        %799 = vmatpush1.msra.mxu0 0.0
        %800 = vmatprep.subr.mxu0 0.0
        %801 = vmatpush1.msra.mxu0 0.0
        %802 = vmatprep.subr.mxu0 0.0
        %803 = vmatpush1.msra.mxu0 0.0
        %804 = vmatprep.subr.mxu0 0.0
        %805 = vmatpush1.msra.mxu0 0.0
        %806 = vmatprep.subr.mxu0 0.0
        %807 = vmatpush1.msra.mxu0 0.0
        %808 = vmatprep.subr.mxu0 0.0
        %809 = vmatpush1.msra.mxu0 0.0
        %810 = vmatprep.subr.mxu0 0.0
        %811 = vmatpush1.msra.mxu0 0.0
        %812 = vmatprep.subr.mxu0 0.0
        %813 = vmatpush1.msra.mxu0 0.0
        %814 = vmatprep.subr.mxu0 0.0
        %815 = vmatpush1.msra.mxu0 0.0
        %816 = vmatprep.subr.mxu0 0.0
        %v817 = vand.u32 %v460, 4294901760
        %v818 = vsub.f32 %v460, %v817
        %v819 = vand.u32 %v818, 4294901760
        %820 = vmatpush1.msra.mxu0 %v819
        %821 = vmatprep.subr.mxu0 0.0
        %v822 = vand.u32 %v459, 4294901760
        %v823 = vsub.f32 %v459, %v822
        %v824 = vand.u32 %v823, 4294901760
        %825 = vmatpush1.msra.mxu0 %v824
        %826 = vmatprep.subr.mxu0 0.0
        %v827 = vand.u32 %v458, 4294901760
        %v828 = vsub.f32 %v458, %v827
        %v829 = vand.u32 %v828, 4294901760
        %830 = vmatpush1.msra.mxu0 %v829
        %831 = vmatprep.subr.mxu0 0.0
        %v832 = vand.u32 %v457, 4294901760
        %v833 = vsub.f32 %v457, %v832
        %v834 = vand.u32 %v833, 4294901760
        %835 = vmatpush1.msra.mxu0 %v834
        %836 = vmatprep.subr.mxu0 0.0
        %837 = vmatpush2.msra.mxu0 0.0
        %838 = vmatprep.subr.mxu0 0.0
        %839 = vmatpush2.msra.mxu0 0.0
        %840 = vmatprep.subr.mxu0 0.0
        %841 = vmatpush2.msra.mxu0 0.0
        %842 = vmatprep.subr.mxu0 0.0
        %843 = vmatpush2.msra.mxu0 0.0
        %844 = vmatprep.subr.mxu0 0.0
        %845 = vmatpush2.msra.mxu0 0.0
        %846 = vmatprep.subr.mxu0 0.0
        %847 = vmatpush2.msra.mxu0 0.0
        %848 = vmatprep.subr.mxu0 0.0
        %849 = vmatpush2.msra.mxu0 0.0
        %850 = vmatprep.subr.mxu0 0.0
        %851 = vmatpush2.msra.mxu0 0.0
        %852 = vmatprep.subr.mxu0 0.0
        %853 = vmatpush2.msra.mxu0 0.0
        %854 = vmatprep.subr.mxu0 0.0
        %855 = vmatpush2.msra.mxu0 0.0
        %856 = vmatprep.subr.mxu0 0.0
        %857 = vmatpush2.msra.mxu0 0.0
        %858 = vmatprep.subr.mxu0 0.0
        %859 = vmatpush2.msra.mxu0 0.0
        %860 = vmatprep.subr.mxu0 0.0
        %861 = vmatpush2.msra.mxu0 0.0
        %862 = vmatprep.subr.mxu0 0.0
        %863 = vmatpush2.msra.mxu0 0.0
        %864 = vmatprep.subr.mxu0 0.0
        %865 = vmatpush2.msra.mxu0 0.0
        %866 = vmatprep.subr.mxu0 0.0
        %867 = vmatpush2.msra.mxu0 0.0
        %868 = vmatprep.mubr.f32.mxu0 0.0
        %v869 = vand.u32 %v463, 4294901760
        %870 = vmatmul.mubr.f32.gmra.mxu0 %v869
        %v871 = vpop.f32.mrf.mxu0
        %v872 = vadd.f32 %v789, %v871
        %v873 = vpop.f32.mrf.mxu0
        %874 = vdwg.mxu0
        %875 = vmatprep.subr.mxu0 0.0
        %876 = vmatpush1.msra.mxu0 0.0
        %877 = vmatprep.subr.mxu0 0.0
        %878 = vmatpush1.msra.mxu0 0.0
        %879 = vmatprep.subr.mxu0 0.0
        %880 = vmatpush1.msra.mxu0 0.0
        %881 = vmatprep.subr.mxu0 0.0
        %882 = vmatpush1.msra.mxu0 0.0
        %883 = vmatprep.subr.mxu0 0.0
        %884 = vmatpush1.msra.mxu0 0.0
        %885 = vmatprep.subr.mxu0 0.0
        %886 = vmatpush1.msra.mxu0 0.0
        %887 = vmatprep.subr.mxu0 0.0
        %888 = vmatpush1.msra.mxu0 0.0
        %889 = vmatprep.subr.mxu0 0.0
        %890 = vmatpush1.msra.mxu0 0.0
        %891 = vmatprep.subr.mxu0 0.0
        %892 = vmatpush1.msra.mxu0 0.0
        %893 = vmatprep.subr.mxu0 0.0
        %894 = vmatpush1.msra.mxu0 0.0
        %895 = vmatprep.subr.mxu0 0.0
        %896 = vmatpush1.msra.mxu0 0.0
        %897 = vmatprep.subr.mxu0 0.0
        %898 = vmatpush1.msra.mxu0 0.0
        %899 = vmatprep.subr.mxu0 0.0
        %v900 = vand.u32 %v460, 4294901760
        %901 = vmatpush1.msra.mxu0 %v900
        %902 = vmatprep.subr.mxu0 0.0
        %v903 = vand.u32 %v459, 4294901760
        %904 = vmatpush1.msra.mxu0 %v903
        %905 = vmatprep.subr.mxu0 0.0
        %v906 = vand.u32 %v458, 4294901760
        %907 = vmatpush1.msra.mxu0 %v906
        %908 = vmatprep.subr.mxu0 0.0
        %v909 = vand.u32 %v457, 4294901760
        %910 = vmatpush1.msra.mxu0 %v909
        %911 = vmatprep.subr.mxu0 0.0
        %912 = vmatpush2.msra.mxu0 0.0
        %913 = vmatprep.subr.mxu0 0.0
        %914 = vmatpush2.msra.mxu0 0.0
        %915 = vmatprep.subr.mxu0 0.0
        %916 = vmatpush2.msra.mxu0 0.0
        %917 = vmatprep.subr.mxu0 0.0
        %918 = vmatpush2.msra.mxu0 0.0
        %919 = vmatprep.subr.mxu0 0.0
        %920 = vmatpush2.msra.mxu0 0.0
        %921 = vmatprep.subr.mxu0 0.0
        %922 = vmatpush2.msra.mxu0 0.0
        %923 = vmatprep.subr.mxu0 0.0
        %924 = vmatpush2.msra.mxu0 0.0
        %925 = vmatprep.subr.mxu0 0.0
        %926 = vmatpush2.msra.mxu0 0.0
        %927 = vmatprep.subr.mxu0 0.0
        %928 = vmatpush2.msra.mxu0 0.0
        %929 = vmatprep.subr.mxu0 0.0
        %930 = vmatpush2.msra.mxu0 0.0
        %931 = vmatprep.subr.mxu0 0.0
        %932 = vmatpush2.msra.mxu0 0.0
        %933 = vmatprep.subr.mxu0 0.0
        %934 = vmatpush2.msra.mxu0 0.0
        %935 = vmatprep.subr.mxu0 0.0
        %936 = vmatpush2.msra.mxu0 0.0
        %937 = vmatprep.subr.mxu0 0.0
        %938 = vmatpush2.msra.mxu0 0.0
        %939 = vmatprep.subr.mxu0 0.0
        %940 = vmatpush2.msra.mxu0 0.0
        %941 = vmatprep.subr.mxu0 0.0
        %942 = vmatpush2.msra.mxu0 0.0
        %943 = vmatprep.mubr.f32.mxu0 0.0
        %v944 = vand.u32 %v463, 4294901760
        %945 = vmatmul.mubr.f32.gmra.mxu0 %v944
        %v946 = vpop.f32.mrf.mxu0
        %v947 = vadd.f32 %v872, %v946
        %v948 = vpop.f32.mrf.mxu0
        %949 = vdwg.mxu0
        %v950 = vld [vmem:[%s431] sm:$0xff]
        %v951 = vld [vmem:[%s431 + $0x8] sm:$0xff]
        %v952 = vld [vmem:[%s431 + $0x10] sm:$0xff]
        %v953 = vld [vmem:[%s431 + $0x18] sm:$0xff]
        %954 = vmatprep.subr.mxu0 0.0
        %955 = vmatpush1.msra.mxu0 0.0
        %956 = vmatprep.subr.mxu0 0.0
        %957 = vmatpush1.msra.mxu0 0.0
        %958 = vmatprep.subr.mxu0 0.0
        %959 = vmatpush1.msra.mxu0 0.0
        %960 = vmatprep.subr.mxu0 0.0
        %961 = vmatpush1.msra.mxu0 0.0
        %962 = vmatprep.subr.mxu0 0.0
        %963 = vmatpush1.msra.mxu0 0.0
        %964 = vmatprep.subr.mxu0 0.0
        %965 = vmatpush1.msra.mxu0 0.0
        %966 = vmatprep.subr.mxu0 0.0
        %967 = vmatpush1.msra.mxu0 0.0
        %968 = vmatprep.subr.mxu0 0.0
        %969 = vmatpush1.msra.mxu0 0.0
        %970 = vmatprep.subr.mxu0 0.0
        %971 = vmatpush1.msra.mxu0 0.0
        %972 = vmatprep.subr.mxu0 0.0
        %973 = vmatpush1.msra.mxu0 0.0
        %974 = vmatprep.subr.mxu0 0.0
        %975 = vmatpush1.msra.mxu0 0.0
        %976 = vmatprep.subr.mxu0 0.0
        %977 = vmatpush1.msra.mxu0 0.0
        %978 = vmatprep.subr.mxu0 0.0
        %v979 = vand.u32 %v953, 4294901760
        %980 = vmatpush1.msra.mxu0 %v979
        %981 = vmatprep.subr.mxu0 0.0
        %v982 = vand.u32 %v952, 4294901760
        %983 = vmatpush1.msra.mxu0 %v982
        %984 = vmatprep.subr.mxu0 0.0
        %v985 = vand.u32 %v951, 4294901760
        %986 = vmatpush1.msra.mxu0 %v985
        %987 = vmatprep.subr.mxu0 0.0
        %v988 = vand.u32 %v950, 4294901760
        %989 = vmatpush1.msra.mxu0 %v988
        %990 = vmatprep.subr.mxu0 0.0
        %991 = vmatpush2.msra.mxu0 0.0
        %992 = vmatprep.subr.mxu0 0.0
        %993 = vmatpush2.msra.mxu0 0.0
        %994 = vmatprep.subr.mxu0 0.0
        %995 = vmatpush2.msra.mxu0 0.0
        %996 = vmatprep.subr.mxu0 0.0
        %997 = vmatpush2.msra.mxu0 0.0
        %998 = vmatprep.subr.mxu0 0.0
        %999 = vmatpush2.msra.mxu0 0.0
        %1000 = vmatprep.subr.mxu0 0.0
        %1001 = vmatpush2.msra.mxu0 0.0
        %1002 = vmatprep.subr.mxu0 0.0
        %1003 = vmatpush2.msra.mxu0 0.0
        %1004 = vmatprep.subr.mxu0 0.0
        %1005 = vmatpush2.msra.mxu0 0.0
        %1006 = vmatprep.subr.mxu0 0.0
        %1007 = vmatpush2.msra.mxu0 0.0
        %1008 = vmatprep.subr.mxu0 0.0
        %1009 = vmatpush2.msra.mxu0 0.0
        %1010 = vmatprep.subr.mxu0 0.0
        %1011 = vmatpush2.msra.mxu0 0.0
        %1012 = vmatprep.subr.mxu0 0.0
        %1013 = vmatpush2.msra.mxu0 0.0
        %1014 = vmatprep.subr.mxu0 0.0
        %1015 = vmatpush2.msra.mxu0 0.0
        %1016 = vmatprep.subr.mxu0 0.0
        %1017 = vmatpush2.msra.mxu0 0.0
        %1018 = vmatprep.subr.mxu0 0.0
        %1019 = vmatpush2.msra.mxu0 0.0
        %1020 = vmatprep.subr.mxu0 0.0
        %1021 = vmatpush2.msra.mxu0 0.0
        %1022 = vmatprep.mubr.f32.mxu0 0.0
        %v1023 = vand.u32 %v463, 4294901760
        %v1024 = vsub.f32 %v463, %v1023
        %v1025 = vand.u32 %v1024, 4294901760
        %v1026 = vsub.f32 %v1024, %v1025
        %v1027 = vand.u32 %v1026, 4294901760
        %1028 = vmatmul.mubr.f32.gmra.mxu0 %v1027
        %v1029 = vpop.f32.mrf.mxu0
        %v1030 = vadd.f32 0.0, %v1029
        %v1031 = vpop.f32.mrf.mxu0
        %1032 = vdwg.mxu0
        %1033 = vmatprep.subr.mxu0 0.0
        %1034 = vmatpush1.msra.mxu0 0.0
        %1035 = vmatprep.subr.mxu0 0.0
        %1036 = vmatpush1.msra.mxu0 0.0
        %1037 = vmatprep.subr.mxu0 0.0
        %1038 = vmatpush1.msra.mxu0 0.0
        %1039 = vmatprep.subr.mxu0 0.0
        %1040 = vmatpush1.msra.mxu0 0.0
        %1041 = vmatprep.subr.mxu0 0.0
        %1042 = vmatpush1.msra.mxu0 0.0
        %1043 = vmatprep.subr.mxu0 0.0
        %1044 = vmatpush1.msra.mxu0 0.0
        %1045 = vmatprep.subr.mxu0 0.0
        %1046 = vmatpush1.msra.mxu0 0.0
        %1047 = vmatprep.subr.mxu0 0.0
        %1048 = vmatpush1.msra.mxu0 0.0
        %1049 = vmatprep.subr.mxu0 0.0
        %1050 = vmatpush1.msra.mxu0 0.0
        %1051 = vmatprep.subr.mxu0 0.0
        %1052 = vmatpush1.msra.mxu0 0.0
        %1053 = vmatprep.subr.mxu0 0.0
        %1054 = vmatpush1.msra.mxu0 0.0
        %1055 = vmatprep.subr.mxu0 0.0
        %1056 = vmatpush1.msra.mxu0 0.0
        %1057 = vmatprep.subr.mxu0 0.0
        %v1058 = vand.u32 %v953, 4294901760
        %v1059 = vsub.f32 %v953, %v1058
        %v1060 = vand.u32 %v1059, 4294901760
        %v1061 = vsub.f32 %v1059, %v1060
        %v1062 = vand.u32 %v1061, 4294901760
        %1063 = vmatpush1.msra.mxu0 %v1062
        %1064 = vmatprep.subr.mxu0 0.0
        %v1065 = vand.u32 %v952, 4294901760
        %v1066 = vsub.f32 %v952, %v1065
        %v1067 = vand.u32 %v1066, 4294901760
        %v1068 = vsub.f32 %v1066, %v1067
        %v1069 = vand.u32 %v1068, 4294901760
        %1070 = vmatpush1.msra.mxu0 %v1069
        %1071 = vmatprep.subr.mxu0 0.0
        %v1072 = vand.u32 %v951, 4294901760
        %v1073 = vsub.f32 %v951, %v1072
        %v1074 = vand.u32 %v1073, 4294901760
        %v1075 = vsub.f32 %v1073, %v1074
        %v1076 = vand.u32 %v1075, 4294901760
        %1077 = vmatpush1.msra.mxu0 %v1076
        %1078 = vmatprep.subr.mxu0 0.0
        %v1079 = vand.u32 %v950, 4294901760
        %v1080 = vsub.f32 %v950, %v1079
        %v1081 = vand.u32 %v1080, 4294901760
        %v1082 = vsub.f32 %v1080, %v1081
        %v1083 = vand.u32 %v1082, 4294901760
        %1084 = vmatpush1.msra.mxu0 %v1083
        %1085 = vmatprep.subr.mxu0 0.0
        %1086 = vmatpush2.msra.mxu0 0.0
        %1087 = vmatprep.subr.mxu0 0.0
        %1088 = vmatpush2.msra.mxu0 0.0
        %1089 = vmatprep.subr.mxu0 0.0
        %1090 = vmatpush2.msra.mxu0 0.0
        %1091 = vmatprep.subr.mxu0 0.0
        %1092 = vmatpush2.msra.mxu0 0.0
        %1093 = vmatprep.subr.mxu0 0.0
        %1094 = vmatpush2.msra.mxu0 0.0
        %1095 = vmatprep.subr.mxu0 0.0
        %1096 = vmatpush2.msra.mxu0 0.0
        %1097 = vmatprep.subr.mxu0 0.0
        %1098 = vmatpush2.msra.mxu0 0.0
        %1099 = vmatprep.subr.mxu0 0.0
        %1100 = vmatpush2.msra.mxu0 0.0
        %1101 = vmatprep.subr.mxu0 0.0
        %1102 = vmatpush2.msra.mxu0 0.0
        %1103 = vmatprep.subr.mxu0 0.0
        %1104 = vmatpush2.msra.mxu0 0.0
        %1105 = vmatprep.subr.mxu0 0.0
        %1106 = vmatpush2.msra.mxu0 0.0
        %1107 = vmatprep.subr.mxu0 0.0
        %1108 = vmatpush2.msra.mxu0 0.0
        %1109 = vmatprep.subr.mxu0 0.0
        %1110 = vmatpush2.msra.mxu0 0.0
        %1111 = vmatprep.subr.mxu0 0.0
        %1112 = vmatpush2.msra.mxu0 0.0
        %1113 = vmatprep.subr.mxu0 0.0
        %1114 = vmatpush2.msra.mxu0 0.0
        %1115 = vmatprep.subr.mxu0 0.0
        %1116 = vmatpush2.msra.mxu0 0.0
        %1117 = vmatprep.mubr.f32.mxu0 0.0
        %v1118 = vand.u32 %v463, 4294901760
        %1119 = vmatmul.mubr.f32.gmra.mxu0 %v1118
        %v1120 = vpop.f32.mrf.mxu0
        %v1121 = vadd.f32 %v1030, %v1120
        %v1122 = vpop.f32.mrf.mxu0
        %1123 = vdwg.mxu0
        %1124 = vmatprep.subr.mxu0 0.0
        %1125 = vmatpush1.msra.mxu0 0.0
        %1126 = vmatprep.subr.mxu0 0.0
        %1127 = vmatpush1.msra.mxu0 0.0
        %1128 = vmatprep.subr.mxu0 0.0
        %1129 = vmatpush1.msra.mxu0 0.0
        %1130 = vmatprep.subr.mxu0 0.0
        %1131 = vmatpush1.msra.mxu0 0.0
        %1132 = vmatprep.subr.mxu0 0.0
        %1133 = vmatpush1.msra.mxu0 0.0
        %1134 = vmatprep.subr.mxu0 0.0
        %1135 = vmatpush1.msra.mxu0 0.0
        %1136 = vmatprep.subr.mxu0 0.0
        %1137 = vmatpush1.msra.mxu0 0.0
        %1138 = vmatprep.subr.mxu0 0.0
        %1139 = vmatpush1.msra.mxu0 0.0
        %1140 = vmatprep.subr.mxu0 0.0
        %1141 = vmatpush1.msra.mxu0 0.0
        %1142 = vmatprep.subr.mxu0 0.0
        %1143 = vmatpush1.msra.mxu0 0.0
        %1144 = vmatprep.subr.mxu0 0.0
        %1145 = vmatpush1.msra.mxu0 0.0
        %1146 = vmatprep.subr.mxu0 0.0
        %1147 = vmatpush1.msra.mxu0 0.0
        %1148 = vmatprep.subr.mxu0 0.0
        %v1149 = vand.u32 %v953, 4294901760
        %v1150 = vsub.f32 %v953, %v1149
        %1151 = vmatpush1.msra.mxu0 %v1150
        %1152 = vmatprep.subr.mxu0 0.0
        %v1153 = vand.u32 %v952, 4294901760
        %v1154 = vsub.f32 %v952, %v1153
        %1155 = vmatpush1.msra.mxu0 %v1154
        %1156 = vmatprep.subr.mxu0 0.0
        %v1157 = vand.u32 %v951, 4294901760
        %v1158 = vsub.f32 %v951, %v1157
        %1159 = vmatpush1.msra.mxu0 %v1158
        %1160 = vmatprep.subr.mxu0 0.0
        %v1161 = vand.u32 %v950, 4294901760
        %v1162 = vsub.f32 %v950, %v1161
        %1163 = vmatpush1.msra.mxu0 %v1162
        %1164 = vmatprep.subr.mxu0 0.0
        %1165 = vmatpush2.msra.mxu0 0.0
        %1166 = vmatprep.subr.mxu0 0.0
        %1167 = vmatpush2.msra.mxu0 0.0
        %1168 = vmatprep.subr.mxu0 0.0
        %1169 = vmatpush2.msra.mxu0 0.0
        %1170 = vmatprep.subr.mxu0 0.0
        %1171 = vmatpush2.msra.mxu0 0.0
        %1172 = vmatprep.subr.mxu0 0.0
        %1173 = vmatpush2.msra.mxu0 0.0
        %1174 = vmatprep.subr.mxu0 0.0
        %1175 = vmatpush2.msra.mxu0 0.0
        %1176 = vmatprep.subr.mxu0 0.0
        %1177 = vmatpush2.msra.mxu0 0.0
        %1178 = vmatprep.subr.mxu0 0.0
        %1179 = vmatpush2.msra.mxu0 0.0
        %1180 = vmatprep.subr.mxu0 0.0
        %1181 = vmatpush2.msra.mxu0 0.0
        %1182 = vmatprep.subr.mxu0 0.0
        %1183 = vmatpush2.msra.mxu0 0.0
        %1184 = vmatprep.subr.mxu0 0.0
        %1185 = vmatpush2.msra.mxu0 0.0
        %1186 = vmatprep.subr.mxu0 0.0
        %1187 = vmatpush2.msra.mxu0 0.0
        %1188 = vmatprep.subr.mxu0 0.0
        %1189 = vmatpush2.msra.mxu0 0.0
        %1190 = vmatprep.subr.mxu0 0.0
        %1191 = vmatpush2.msra.mxu0 0.0
        %1192 = vmatprep.subr.mxu0 0.0
        %1193 = vmatpush2.msra.mxu0 0.0
        %1194 = vmatprep.subr.mxu0 0.0
        %1195 = vmatpush2.msra.mxu0 0.0
        %1196 = vmatprep.mubr.f32.mxu0 0.0
        %v1197 = vand.u32 %v463, 4294901760
        %v1198 = vsub.f32 %v463, %v1197
        %1199 = vmatmul.mubr.f32.gmra.mxu0 %v1198
        %v1200 = vpop.f32.mrf.mxu0
        %v1201 = vadd.f32 %v1121, %v1200
        %v1202 = vpop.f32.mrf.mxu0
        %1203 = vdwg.mxu0
        %1204 = vmatprep.subr.mxu0 0.0
        %1205 = vmatpush1.msra.mxu0 0.0
        %1206 = vmatprep.subr.mxu0 0.0
        %1207 = vmatpush1.msra.mxu0 0.0
        %1208 = vmatprep.subr.mxu0 0.0
        %1209 = vmatpush1.msra.mxu0 0.0
        %1210 = vmatprep.subr.mxu0 0.0
        %1211 = vmatpush1.msra.mxu0 0.0
        %1212 = vmatprep.subr.mxu0 0.0
        %1213 = vmatpush1.msra.mxu0 0.0
        %1214 = vmatprep.subr.mxu0 0.0
        %1215 = vmatpush1.msra.mxu0 0.0
        %1216 = vmatprep.subr.mxu0 0.0
        %1217 = vmatpush1.msra.mxu0 0.0
        %1218 = vmatprep.subr.mxu0 0.0
        %1219 = vmatpush1.msra.mxu0 0.0
        %1220 = vmatprep.subr.mxu0 0.0
        %1221 = vmatpush1.msra.mxu0 0.0
        %1222 = vmatprep.subr.mxu0 0.0
        %1223 = vmatpush1.msra.mxu0 0.0
        %1224 = vmatprep.subr.mxu0 0.0
        %1225 = vmatpush1.msra.mxu0 0.0
        %1226 = vmatprep.subr.mxu0 0.0
        %1227 = vmatpush1.msra.mxu0 0.0
        %1228 = vmatprep.subr.mxu0 0.0
        %v1229 = vand.u32 %v953, 4294901760
        %1230 = vmatpush1.msra.mxu0 %v1229
        %1231 = vmatprep.subr.mxu0 0.0
        %v1232 = vand.u32 %v952, 4294901760
        %1233 = vmatpush1.msra.mxu0 %v1232
        %1234 = vmatprep.subr.mxu0 0.0
        %v1235 = vand.u32 %v951, 4294901760
        %1236 = vmatpush1.msra.mxu0 %v1235
        %1237 = vmatprep.subr.mxu0 0.0
        %v1238 = vand.u32 %v950, 4294901760
        %1239 = vmatpush1.msra.mxu0 %v1238
        %1240 = vmatprep.subr.mxu0 0.0
        %1241 = vmatpush2.msra.mxu0 0.0
        %1242 = vmatprep.subr.mxu0 0.0
        %1243 = vmatpush2.msra.mxu0 0.0
        %1244 = vmatprep.subr.mxu0 0.0
        %1245 = vmatpush2.msra.mxu0 0.0
        %1246 = vmatprep.subr.mxu0 0.0
        %1247 = vmatpush2.msra.mxu0 0.0
        %1248 = vmatprep.subr.mxu0 0.0
        %1249 = vmatpush2.msra.mxu0 0.0
        %1250 = vmatprep.subr.mxu0 0.0
        %1251 = vmatpush2.msra.mxu0 0.0
        %1252 = vmatprep.subr.mxu0 0.0
        %1253 = vmatpush2.msra.mxu0 0.0
        %1254 = vmatprep.subr.mxu0 0.0
        %1255 = vmatpush2.msra.mxu0 0.0
        %1256 = vmatprep.subr.mxu0 0.0
        %1257 = vmatpush2.msra.mxu0 0.0
        %1258 = vmatprep.subr.mxu0 0.0
        %1259 = vmatpush2.msra.mxu0 0.0
        %1260 = vmatprep.subr.mxu0 0.0
        %1261 = vmatpush2.msra.mxu0 0.0
        %1262 = vmatprep.subr.mxu0 0.0
        %1263 = vmatpush2.msra.mxu0 0.0
        %1264 = vmatprep.subr.mxu0 0.0
        %1265 = vmatpush2.msra.mxu0 0.0
        %1266 = vmatprep.subr.mxu0 0.0
        %1267 = vmatpush2.msra.mxu0 0.0
        %1268 = vmatprep.subr.mxu0 0.0
        %1269 = vmatpush2.msra.mxu0 0.0
        %1270 = vmatprep.subr.mxu0 0.0
        %1271 = vmatpush2.msra.mxu0 0.0
        %1272 = vmatprep.mubr.f32.mxu0 0.0
        %v1273 = vand.u32 %v463, 4294901760
        %v1274 = vsub.f32 %v463, %v1273
        %v1275 = vand.u32 %v1274, 4294901760
        %1276 = vmatmul.mubr.f32.gmra.mxu0 %v1275
        %v1277 = vpop.f32.mrf.mxu0
        %v1278 = vadd.f32 %v1201, %v1277
        %v1279 = vpop.f32.mrf.mxu0
        %1280 = vdwg.mxu0
        %1281 = vmatprep.subr.mxu0 0.0
        %1282 = vmatpush1.msra.mxu0 0.0
        %1283 = vmatprep.subr.mxu0 0.0
        %1284 = vmatpush1.msra.mxu0 0.0
        %1285 = vmatprep.subr.mxu0 0.0
        %1286 = vmatpush1.msra.mxu0 0.0
        %1287 = vmatprep.subr.mxu0 0.0
        %1288 = vmatpush1.msra.mxu0 0.0
        %1289 = vmatprep.subr.mxu0 0.0
        %1290 = vmatpush1.msra.mxu0 0.0
        %1291 = vmatprep.subr.mxu0 0.0
        %1292 = vmatpush1.msra.mxu0 0.0
        %1293 = vmatprep.subr.mxu0 0.0
        %1294 = vmatpush1.msra.mxu0 0.0
        %1295 = vmatprep.subr.mxu0 0.0
        %1296 = vmatpush1.msra.mxu0 0.0
        %1297 = vmatprep.subr.mxu0 0.0
        %1298 = vmatpush1.msra.mxu0 0.0
        %1299 = vmatprep.subr.mxu0 0.0
        %1300 = vmatpush1.msra.mxu0 0.0
        %1301 = vmatprep.subr.mxu0 0.0
        %1302 = vmatpush1.msra.mxu0 0.0
        %1303 = vmatprep.subr.mxu0 0.0
        %1304 = vmatpush1.msra.mxu0 0.0
        %1305 = vmatprep.subr.mxu0 0.0
        %v1306 = vand.u32 %v953, 4294901760
        %v1307 = vsub.f32 %v953, %v1306
        %v1308 = vand.u32 %v1307, 4294901760
        %1309 = vmatpush1.msra.mxu0 %v1308
        %1310 = vmatprep.subr.mxu0 0.0
        %v1311 = vand.u32 %v952, 4294901760
        %v1312 = vsub.f32 %v952, %v1311
        %v1313 = vand.u32 %v1312, 4294901760
        %1314 = vmatpush1.msra.mxu0 %v1313
        %1315 = vmatprep.subr.mxu0 0.0
        %v1316 = vand.u32 %v951, 4294901760
        %v1317 = vsub.f32 %v951, %v1316
        %v1318 = vand.u32 %v1317, 4294901760
        %1319 = vmatpush1.msra.mxu0 %v1318
        %1320 = vmatprep.subr.mxu0 0.0
        %v1321 = vand.u32 %v950, 4294901760
        %v1322 = vsub.f32 %v950, %v1321
        %v1323 = vand.u32 %v1322, 4294901760
        %1324 = vmatpush1.msra.mxu0 %v1323
        %1325 = vmatprep.subr.mxu0 0.0
        %1326 = vmatpush2.msra.mxu0 0.0
        %1327 = vmatprep.subr.mxu0 0.0
        %1328 = vmatpush2.msra.mxu0 0.0
        %1329 = vmatprep.subr.mxu0 0.0
        %1330 = vmatpush2.msra.mxu0 0.0
        %1331 = vmatprep.subr.mxu0 0.0
        %1332 = vmatpush2.msra.mxu0 0.0
        %1333 = vmatprep.subr.mxu0 0.0
        %1334 = vmatpush2.msra.mxu0 0.0
        %1335 = vmatprep.subr.mxu0 0.0
        %1336 = vmatpush2.msra.mxu0 0.0
        %1337 = vmatprep.subr.mxu0 0.0
        %1338 = vmatpush2.msra.mxu0 0.0
        %1339 = vmatprep.subr.mxu0 0.0
        %1340 = vmatpush2.msra.mxu0 0.0
        %1341 = vmatprep.subr.mxu0 0.0
        %1342 = vmatpush2.msra.mxu0 0.0
        %1343 = vmatprep.subr.mxu0 0.0
        %1344 = vmatpush2.msra.mxu0 0.0
        %1345 = vmatprep.subr.mxu0 0.0
        %1346 = vmatpush2.msra.mxu0 0.0
        %1347 = vmatprep.subr.mxu0 0.0
        %1348 = vmatpush2.msra.mxu0 0.0
        %1349 = vmatprep.subr.mxu0 0.0
        %1350 = vmatpush2.msra.mxu0 0.0
        %1351 = vmatprep.subr.mxu0 0.0
        %1352 = vmatpush2.msra.mxu0 0.0
        %1353 = vmatprep.subr.mxu0 0.0
        %1354 = vmatpush2.msra.mxu0 0.0
        %1355 = vmatprep.subr.mxu0 0.0
        %1356 = vmatpush2.msra.mxu0 0.0
        %1357 = vmatprep.mubr.f32.mxu0 0.0
        %v1358 = vand.u32 %v463, 4294901760
        %1359 = vmatmul.mubr.f32.gmra.mxu0 %v1358
        %v1360 = vpop.f32.mrf.mxu0
        %v1361 = vadd.f32 %v1278, %v1360
        %v1362 = vpop.f32.mrf.mxu0
        %1363 = vdwg.mxu0
        %1364 = vmatprep.subr.mxu0 0.0
        %1365 = vmatpush1.msra.mxu0 0.0
        %1366 = vmatprep.subr.mxu0 0.0
        %1367 = vmatpush1.msra.mxu0 0.0
        %1368 = vmatprep.subr.mxu0 0.0
        %1369 = vmatpush1.msra.mxu0 0.0
        %1370 = vmatprep.subr.mxu0 0.0
        %1371 = vmatpush1.msra.mxu0 0.0
        %1372 = vmatprep.subr.mxu0 0.0
        %1373 = vmatpush1.msra.mxu0 0.0
        %1374 = vmatprep.subr.mxu0 0.0
        %1375 = vmatpush1.msra.mxu0 0.0
        %1376 = vmatprep.subr.mxu0 0.0
        %1377 = vmatpush1.msra.mxu0 0.0
        %1378 = vmatprep.subr.mxu0 0.0
        %1379 = vmatpush1.msra.mxu0 0.0
        %1380 = vmatprep.subr.mxu0 0.0
        %1381 = vmatpush1.msra.mxu0 0.0
        %1382 = vmatprep.subr.mxu0 0.0
        %1383 = vmatpush1.msra.mxu0 0.0
        %1384 = vmatprep.subr.mxu0 0.0
        %1385 = vmatpush1.msra.mxu0 0.0
        %1386 = vmatprep.subr.mxu0 0.0
        %1387 = vmatpush1.msra.mxu0 0.0
        %1388 = vmatprep.subr.mxu0 0.0
        %v1389 = vand.u32 %v953, 4294901760
        %1390 = vmatpush1.msra.mxu0 %v1389
        %1391 = vmatprep.subr.mxu0 0.0
        %v1392 = vand.u32 %v952, 4294901760
        %1393 = vmatpush1.msra.mxu0 %v1392
        %1394 = vmatprep.subr.mxu0 0.0
        %v1395 = vand.u32 %v951, 4294901760
        %1396 = vmatpush1.msra.mxu0 %v1395
        %1397 = vmatprep.subr.mxu0 0.0
        %v1398 = vand.u32 %v950, 4294901760
        %1399 = vmatpush1.msra.mxu0 %v1398
        %1400 = vmatprep.subr.mxu0 0.0
        %1401 = vmatpush2.msra.mxu0 0.0
        %1402 = vmatprep.subr.mxu0 0.0
        %1403 = vmatpush2.msra.mxu0 0.0
        %1404 = vmatprep.subr.mxu0 0.0
        %1405 = vmatpush2.msra.mxu0 0.0
        %1406 = vmatprep.subr.mxu0 0.0
        %1407 = vmatpush2.msra.mxu0 0.0
        %1408 = vmatprep.subr.mxu0 0.0
        %1409 = vmatpush2.msra.mxu0 0.0
        %1410 = vmatprep.subr.mxu0 0.0
        %1411 = vmatpush2.msra.mxu0 0.0
        %1412 = vmatprep.subr.mxu0 0.0
        %1413 = vmatpush2.msra.mxu0 0.0
        %1414 = vmatprep.subr.mxu0 0.0
        %1415 = vmatpush2.msra.mxu0 0.0
        %1416 = vmatprep.subr.mxu0 0.0
        %1417 = vmatpush2.msra.mxu0 0.0
        %1418 = vmatprep.subr.mxu0 0.0
        %1419 = vmatpush2.msra.mxu0 0.0
        %1420 = vmatprep.subr.mxu0 0.0
        %1421 = vmatpush2.msra.mxu0 0.0
        %1422 = vmatprep.subr.mxu0 0.0
        %1423 = vmatpush2.msra.mxu0 0.0
        %1424 = vmatprep.subr.mxu0 0.0
        %1425 = vmatpush2.msra.mxu0 0.0
        %1426 = vmatprep.subr.mxu0 0.0
        %1427 = vmatpush2.msra.mxu0 0.0
        %1428 = vmatprep.subr.mxu0 0.0
        %1429 = vmatpush2.msra.mxu0 0.0
        %1430 = vmatprep.subr.mxu0 0.0
        %1431 = vmatpush2.msra.mxu0 0.0
        %1432 = vmatprep.mubr.f32.mxu0 0.0
        %v1433 = vand.u32 %v463, 4294901760
        %1434 = vmatmul.mubr.f32.gmra.mxu0 %v1433
        %v1435 = vpop.f32.mrf.mxu0
        %v1436 = vadd.f32 %v1361, %v1435
        %v1437 = vpop.f32.mrf.mxu0
        %1438 = vdwg.mxu0
        %v1439 = vld [vmem:[%s436] sm:$0xff]
        %v1440 = vld [vmem:[%s436 + $0x8] sm:$0xff]
        %v1441 = vld [vmem:[%s436 + $0x10] sm:$0xff]
        %v1442 = vld [vmem:[%s436 + $0x18] sm:$0xff]
        %1443 = vmatprep.subr.mxu0 0.0
        %1444 = vmatpush1.msra.mxu0 0.0
        %1445 = vmatprep.subr.mxu0 0.0
        %1446 = vmatpush1.msra.mxu0 0.0
        %1447 = vmatprep.subr.mxu0 0.0
        %1448 = vmatpush1.msra.mxu0 0.0
        %1449 = vmatprep.subr.mxu0 0.0
        %1450 = vmatpush1.msra.mxu0 0.0
        %1451 = vmatprep.subr.mxu0 0.0
        %1452 = vmatpush1.msra.mxu0 0.0
        %1453 = vmatprep.subr.mxu0 0.0
        %1454 = vmatpush1.msra.mxu0 0.0
        %1455 = vmatprep.subr.mxu0 0.0
        %1456 = vmatpush1.msra.mxu0 0.0
        %1457 = vmatprep.subr.mxu0 0.0
        %1458 = vmatpush1.msra.mxu0 0.0
        %1459 = vmatprep.subr.mxu0 0.0
        %1460 = vmatpush1.msra.mxu0 0.0
        %1461 = vmatprep.subr.mxu0 0.0
        %1462 = vmatpush1.msra.mxu0 0.0
        %1463 = vmatprep.subr.mxu0 0.0
        %1464 = vmatpush1.msra.mxu0 0.0
        %1465 = vmatprep.subr.mxu0 0.0
        %1466 = vmatpush1.msra.mxu0 0.0
        %1467 = vmatprep.subr.mxu0 0.0
        %v1468 = vand.u32 %v1442, 4294901760
        %1469 = vmatpush1.msra.mxu0 %v1468
        %1470 = vmatprep.subr.mxu0 0.0
        %v1471 = vand.u32 %v1441, 4294901760
        %1472 = vmatpush1.msra.mxu0 %v1471
        %1473 = vmatprep.subr.mxu0 0.0
        %v1474 = vand.u32 %v1440, 4294901760
        %1475 = vmatpush1.msra.mxu0 %v1474
        %1476 = vmatprep.subr.mxu0 0.0
        %v1477 = vand.u32 %v1439, 4294901760
        %1478 = vmatpush1.msra.mxu0 %v1477
        %1479 = vmatprep.subr.mxu0 0.0
        %1480 = vmatpush2.msra.mxu0 0.0
        %1481 = vmatprep.subr.mxu0 0.0
        %1482 = vmatpush2.msra.mxu0 0.0
        %1483 = vmatprep.subr.mxu0 0.0
        %1484 = vmatpush2.msra.mxu0 0.0
        %1485 = vmatprep.subr.mxu0 0.0
        %1486 = vmatpush2.msra.mxu0 0.0
        %1487 = vmatprep.subr.mxu0 0.0
        %1488 = vmatpush2.msra.mxu0 0.0
        %1489 = vmatprep.subr.mxu0 0.0
        %1490 = vmatpush2.msra.mxu0 0.0
        %1491 = vmatprep.subr.mxu0 0.0
        %1492 = vmatpush2.msra.mxu0 0.0
        %1493 = vmatprep.subr.mxu0 0.0
        %1494 = vmatpush2.msra.mxu0 0.0
        %1495 = vmatprep.subr.mxu0 0.0
        %1496 = vmatpush2.msra.mxu0 0.0
        %1497 = vmatprep.subr.mxu0 0.0
        %1498 = vmatpush2.msra.mxu0 0.0
        %1499 = vmatprep.subr.mxu0 0.0
        %1500 = vmatpush2.msra.mxu0 0.0
        %1501 = vmatprep.subr.mxu0 0.0
        %1502 = vmatpush2.msra.mxu0 0.0
        %1503 = vmatprep.subr.mxu0 0.0
        %1504 = vmatpush2.msra.mxu0 0.0
        %1505 = vmatprep.subr.mxu0 0.0
        %1506 = vmatpush2.msra.mxu0 0.0
        %1507 = vmatprep.subr.mxu0 0.0
        %1508 = vmatpush2.msra.mxu0 0.0
        %1509 = vmatprep.subr.mxu0 0.0
        %1510 = vmatpush2.msra.mxu0 0.0
        %1511 = vmatprep.mubr.f32.mxu0 0.0
        %v1512 = vand.u32 %v463, 4294901760
        %v1513 = vsub.f32 %v463, %v1512
        %v1514 = vand.u32 %v1513, 4294901760
        %v1515 = vsub.f32 %v1513, %v1514
        %v1516 = vand.u32 %v1515, 4294901760
        %1517 = vmatmul.mubr.f32.gmra.mxu0 %v1516
        %v1518 = vpop.f32.mrf.mxu0
        %v1519 = vadd.f32 0.0, %v1518
        %v1520 = vpop.f32.mrf.mxu0
        %1521 = vdwg.mxu0
        %1522 = vmatprep.subr.mxu0 0.0
        %1523 = vmatpush1.msra.mxu0 0.0
        %1524 = vmatprep.subr.mxu0 0.0
        %1525 = vmatpush1.msra.mxu0 0.0
        %1526 = vmatprep.subr.mxu0 0.0
        %1527 = vmatpush1.msra.mxu0 0.0
        %1528 = vmatprep.subr.mxu0 0.0
        %1529 = vmatpush1.msra.mxu0 0.0
        %1530 = vmatprep.subr.mxu0 0.0
        %1531 = vmatpush1.msra.mxu0 0.0
        %1532 = vmatprep.subr.mxu0 0.0
        %1533 = vmatpush1.msra.mxu0 0.0
        %1534 = vmatprep.subr.mxu0 0.0
        %1535 = vmatpush1.msra.mxu0 0.0
        %1536 = vmatprep.subr.mxu0 0.0
        %1537 = vmatpush1.msra.mxu0 0.0
        %1538 = vmatprep.subr.mxu0 0.0
        %1539 = vmatpush1.msra.mxu0 0.0
        %1540 = vmatprep.subr.mxu0 0.0
        %1541 = vmatpush1.msra.mxu0 0.0
        %1542 = vmatprep.subr.mxu0 0.0
        %1543 = vmatpush1.msra.mxu0 0.0
        %1544 = vmatprep.subr.mxu0 0.0
        %1545 = vmatpush1.msra.mxu0 0.0
        %1546 = vmatprep.subr.mxu0 0.0
        %v1547 = vand.u32 %v1442, 4294901760
        %v1548 = vsub.f32 %v1442, %v1547
        %v1549 = vand.u32 %v1548, 4294901760
        %v1550 = vsub.f32 %v1548, %v1549
        %v1551 = vand.u32 %v1550, 4294901760
        %1552 = vmatpush1.msra.mxu0 %v1551
        %1553 = vmatprep.subr.mxu0 0.0
        %v1554 = vand.u32 %v1441, 4294901760
        %v1555 = vsub.f32 %v1441, %v1554
        %v1556 = vand.u32 %v1555, 4294901760
        %v1557 = vsub.f32 %v1555, %v1556
        %v1558 = vand.u32 %v1557, 4294901760
        %1559 = vmatpush1.msra.mxu0 %v1558
        %1560 = vmatprep.subr.mxu0 0.0
        %v1561 = vand.u32 %v1440, 4294901760
        %v1562 = vsub.f32 %v1440, %v1561
        %v1563 = vand.u32 %v1562, 4294901760
        %v1564 = vsub.f32 %v1562, %v1563
        %v1565 = vand.u32 %v1564, 4294901760
        %1566 = vmatpush1.msra.mxu0 %v1565
        %1567 = vmatprep.subr.mxu0 0.0
        %v1568 = vand.u32 %v1439, 4294901760
        %v1569 = vsub.f32 %v1439, %v1568
        %v1570 = vand.u32 %v1569, 4294901760
        %v1571 = vsub.f32 %v1569, %v1570
        %v1572 = vand.u32 %v1571, 4294901760
        %1573 = vmatpush1.msra.mxu0 %v1572
        %1574 = vmatprep.subr.mxu0 0.0
        %1575 = vmatpush2.msra.mxu0 0.0
        %1576 = vmatprep.subr.mxu0 0.0
        %1577 = vmatpush2.msra.mxu0 0.0
        %1578 = vmatprep.subr.mxu0 0.0
        %1579 = vmatpush2.msra.mxu0 0.0
        %1580 = vmatprep.subr.mxu0 0.0
        %1581 = vmatpush2.msra.mxu0 0.0
        %1582 = vmatprep.subr.mxu0 0.0
        %1583 = vmatpush2.msra.mxu0 0.0
        %1584 = vmatprep.subr.mxu0 0.0
        %1585 = vmatpush2.msra.mxu0 0.0
        %1586 = vmatprep.subr.mxu0 0.0
        %1587 = vmatpush2.msra.mxu0 0.0
        %1588 = vmatprep.subr.mxu0 0.0
        %1589 = vmatpush2.msra.mxu0 0.0
        %1590 = vmatprep.subr.mxu0 0.0
        %1591 = vmatpush2.msra.mxu0 0.0
        %1592 = vmatprep.subr.mxu0 0.0
        %1593 = vmatpush2.msra.mxu0 0.0
        %1594 = vmatprep.subr.mxu0 0.0
        %1595 = vmatpush2.msra.mxu0 0.0
        %1596 = vmatprep.subr.mxu0 0.0
        %1597 = vmatpush2.msra.mxu0 0.0
        %1598 = vmatprep.subr.mxu0 0.0
        %1599 = vmatpush2.msra.mxu0 0.0
        %1600 = vmatprep.subr.mxu0 0.0
        %1601 = vmatpush2.msra.mxu0 0.0
        %1602 = vmatprep.subr.mxu0 0.0
        %1603 = vmatpush2.msra.mxu0 0.0
        %1604 = vmatprep.subr.mxu0 0.0
        %1605 = vmatpush2.msra.mxu0 0.0
        %1606 = vmatprep.mubr.f32.mxu0 0.0
        %v1607 = vand.u32 %v463, 4294901760
        %1608 = vmatmul.mubr.f32.gmra.mxu0 %v1607
        %v1609 = vpop.f32.mrf.mxu0
        %v1610 = vadd.f32 %v1519, %v1609
        %v1611 = vpop.f32.mrf.mxu0
        %1612 = vdwg.mxu0
        %1613 = vmatprep.subr.mxu0 0.0
        %1614 = vmatpush1.msra.mxu0 0.0
        %1615 = vmatprep.subr.mxu0 0.0
        %1616 = vmatpush1.msra.mxu0 0.0
        %1617 = vmatprep.subr.mxu0 0.0
        %1618 = vmatpush1.msra.mxu0 0.0
        %1619 = vmatprep.subr.mxu0 0.0
        %1620 = vmatpush1.msra.mxu0 0.0
        %1621 = vmatprep.subr.mxu0 0.0
        %1622 = vmatpush1.msra.mxu0 0.0
        %1623 = vmatprep.subr.mxu0 0.0
        %1624 = vmatpush1.msra.mxu0 0.0
        %1625 = vmatprep.subr.mxu0 0.0
        %1626 = vmatpush1.msra.mxu0 0.0
        %1627 = vmatprep.subr.mxu0 0.0
        %1628 = vmatpush1.msra.mxu0 0.0
        %1629 = vmatprep.subr.mxu0 0.0
        %1630 = vmatpush1.msra.mxu0 0.0
        %1631 = vmatprep.subr.mxu0 0.0
        %1632 = vmatpush1.msra.mxu0 0.0
        %1633 = vmatprep.subr.mxu0 0.0
        %1634 = vmatpush1.msra.mxu0 0.0
        %1635 = vmatprep.subr.mxu0 0.0
        %1636 = vmatpush1.msra.mxu0 0.0
        %1637 = vmatprep.subr.mxu0 0.0
        %v1638 = vand.u32 %v1442, 4294901760
        %v1639 = vsub.f32 %v1442, %v1638
        %1640 = vmatpush1.msra.mxu0 %v1639
        %1641 = vmatprep.subr.mxu0 0.0
        %v1642 = vand.u32 %v1441, 4294901760
        %v1643 = vsub.f32 %v1441, %v1642
        %1644 = vmatpush1.msra.mxu0 %v1643
        %1645 = vmatprep.subr.mxu0 0.0
        %v1646 = vand.u32 %v1440, 4294901760
        %v1647 = vsub.f32 %v1440, %v1646
        %1648 = vmatpush1.msra.mxu0 %v1647
        %1649 = vmatprep.subr.mxu0 0.0
        %v1650 = vand.u32 %v1439, 4294901760
        %v1651 = vsub.f32 %v1439, %v1650
        %1652 = vmatpush1.msra.mxu0 %v1651
        %1653 = vmatprep.subr.mxu0 0.0
        %1654 = vmatpush2.msra.mxu0 0.0
        %1655 = vmatprep.subr.mxu0 0.0
        %1656 = vmatpush2.msra.mxu0 0.0
        %1657 = vmatprep.subr.mxu0 0.0
        %1658 = vmatpush2.msra.mxu0 0.0
        %1659 = vmatprep.subr.mxu0 0.0
        %1660 = vmatpush2.msra.mxu0 0.0
        %1661 = vmatprep.subr.mxu0 0.0
        %1662 = vmatpush2.msra.mxu0 0.0
        %1663 = vmatprep.subr.mxu0 0.0
        %1664 = vmatpush2.msra.mxu0 0.0
        %1665 = vmatprep.subr.mxu0 0.0
        %1666 = vmatpush2.msra.mxu0 0.0
        %1667 = vmatprep.subr.mxu0 0.0
        %1668 = vmatpush2.msra.mxu0 0.0
        %1669 = vmatprep.subr.mxu0 0.0
        %1670 = vmatpush2.msra.mxu0 0.0
        %1671 = vmatprep.subr.mxu0 0.0
        %1672 = vmatpush2.msra.mxu0 0.0
        %1673 = vmatprep.subr.mxu0 0.0
        %1674 = vmatpush2.msra.mxu0 0.0
        %1675 = vmatprep.subr.mxu0 0.0
        %1676 = vmatpush2.msra.mxu0 0.0
        %1677 = vmatprep.subr.mxu0 0.0
        %1678 = vmatpush2.msra.mxu0 0.0
        %1679 = vmatprep.subr.mxu0 0.0
        %1680 = vmatpush2.msra.mxu0 0.0
        %1681 = vmatprep.subr.mxu0 0.0
        %1682 = vmatpush2.msra.mxu0 0.0
        %1683 = vmatprep.subr.mxu0 0.0
        %1684 = vmatpush2.msra.mxu0 0.0
        %1685 = vmatprep.mubr.f32.mxu0 0.0
        %v1686 = vand.u32 %v463, 4294901760
        %v1687 = vsub.f32 %v463, %v1686
        %1688 = vmatmul.mubr.f32.gmra.mxu0 %v1687
        %v1689 = vpop.f32.mrf.mxu0
        %v1690 = vadd.f32 %v1610, %v1689
        %v1691 = vpop.f32.mrf.mxu0
        %1692 = vdwg.mxu0
        %1693 = vmatprep.subr.mxu0 0.0
        %1694 = vmatpush1.msra.mxu0 0.0
        %1695 = vmatprep.subr.mxu0 0.0
        %1696 = vmatpush1.msra.mxu0 0.0
        %1697 = vmatprep.subr.mxu0 0.0
        %1698 = vmatpush1.msra.mxu0 0.0
        %1699 = vmatprep.subr.mxu0 0.0
        %1700 = vmatpush1.msra.mxu0 0.0
        %1701 = vmatprep.subr.mxu0 0.0
        %1702 = vmatpush1.msra.mxu0 0.0
        %1703 = vmatprep.subr.mxu0 0.0
        %1704 = vmatpush1.msra.mxu0 0.0
        %1705 = vmatprep.subr.mxu0 0.0
        %1706 = vmatpush1.msra.mxu0 0.0
        %1707 = vmatprep.subr.mxu0 0.0
        %1708 = vmatpush1.msra.mxu0 0.0
        %1709 = vmatprep.subr.mxu0 0.0
        %1710 = vmatpush1.msra.mxu0 0.0
        %1711 = vmatprep.subr.mxu0 0.0
        %1712 = vmatpush1.msra.mxu0 0.0
        %1713 = vmatprep.subr.mxu0 0.0
        %1714 = vmatpush1.msra.mxu0 0.0
        %1715 = vmatprep.subr.mxu0 0.0
        %1716 = vmatpush1.msra.mxu0 0.0
        %1717 = vmatprep.subr.mxu0 0.0
        %v1718 = vand.u32 %v1442, 4294901760
        %1719 = vmatpush1.msra.mxu0 %v1718
        %1720 = vmatprep.subr.mxu0 0.0
        %v1721 = vand.u32 %v1441, 4294901760
        %1722 = vmatpush1.msra.mxu0 %v1721
        %1723 = vmatprep.subr.mxu0 0.0
        %v1724 = vand.u32 %v1440, 4294901760
        %1725 = vmatpush1.msra.mxu0 %v1724
        %1726 = vmatprep.subr.mxu0 0.0
        %v1727 = vand.u32 %v1439, 4294901760
        %1728 = vmatpush1.msra.mxu0 %v1727
        %1729 = vmatprep.subr.mxu0 0.0
        %1730 = vmatpush2.msra.mxu0 0.0
        %1731 = vmatprep.subr.mxu0 0.0
        %1732 = vmatpush2.msra.mxu0 0.0
        %1733 = vmatprep.subr.mxu0 0.0
        %1734 = vmatpush2.msra.mxu0 0.0
        %1735 = vmatprep.subr.mxu0 0.0
        %1736 = vmatpush2.msra.mxu0 0.0
        %1737 = vmatprep.subr.mxu0 0.0
        %1738 = vmatpush2.msra.mxu0 0.0
        %1739 = vmatprep.subr.mxu0 0.0
        %1740 = vmatpush2.msra.mxu0 0.0
        %1741 = vmatprep.subr.mxu0 0.0
        %1742 = vmatpush2.msra.mxu0 0.0
        %1743 = vmatprep.subr.mxu0 0.0
        %1744 = vmatpush2.msra.mxu0 0.0
        %1745 = vmatprep.subr.mxu0 0.0
        %1746 = vmatpush2.msra.mxu0 0.0
        %1747 = vmatprep.subr.mxu0 0.0
        %1748 = vmatpush2.msra.mxu0 0.0
        %1749 = vmatprep.subr.mxu0 0.0
        %1750 = vmatpush2.msra.mxu0 0.0
        %1751 = vmatprep.subr.mxu0 0.0
        %1752 = vmatpush2.msra.mxu0 0.0
        %1753 = vmatprep.subr.mxu0 0.0
        %1754 = vmatpush2.msra.mxu0 0.0
        %1755 = vmatprep.subr.mxu0 0.0
        %1756 = vmatpush2.msra.mxu0 0.0
        %1757 = vmatprep.subr.mxu0 0.0
        %1758 = vmatpush2.msra.mxu0 0.0
        %1759 = vmatprep.subr.mxu0 0.0
        %1760 = vmatpush2.msra.mxu0 0.0
        %1761 = vmatprep.mubr.f32.mxu0 0.0
        %v1762 = vand.u32 %v463, 4294901760
        %v1763 = vsub.f32 %v463, %v1762
        %v1764 = vand.u32 %v1763, 4294901760
        %1765 = vmatmul.mubr.f32.gmra.mxu0 %v1764
        %v1766 = vpop.f32.mrf.mxu0
        %v1767 = vadd.f32 %v1690, %v1766
        %v1768 = vpop.f32.mrf.mxu0
        %1769 = vdwg.mxu0
        %1770 = vmatprep.subr.mxu0 0.0
        %1771 = vmatpush1.msra.mxu0 0.0
        %1772 = vmatprep.subr.mxu0 0.0
        %1773 = vmatpush1.msra.mxu0 0.0
        %1774 = vmatprep.subr.mxu0 0.0
        %1775 = vmatpush1.msra.mxu0 0.0
        %1776 = vmatprep.subr.mxu0 0.0
        %1777 = vmatpush1.msra.mxu0 0.0
        %1778 = vmatprep.subr.mxu0 0.0
        %1779 = vmatpush1.msra.mxu0 0.0
        %1780 = vmatprep.subr.mxu0 0.0
        %1781 = vmatpush1.msra.mxu0 0.0
        %1782 = vmatprep.subr.mxu0 0.0
        %1783 = vmatpush1.msra.mxu0 0.0
        %1784 = vmatprep.subr.mxu0 0.0
        %1785 = vmatpush1.msra.mxu0 0.0
        %1786 = vmatprep.subr.mxu0 0.0
        %1787 = vmatpush1.msra.mxu0 0.0
        %1788 = vmatprep.subr.mxu0 0.0
        %1789 = vmatpush1.msra.mxu0 0.0
        %1790 = vmatprep.subr.mxu0 0.0
        %1791 = vmatpush1.msra.mxu0 0.0
        %1792 = vmatprep.subr.mxu0 0.0
        %1793 = vmatpush1.msra.mxu0 0.0
        %1794 = vmatprep.subr.mxu0 0.0
        %v1795 = vand.u32 %v1442, 4294901760
        %v1796 = vsub.f32 %v1442, %v1795
        %v1797 = vand.u32 %v1796, 4294901760
        %1798 = vmatpush1.msra.mxu0 %v1797
        %1799 = vmatprep.subr.mxu0 0.0
        %v1800 = vand.u32 %v1441, 4294901760
        %v1801 = vsub.f32 %v1441, %v1800
        %v1802 = vand.u32 %v1801, 4294901760
        %1803 = vmatpush1.msra.mxu0 %v1802
        %1804 = vmatprep.subr.mxu0 0.0
        %v1805 = vand.u32 %v1440, 4294901760
        %v1806 = vsub.f32 %v1440, %v1805
        %v1807 = vand.u32 %v1806, 4294901760
        %1808 = vmatpush1.msra.mxu0 %v1807
        %1809 = vmatprep.subr.mxu0 0.0
        %v1810 = vand.u32 %v1439, 4294901760
        %v1811 = vsub.f32 %v1439, %v1810
        %v1812 = vand.u32 %v1811, 4294901760
        %1813 = vmatpush1.msra.mxu0 %v1812
        %1814 = vmatprep.subr.mxu0 0.0
        %1815 = vmatpush2.msra.mxu0 0.0
        %1816 = vmatprep.subr.mxu0 0.0
        %1817 = vmatpush2.msra.mxu0 0.0
        %1818 = vmatprep.subr.mxu0 0.0
        %1819 = vmatpush2.msra.mxu0 0.0
        %1820 = vmatprep.subr.mxu0 0.0
        %1821 = vmatpush2.msra.mxu0 0.0
        %1822 = vmatprep.subr.mxu0 0.0
        %1823 = vmatpush2.msra.mxu0 0.0
        %1824 = vmatprep.subr.mxu0 0.0
        %1825 = vmatpush2.msra.mxu0 0.0
        %1826 = vmatprep.subr.mxu0 0.0
        %1827 = vmatpush2.msra.mxu0 0.0
        %1828 = vmatprep.subr.mxu0 0.0
        %1829 = vmatpush2.msra.mxu0 0.0
        %1830 = vmatprep.subr.mxu0 0.0
        %1831 = vmatpush2.msra.mxu0 0.0
        %1832 = vmatprep.subr.mxu0 0.0
        %1833 = vmatpush2.msra.mxu0 0.0
        %1834 = vmatprep.subr.mxu0 0.0
        %1835 = vmatpush2.msra.mxu0 0.0
        %1836 = vmatprep.subr.mxu0 0.0
        %1837 = vmatpush2.msra.mxu0 0.0
        %1838 = vmatprep.subr.mxu0 0.0
        %1839 = vmatpush2.msra.mxu0 0.0
        %1840 = vmatprep.subr.mxu0 0.0
        %1841 = vmatpush2.msra.mxu0 0.0
        %1842 = vmatprep.subr.mxu0 0.0
        %1843 = vmatpush2.msra.mxu0 0.0
        %1844 = vmatprep.subr.mxu0 0.0
        %1845 = vmatpush2.msra.mxu0 0.0
        %1846 = vmatprep.mubr.f32.mxu0 0.0
        %v1847 = vand.u32 %v463, 4294901760
        %1848 = vmatmul.mubr.f32.gmra.mxu0 %v1847
        %v1849 = vpop.f32.mrf.mxu0
        %v1850 = vadd.f32 %v1767, %v1849
        %v1851 = vpop.f32.mrf.mxu0
        %1852 = vdwg.mxu0
        %1853 = vmatprep.subr.mxu0 0.0
        %1854 = vmatpush1.msra.mxu0 0.0
        %1855 = vmatprep.subr.mxu0 0.0
        %1856 = vmatpush1.msra.mxu0 0.0
        %1857 = vmatprep.subr.mxu0 0.0
        %1858 = vmatpush1.msra.mxu0 0.0
        %1859 = vmatprep.subr.mxu0 0.0
        %1860 = vmatpush1.msra.mxu0 0.0
        %1861 = vmatprep.subr.mxu0 0.0
        %1862 = vmatpush1.msra.mxu0 0.0
        %1863 = vmatprep.subr.mxu0 0.0
        %1864 = vmatpush1.msra.mxu0 0.0
        %1865 = vmatprep.subr.mxu0 0.0
        %1866 = vmatpush1.msra.mxu0 0.0
        %1867 = vmatprep.subr.mxu0 0.0
        %1868 = vmatpush1.msra.mxu0 0.0
        %1869 = vmatprep.subr.mxu0 0.0
        %1870 = vmatpush1.msra.mxu0 0.0
        %1871 = vmatprep.subr.mxu0 0.0
        %1872 = vmatpush1.msra.mxu0 0.0
        %1873 = vmatprep.subr.mxu0 0.0
        %1874 = vmatpush1.msra.mxu0 0.0
        %1875 = vmatprep.subr.mxu0 0.0
        %1876 = vmatpush1.msra.mxu0 0.0
        %1877 = vmatprep.subr.mxu0 0.0
        %v1878 = vand.u32 %v1442, 4294901760
        %1879 = vmatpush1.msra.mxu0 %v1878
        %1880 = vmatprep.subr.mxu0 0.0
        %v1881 = vand.u32 %v1441, 4294901760
        %1882 = vmatpush1.msra.mxu0 %v1881
        %1883 = vmatprep.subr.mxu0 0.0
        %v1884 = vand.u32 %v1440, 4294901760
        %1885 = vmatpush1.msra.mxu0 %v1884
        %1886 = vmatprep.subr.mxu0 0.0
        %v1887 = vand.u32 %v1439, 4294901760
        %1888 = vmatpush1.msra.mxu0 %v1887
        %1889 = vmatprep.subr.mxu0 0.0
        %1890 = vmatpush2.msra.mxu0 0.0
        %1891 = vmatprep.subr.mxu0 0.0
        %1892 = vmatpush2.msra.mxu0 0.0
        %1893 = vmatprep.subr.mxu0 0.0
        %1894 = vmatpush2.msra.mxu0 0.0
        %1895 = vmatprep.subr.mxu0 0.0
        %1896 = vmatpush2.msra.mxu0 0.0
        %1897 = vmatprep.subr.mxu0 0.0
        %1898 = vmatpush2.msra.mxu0 0.0
        %1899 = vmatprep.subr.mxu0 0.0
        %1900 = vmatpush2.msra.mxu0 0.0
        %1901 = vmatprep.subr.mxu0 0.0
        %1902 = vmatpush2.msra.mxu0 0.0
        %1903 = vmatprep.subr.mxu0 0.0
        %1904 = vmatpush2.msra.mxu0 0.0
        %1905 = vmatprep.subr.mxu0 0.0
        %1906 = vmatpush2.msra.mxu0 0.0
        %1907 = vmatprep.subr.mxu0 0.0
        %1908 = vmatpush2.msra.mxu0 0.0
        %1909 = vmatprep.subr.mxu0 0.0
        %1910 = vmatpush2.msra.mxu0 0.0
        %1911 = vmatprep.subr.mxu0 0.0
        %1912 = vmatpush2.msra.mxu0 0.0
        %1913 = vmatprep.subr.mxu0 0.0
        %1914 = vmatpush2.msra.mxu0 0.0
        %1915 = vmatprep.subr.mxu0 0.0
        %1916 = vmatpush2.msra.mxu0 0.0
        %1917 = vmatprep.subr.mxu0 0.0
        %1918 = vmatpush2.msra.mxu0 0.0
        %1919 = vmatprep.subr.mxu0 0.0
        %1920 = vmatpush2.msra.mxu0 0.0
        %1921 = vmatprep.mubr.f32.mxu0 0.0
        %v1922 = vand.u32 %v463, 4294901760
        %1923 = vmatmul.mubr.f32.gmra.mxu0 %v1922
        %v1924 = vpop.f32.mrf.mxu0
        %v1925 = vadd.f32 %v1850, %v1924
        %v1926 = vpop.f32.mrf.mxu0
        %1927 = vdwg.mxu0
        %vm1928 = vcmask 130048
        %v1930 = vsel %vm1928, %v947, 0
        %v1933 = vsel %vm1928, %v1436, 0
        %1935 = vmatprep.subr.mxu0 0.0
        %1936 = vmatpush1.xpose.msra.mxu0 0.0
        %1937 = vmatprep.subr.mxu0 0.0
        %1938 = vmatpush1.xpose.msra.mxu0 0.0
        %1939 = vmatprep.subr.mxu0 0.0
        %1940 = vmatpush1.xpose.msra.mxu0 0.0
        %1941 = vmatprep.subr.mxu0 0.0
        %1942 = vmatpush1.xpose.msra.mxu0 0.0
        %1943 = vmatprep.subr.mxu0 0.0
        %1944 = vmatpush1.xpose.msra.mxu0 0.0
        %1945 = vmatprep.subr.mxu0 0.0
        %1946 = vmatpush1.xpose.msra.mxu0 0.0
        %1947 = vmatprep.subr.mxu0 0.0
        %1948 = vmatpush1.xpose.msra.mxu0 0.0
        %1949 = vmatprep.subr.mxu0 0.0
        %1950 = vmatpush1.xpose.msra.mxu0 0.0
        %1951 = vmatprep.subr.mxu0 0.0
        %1952 = vmatpush1.xpose.msra.mxu0 0.0
        %1953 = vmatprep.subr.mxu0 0.0
        %1954 = vmatpush1.xpose.msra.mxu0 0.0
        %1955 = vmatprep.subr.mxu0 0.0
        %1956 = vmatpush1.xpose.msra.mxu0 0.0
        %1957 = vmatprep.subr.mxu0 0.0
        %1958 = vmatpush1.xpose.msra.mxu0 0.0
        %1959 = vmatprep.subr.mxu0 0.0
        %1960 = vmatpush1.xpose.msra.mxu0 0.0
        %1961 = vmatprep.subr.mxu0 0.0
        %1962 = vmatpush1.xpose.msra.mxu0 0.0
        %1963 = vmatprep.subr.mxu0 0.0
        %1964 = vmatpush1.xpose.msra.mxu0 0.0
        %1965 = vmatprep.subr.mxu0 0.0
        %v1966 = vand.u32 %v1933, 4294901760
        %1967 = vmatpush1.xpose.msra.mxu0 %v1966
        %1968 = vmatprep.subr.mxu0 0.0
        %1969 = vmatpush2.xpose.msra.mxu0 0.0
        %1970 = vmatprep.subr.mxu0 0.0
        %1971 = vmatpush2.xpose.msra.mxu0 0.0
        %1972 = vmatprep.subr.mxu0 0.0
        %1973 = vmatpush2.xpose.msra.mxu0 0.0
        %1974 = vmatprep.subr.mxu0 0.0
        %1975 = vmatpush2.xpose.msra.mxu0 0.0
        %1976 = vmatprep.subr.mxu0 0.0
        %1977 = vmatpush2.xpose.msra.mxu0 0.0
        %1978 = vmatprep.subr.mxu0 0.0
        %1979 = vmatpush2.xpose.msra.mxu0 0.0
        %1980 = vmatprep.subr.mxu0 0.0
        %1981 = vmatpush2.xpose.msra.mxu0 0.0
        %1982 = vmatprep.subr.mxu0 0.0
        %1983 = vmatpush2.xpose.msra.mxu0 0.0
        %1984 = vmatprep.subr.mxu0 0.0
        %1985 = vmatpush2.xpose.msra.mxu0 0.0
        %1986 = vmatprep.subr.mxu0 0.0
        %1987 = vmatpush2.xpose.msra.mxu0 0.0
        %1988 = vmatprep.subr.mxu0 0.0
        %1989 = vmatpush2.xpose.msra.mxu0 0.0
        %1990 = vmatprep.subr.mxu0 0.0
        %1991 = vmatpush2.xpose.msra.mxu0 0.0
        %1992 = vmatprep.subr.mxu0 0.0
        %1993 = vmatpush2.xpose.msra.mxu0 0.0
        %1994 = vmatprep.subr.mxu0 0.0
        %1995 = vmatpush2.xpose.msra.mxu0 0.0
        %1996 = vmatprep.subr.mxu0 0.0
        %1997 = vmatpush2.xpose.msra.mxu0 0.0
        %1998 = vmatprep.subr.mxu0 0.0
        %1999 = vmatpush2.xpose.msra.mxu0 0.0
        %2000 = vmatprep.mubr.f32.mxu0 0.0
        %v2001 = vand.u32 %v1930, 4294901760
        %v2002 = vsub.f32 %v1930, %v2001
        %v2003 = vand.u32 %v2002, 4294901760
        %v2004 = vsub.f32 %v2002, %v2003
        %v2005 = vand.u32 %v2004, 4294901760
        %2006 = vmatmul.mubr.f32.gmra.mxu0 %v2005
        %v2007 = vpop.f32.mrf.mxu0
        %v2008 = vadd.f32 0.0, %v2007
        %v2009 = vpop.f32.mrf.mxu0
        %2010 = vdwg.mxu0
        %2011 = vmatprep.subr.mxu0 0.0
        %2012 = vmatpush1.xpose.msra.mxu0 0.0
        %2013 = vmatprep.subr.mxu0 0.0
        %2014 = vmatpush1.xpose.msra.mxu0 0.0
        %2015 = vmatprep.subr.mxu0 0.0
        %2016 = vmatpush1.xpose.msra.mxu0 0.0
        %2017 = vmatprep.subr.mxu0 0.0
        %2018 = vmatpush1.xpose.msra.mxu0 0.0
        %2019 = vmatprep.subr.mxu0 0.0
        %2020 = vmatpush1.xpose.msra.mxu0 0.0
        %2021 = vmatprep.subr.mxu0 0.0
        %2022 = vmatpush1.xpose.msra.mxu0 0.0
        %2023 = vmatprep.subr.mxu0 0.0
        %2024 = vmatpush1.xpose.msra.mxu0 0.0
        %2025 = vmatprep.subr.mxu0 0.0
        %2026 = vmatpush1.xpose.msra.mxu0 0.0
        %2027 = vmatprep.subr.mxu0 0.0
        %2028 = vmatpush1.xpose.msra.mxu0 0.0
        %2029 = vmatprep.subr.mxu0 0.0
        %2030 = vmatpush1.xpose.msra.mxu0 0.0
        %2031 = vmatprep.subr.mxu0 0.0
        %2032 = vmatpush1.xpose.msra.mxu0 0.0
        %2033 = vmatprep.subr.mxu0 0.0
        %2034 = vmatpush1.xpose.msra.mxu0 0.0
        %2035 = vmatprep.subr.mxu0 0.0
        %2036 = vmatpush1.xpose.msra.mxu0 0.0
        %2037 = vmatprep.subr.mxu0 0.0
        %2038 = vmatpush1.xpose.msra.mxu0 0.0
        %2039 = vmatprep.subr.mxu0 0.0
        %2040 = vmatpush1.xpose.msra.mxu0 0.0
        %2041 = vmatprep.subr.mxu0 0.0
        %v2042 = vand.u32 %v1933, 4294901760
        %v2043 = vsub.f32 %v1933, %v2042
        %v2044 = vand.u32 %v2043, 4294901760
        %v2045 = vsub.f32 %v2043, %v2044
        %v2046 = vand.u32 %v2045, 4294901760
        %2047 = vmatpush1.xpose.msra.mxu0 %v2046
        %2048 = vmatprep.subr.mxu0 0.0
        %2049 = vmatpush2.xpose.msra.mxu0 0.0
        %2050 = vmatprep.subr.mxu0 0.0
        %2051 = vmatpush2.xpose.msra.mxu0 0.0
        %2052 = vmatprep.subr.mxu0 0.0
        %2053 = vmatpush2.xpose.msra.mxu0 0.0
        %2054 = vmatprep.subr.mxu0 0.0
        %2055 = vmatpush2.xpose.msra.mxu0 0.0
        %2056 = vmatprep.subr.mxu0 0.0
        %2057 = vmatpush2.xpose.msra.mxu0 0.0
        %2058 = vmatprep.subr.mxu0 0.0
        %2059 = vmatpush2.xpose.msra.mxu0 0.0
        %2060 = vmatprep.subr.mxu0 0.0
        %2061 = vmatpush2.xpose.msra.mxu0 0.0
        %2062 = vmatprep.subr.mxu0 0.0
        %2063 = vmatpush2.xpose.msra.mxu0 0.0
        %2064 = vmatprep.subr.mxu0 0.0
        %2065 = vmatpush2.xpose.msra.mxu0 0.0
        %2066 = vmatprep.subr.mxu0 0.0
        %2067 = vmatpush2.xpose.msra.mxu0 0.0
        %2068 = vmatprep.subr.mxu0 0.0
        %2069 = vmatpush2.xpose.msra.mxu0 0.0
        %2070 = vmatprep.subr.mxu0 0.0
        %2071 = vmatpush2.xpose.msra.mxu0 0.0
        %2072 = vmatprep.subr.mxu0 0.0
        %2073 = vmatpush2.xpose.msra.mxu0 0.0
        %2074 = vmatprep.subr.mxu0 0.0
        %2075 = vmatpush2.xpose.msra.mxu0 0.0
        %2076 = vmatprep.subr.mxu0 0.0
        %2077 = vmatpush2.xpose.msra.mxu0 0.0
        %2078 = vmatprep.subr.mxu0 0.0
        %2079 = vmatpush2.xpose.msra.mxu0 0.0
        %2080 = vmatprep.mubr.f32.mxu0 0.0
        %v2081 = vand.u32 %v1930, 4294901760
        %2082 = vmatmul.mubr.f32.gmra.mxu0 %v2081
        %v2083 = vpop.f32.mrf.mxu0
        %v2084 = vadd.f32 %v2008, %v2083
        %v2085 = vpop.f32.mrf.mxu0
        %2086 = vdwg.mxu0
        %2087 = vmatprep.subr.mxu0 0.0
        %2088 = vmatpush1.xpose.msra.mxu0 0.0
        %2089 = vmatprep.subr.mxu0 0.0
        %2090 = vmatpush1.xpose.msra.mxu0 0.0
        %2091 = vmatprep.subr.mxu0 0.0
        %2092 = vmatpush1.xpose.msra.mxu0 0.0
        %2093 = vmatprep.subr.mxu0 0.0
        %2094 = vmatpush1.xpose.msra.mxu0 0.0
        %2095 = vmatprep.subr.mxu0 0.0
        %2096 = vmatpush1.xpose.msra.mxu0 0.0
        %2097 = vmatprep.subr.mxu0 0.0
        %2098 = vmatpush1.xpose.msra.mxu0 0.0
        %2099 = vmatprep.subr.mxu0 0.0
        %2100 = vmatpush1.xpose.msra.mxu0 0.0
        %2101 = vmatprep.subr.mxu0 0.0
        %2102 = vmatpush1.xpose.msra.mxu0 0.0
        %2103 = vmatprep.subr.mxu0 0.0
        %2104 = vmatpush1.xpose.msra.mxu0 0.0
        %2105 = vmatprep.subr.mxu0 0.0
        %2106 = vmatpush1.xpose.msra.mxu0 0.0
        %2107 = vmatprep.subr.mxu0 0.0
        %2108 = vmatpush1.xpose.msra.mxu0 0.0
        %2109 = vmatprep.subr.mxu0 0.0
        %2110 = vmatpush1.xpose.msra.mxu0 0.0
        %2111 = vmatprep.subr.mxu0 0.0
        %2112 = vmatpush1.xpose.msra.mxu0 0.0
        %2113 = vmatprep.subr.mxu0 0.0
        %2114 = vmatpush1.xpose.msra.mxu0 0.0
        %2115 = vmatprep.subr.mxu0 0.0
        %2116 = vmatpush1.xpose.msra.mxu0 0.0
        %2117 = vmatprep.subr.mxu0 0.0
        %v2118 = vand.u32 %v1933, 4294901760
        %v2119 = vsub.f32 %v1933, %v2118
        %2120 = vmatpush1.xpose.msra.mxu0 %v2119
        %2121 = vmatprep.subr.mxu0 0.0
        %2122 = vmatpush2.xpose.msra.mxu0 0.0
        %2123 = vmatprep.subr.mxu0 0.0
        %2124 = vmatpush2.xpose.msra.mxu0 0.0
        %2125 = vmatprep.subr.mxu0 0.0
        %2126 = vmatpush2.xpose.msra.mxu0 0.0
        %2127 = vmatprep.subr.mxu0 0.0
        %2128 = vmatpush2.xpose.msra.mxu0 0.0
        %2129 = vmatprep.subr.mxu0 0.0
        %2130 = vmatpush2.xpose.msra.mxu0 0.0
        %2131 = vmatprep.subr.mxu0 0.0
        %2132 = vmatpush2.xpose.msra.mxu0 0.0
        %2133 = vmatprep.subr.mxu0 0.0
        %2134 = vmatpush2.xpose.msra.mxu0 0.0
        %2135 = vmatprep.subr.mxu0 0.0
        %2136 = vmatpush2.xpose.msra.mxu0 0.0
        %2137 = vmatprep.subr.mxu0 0.0
        %2138 = vmatpush2.xpose.msra.mxu0 0.0
        %2139 = vmatprep.subr.mxu0 0.0
        %2140 = vmatpush2.xpose.msra.mxu0 0.0
        %2141 = vmatprep.subr.mxu0 0.0
        %2142 = vmatpush2.xpose.msra.mxu0 0.0
        %2143 = vmatprep.subr.mxu0 0.0
        %2144 = vmatpush2.xpose.msra.mxu0 0.0
        %2145 = vmatprep.subr.mxu0 0.0
        %2146 = vmatpush2.xpose.msra.mxu0 0.0
        %2147 = vmatprep.subr.mxu0 0.0
        %2148 = vmatpush2.xpose.msra.mxu0 0.0
        %2149 = vmatprep.subr.mxu0 0.0
        %2150 = vmatpush2.xpose.msra.mxu0 0.0
        %2151 = vmatprep.subr.mxu0 0.0
        %2152 = vmatpush2.xpose.msra.mxu0 0.0
        %2153 = vmatprep.mubr.f32.mxu0 0.0
        %v2154 = vand.u32 %v1930, 4294901760
        %v2155 = vsub.f32 %v1930, %v2154
        %2156 = vmatmul.mubr.f32.gmra.mxu0 %v2155
        %v2157 = vpop.f32.mrf.mxu0
        %v2158 = vadd.f32 %v2084, %v2157
        %v2159 = vpop.f32.mrf.mxu0
        %2160 = vdwg.mxu0
        %2161 = vmatprep.subr.mxu0 0.0
        %2162 = vmatpush1.xpose.msra.mxu0 0.0
        %2163 = vmatprep.subr.mxu0 0.0
        %2164 = vmatpush1.xpose.msra.mxu0 0.0
        %2165 = vmatprep.subr.mxu0 0.0
        %2166 = vmatpush1.xpose.msra.mxu0 0.0
        %2167 = vmatprep.subr.mxu0 0.0
        %2168 = vmatpush1.xpose.msra.mxu0 0.0
        %2169 = vmatprep.subr.mxu0 0.0
        %2170 = vmatpush1.xpose.msra.mxu0 0.0
        %2171 = vmatprep.subr.mxu0 0.0
        %2172 = vmatpush1.xpose.msra.mxu0 0.0
        %2173 = vmatprep.subr.mxu0 0.0
        %2174 = vmatpush1.xpose.msra.mxu0 0.0
        %2175 = vmatprep.subr.mxu0 0.0
        %2176 = vmatpush1.xpose.msra.mxu0 0.0
        %2177 = vmatprep.subr.mxu0 0.0
        %2178 = vmatpush1.xpose.msra.mxu0 0.0
        %2179 = vmatprep.subr.mxu0 0.0
        %2180 = vmatpush1.xpose.msra.mxu0 0.0
        %2181 = vmatprep.subr.mxu0 0.0
        %2182 = vmatpush1.xpose.msra.mxu0 0.0
        %2183 = vmatprep.subr.mxu0 0.0
        %2184 = vmatpush1.xpose.msra.mxu0 0.0
        %2185 = vmatprep.subr.mxu0 0.0
        %2186 = vmatpush1.xpose.msra.mxu0 0.0
        %2187 = vmatprep.subr.mxu0 0.0
        %2188 = vmatpush1.xpose.msra.mxu0 0.0
        %2189 = vmatprep.subr.mxu0 0.0
        %2190 = vmatpush1.xpose.msra.mxu0 0.0
        %2191 = vmatprep.subr.mxu0 0.0
        %v2192 = vand.u32 %v1933, 4294901760
        %2193 = vmatpush1.xpose.msra.mxu0 %v2192
        %2194 = vmatprep.subr.mxu0 0.0
        %2195 = vmatpush2.xpose.msra.mxu0 0.0
        %2196 = vmatprep.subr.mxu0 0.0
        %2197 = vmatpush2.xpose.msra.mxu0 0.0
        %2198 = vmatprep.subr.mxu0 0.0
        %2199 = vmatpush2.xpose.msra.mxu0 0.0
        %2200 = vmatprep.subr.mxu0 0.0
        %2201 = vmatpush2.xpose.msra.mxu0 0.0
        %2202 = vmatprep.subr.mxu0 0.0
        %2203 = vmatpush2.xpose.msra.mxu0 0.0
        %2204 = vmatprep.subr.mxu0 0.0
        %2205 = vmatpush2.xpose.msra.mxu0 0.0
        %2206 = vmatprep.subr.mxu0 0.0
        %2207 = vmatpush2.xpose.msra.mxu0 0.0
        %2208 = vmatprep.subr.mxu0 0.0
        %2209 = vmatpush2.xpose.msra.mxu0 0.0
        %2210 = vmatprep.subr.mxu0 0.0
        %2211 = vmatpush2.xpose.msra.mxu0 0.0
        %2212 = vmatprep.subr.mxu0 0.0
        %2213 = vmatpush2.xpose.msra.mxu0 0.0
        %2214 = vmatprep.subr.mxu0 0.0
        %2215 = vmatpush2.xpose.msra.mxu0 0.0
        %2216 = vmatprep.subr.mxu0 0.0
        %2217 = vmatpush2.xpose.msra.mxu0 0.0
        %2218 = vmatprep.subr.mxu0 0.0
        %2219 = vmatpush2.xpose.msra.mxu0 0.0
        %2220 = vmatprep.subr.mxu0 0.0
        %2221 = vmatpush2.xpose.msra.mxu0 0.0
        %2222 = vmatprep.subr.mxu0 0.0
        %2223 = vmatpush2.xpose.msra.mxu0 0.0
        %2224 = vmatprep.subr.mxu0 0.0
        %2225 = vmatpush2.xpose.msra.mxu0 0.0
        %2226 = vmatprep.mubr.f32.mxu0 0.0
        %v2227 = vand.u32 %v1930, 4294901760
        %v2228 = vsub.f32 %v1930, %v2227
        %v2229 = vand.u32 %v2228, 4294901760
        %2230 = vmatmul.mubr.f32.gmra.mxu0 %v2229
        %v2231 = vpop.f32.mrf.mxu0
        %v2232 = vadd.f32 %v2158, %v2231
        %v2233 = vpop.f32.mrf.mxu0
        %2234 = vdwg.mxu0
        %2235 = vmatprep.subr.mxu0 0.0
        %2236 = vmatpush1.xpose.msra.mxu0 0.0
        %2237 = vmatprep.subr.mxu0 0.0
        %2238 = vmatpush1.xpose.msra.mxu0 0.0
        %2239 = vmatprep.subr.mxu0 0.0
        %2240 = vmatpush1.xpose.msra.mxu0 0.0
        %2241 = vmatprep.subr.mxu0 0.0
        %2242 = vmatpush1.xpose.msra.mxu0 0.0
        %2243 = vmatprep.subr.mxu0 0.0
        %2244 = vmatpush1.xpose.msra.mxu0 0.0
        %2245 = vmatprep.subr.mxu0 0.0
        %2246 = vmatpush1.xpose.msra.mxu0 0.0
        %2247 = vmatprep.subr.mxu0 0.0
        %2248 = vmatpush1.xpose.msra.mxu0 0.0
        %2249 = vmatprep.subr.mxu0 0.0
        %2250 = vmatpush1.xpose.msra.mxu0 0.0
        %2251 = vmatprep.subr.mxu0 0.0
        %2252 = vmatpush1.xpose.msra.mxu0 0.0
        %2253 = vmatprep.subr.mxu0 0.0
        %2254 = vmatpush1.xpose.msra.mxu0 0.0
        %2255 = vmatprep.subr.mxu0 0.0
        %2256 = vmatpush1.xpose.msra.mxu0 0.0
        %2257 = vmatprep.subr.mxu0 0.0
        %2258 = vmatpush1.xpose.msra.mxu0 0.0
        %2259 = vmatprep.subr.mxu0 0.0
        %2260 = vmatpush1.xpose.msra.mxu0 0.0
        %2261 = vmatprep.subr.mxu0 0.0
        %2262 = vmatpush1.xpose.msra.mxu0 0.0
        %2263 = vmatprep.subr.mxu0 0.0
        %2264 = vmatpush1.xpose.msra.mxu0 0.0
        %2265 = vmatprep.subr.mxu0 0.0
        %v2266 = vand.u32 %v1933, 4294901760
        %v2267 = vsub.f32 %v1933, %v2266
        %v2268 = vand.u32 %v2267, 4294901760
        %2269 = vmatpush1.xpose.msra.mxu0 %v2268
        %2270 = vmatprep.subr.mxu0 0.0
        %2271 = vmatpush2.xpose.msra.mxu0 0.0
        %2272 = vmatprep.subr.mxu0 0.0
        %2273 = vmatpush2.xpose.msra.mxu0 0.0
        %2274 = vmatprep.subr.mxu0 0.0
        %2275 = vmatpush2.xpose.msra.mxu0 0.0
        %2276 = vmatprep.subr.mxu0 0.0
        %2277 = vmatpush2.xpose.msra.mxu0 0.0
        %2278 = vmatprep.subr.mxu0 0.0
        %2279 = vmatpush2.xpose.msra.mxu0 0.0
        %2280 = vmatprep.subr.mxu0 0.0
        %2281 = vmatpush2.xpose.msra.mxu0 0.0
        %2282 = vmatprep.subr.mxu0 0.0
        %2283 = vmatpush2.xpose.msra.mxu0 0.0
        %2284 = vmatprep.subr.mxu0 0.0
        %2285 = vmatpush2.xpose.msra.mxu0 0.0
        %2286 = vmatprep.subr.mxu0 0.0
        %2287 = vmatpush2.xpose.msra.mxu0 0.0
        %2288 = vmatprep.subr.mxu0 0.0
        %2289 = vmatpush2.xpose.msra.mxu0 0.0
        %2290 = vmatprep.subr.mxu0 0.0
        %2291 = vmatpush2.xpose.msra.mxu0 0.0
        %2292 = vmatprep.subr.mxu0 0.0
        %2293 = vmatpush2.xpose.msra.mxu0 0.0
        %2294 = vmatprep.subr.mxu0 0.0
        %2295 = vmatpush2.xpose.msra.mxu0 0.0
        %2296 = vmatprep.subr.mxu0 0.0
        %2297 = vmatpush2.xpose.msra.mxu0 0.0
        %2298 = vmatprep.subr.mxu0 0.0
        %2299 = vmatpush2.xpose.msra.mxu0 0.0
        %2300 = vmatprep.subr.mxu0 0.0
        %2301 = vmatpush2.xpose.msra.mxu0 0.0
        %2302 = vmatprep.mubr.f32.mxu0 0.0
        %v2303 = vand.u32 %v1930, 4294901760
        %2304 = vmatmul.mubr.f32.gmra.mxu0 %v2303
        %v2305 = vpop.f32.mrf.mxu0
        %v2306 = vadd.f32 %v2232, %v2305
        %v2307 = vpop.f32.mrf.mxu0
        %2308 = vdwg.mxu0
        %2309 = vmatprep.subr.mxu0 0.0
        %2310 = vmatpush1.xpose.msra.mxu0 0.0
        %2311 = vmatprep.subr.mxu0 0.0
        %2312 = vmatpush1.xpose.msra.mxu0 0.0
        %2313 = vmatprep.subr.mxu0 0.0
        %2314 = vmatpush1.xpose.msra.mxu0 0.0
        %2315 = vmatprep.subr.mxu0 0.0
        %2316 = vmatpush1.xpose.msra.mxu0 0.0
        %2317 = vmatprep.subr.mxu0 0.0
        %2318 = vmatpush1.xpose.msra.mxu0 0.0
        %2319 = vmatprep.subr.mxu0 0.0
        %2320 = vmatpush1.xpose.msra.mxu0 0.0
        %2321 = vmatprep.subr.mxu0 0.0
        %2322 = vmatpush1.xpose.msra.mxu0 0.0
        %2323 = vmatprep.subr.mxu0 0.0
        %2324 = vmatpush1.xpose.msra.mxu0 0.0
        %2325 = vmatprep.subr.mxu0 0.0
        %2326 = vmatpush1.xpose.msra.mxu0 0.0
        %2327 = vmatprep.subr.mxu0 0.0
        %2328 = vmatpush1.xpose.msra.mxu0 0.0
        %2329 = vmatprep.subr.mxu0 0.0
        %2330 = vmatpush1.xpose.msra.mxu0 0.0
        %2331 = vmatprep.subr.mxu0 0.0
        %2332 = vmatpush1.xpose.msra.mxu0 0.0
        %2333 = vmatprep.subr.mxu0 0.0
        %2334 = vmatpush1.xpose.msra.mxu0 0.0
        %2335 = vmatprep.subr.mxu0 0.0
        %2336 = vmatpush1.xpose.msra.mxu0 0.0
        %2337 = vmatprep.subr.mxu0 0.0
        %2338 = vmatpush1.xpose.msra.mxu0 0.0
        %2339 = vmatprep.subr.mxu0 0.0
        %v2340 = vand.u32 %v1933, 4294901760
        %2341 = vmatpush1.xpose.msra.mxu0 %v2340
        %2342 = vmatprep.subr.mxu0 0.0
        %2343 = vmatpush2.xpose.msra.mxu0 0.0
        %2344 = vmatprep.subr.mxu0 0.0
        %2345 = vmatpush2.xpose.msra.mxu0 0.0
        %2346 = vmatprep.subr.mxu0 0.0
        %2347 = vmatpush2.xpose.msra.mxu0 0.0
        %2348 = vmatprep.subr.mxu0 0.0
        %2349 = vmatpush2.xpose.msra.mxu0 0.0
        %2350 = vmatprep.subr.mxu0 0.0
        %2351 = vmatpush2.xpose.msra.mxu0 0.0
        %2352 = vmatprep.subr.mxu0 0.0
        %2353 = vmatpush2.xpose.msra.mxu0 0.0
        %2354 = vmatprep.subr.mxu0 0.0
        %2355 = vmatpush2.xpose.msra.mxu0 0.0
        %2356 = vmatprep.subr.mxu0 0.0
        %2357 = vmatpush2.xpose.msra.mxu0 0.0
        %2358 = vmatprep.subr.mxu0 0.0
        %2359 = vmatpush2.xpose.msra.mxu0 0.0
        %2360 = vmatprep.subr.mxu0 0.0
        %2361 = vmatpush2.xpose.msra.mxu0 0.0
        %2362 = vmatprep.subr.mxu0 0.0
        %2363 = vmatpush2.xpose.msra.mxu0 0.0
        %2364 = vmatprep.subr.mxu0 0.0
        %2365 = vmatpush2.xpose.msra.mxu0 0.0
        %2366 = vmatprep.subr.mxu0 0.0
        %2367 = vmatpush2.xpose.msra.mxu0 0.0
        %2368 = vmatprep.subr.mxu0 0.0
        %2369 = vmatpush2.xpose.msra.mxu0 0.0
        %2370 = vmatprep.subr.mxu0 0.0
        %2371 = vmatpush2.xpose.msra.mxu0 0.0
        %2372 = vmatprep.subr.mxu0 0.0
        %2373 = vmatpush2.xpose.msra.mxu0 0.0
        %2374 = vmatprep.mubr.f32.mxu0 0.0
        %v2375 = vand.u32 %v1930, 4294901760
        %2376 = vmatmul.mubr.f32.gmra.mxu0 %v2375
        %v2377 = vpop.f32.mrf.mxu0
        %v2378 = vadd.f32 %v2306, %v2377
        %v2379 = vpop.f32.mrf.mxu0
        %2380 = vdwg.mxu0
        %v2381 = vmul.f32 %v2378, 2.5
        %v2382 = vld [vmem:[%s445] sm:$0xff]
        %vm2383 = vcmp.ne.f32.partialorder %v2382, 0.0
        %v2384 = vsel %vm2383, -1e+09, %v2381
        %vm2385 = vcmask 64512
        %v2386 = vsel %vm2385, %v2384, -inf
        %2387 = vmax.xlane.f32.xlu0 %v2386
        %v2388 = vpop.xlane.xlu0 %2387
        %v2389 = vsub.f32 %v2384, %v2388
        %v2390 = vmul.f32 %v2389, 1.442695
        %v2391 = vpow.pop %v2390
        %v2392 = vsel %vm2385, %v2391, 0.0
        %2393 = vadd.xlane.f32.xlu0 %v2392
        %v2394 = vpop.xlane.xlu0 %2393
        %v2395 = vrcp.pop %v2394
        %v2396 = vmul.f32 %v2391, %v2395
        %2397 = vst.msk [vmem:[%s417] sm:$0xff] %vm2385, %v2396
        %v2399 = vsel %vm2385, %v2396, 0
        %2401 = vmatprep.subr.mxu0 0.0
        %2402 = vmatpush1.msra.mxu0 0.0
        %2403 = vmatprep.subr.mxu0 0.0
        %2404 = vmatpush1.msra.mxu0 0.0
        %2405 = vmatprep.subr.mxu0 0.0
        %2406 = vmatpush1.msra.mxu0 0.0
        %2407 = vmatprep.subr.mxu0 0.0
        %2408 = vmatpush1.msra.mxu0 0.0
        %2409 = vmatprep.subr.mxu0 0.0
        %2410 = vmatpush1.msra.mxu0 0.0
        %2411 = vmatprep.subr.mxu0 0.0
        %2412 = vmatpush1.msra.mxu0 0.0
        %2413 = vmatprep.subr.mxu0 0.0
        %2414 = vmatpush1.msra.mxu0 0.0
        %2415 = vmatprep.subr.mxu0 0.0
        %2416 = vmatpush1.msra.mxu0 0.0
        %2417 = vmatprep.subr.mxu0 0.0
        %2418 = vmatpush1.msra.mxu0 0.0
        %2419 = vmatprep.subr.mxu0 0.0
        %2420 = vmatpush1.msra.mxu0 0.0
        %2421 = vmatprep.subr.mxu0 0.0
        %2422 = vmatpush1.msra.mxu0 0.0
        %2423 = vmatprep.subr.mxu0 0.0
        %2424 = vmatpush1.msra.mxu0 0.0
        %2425 = vmatprep.subr.mxu0 0.0
        %2426 = vmatpush1.msra.mxu0 0.0
        %2427 = vmatprep.subr.mxu0 0.0
        %2428 = vmatpush1.msra.mxu0 0.0
        %2429 = vmatprep.subr.mxu0 0.0
        %2430 = vmatpush1.msra.mxu0 0.0
        %2431 = vmatprep.subr.mxu0 0.0
        %v2432 = vand.u32 %v1925, 4294901760
        %2433 = vmatpush1.msra.mxu0 %v2432
        %2434 = vmatprep.subr.mxu0 0.0
        %2435 = vmatpush2.msra.mxu0 0.0
        %2436 = vmatprep.subr.mxu0 0.0
        %2437 = vmatpush2.msra.mxu0 0.0
        %2438 = vmatprep.subr.mxu0 0.0
        %2439 = vmatpush2.msra.mxu0 0.0
        %2440 = vmatprep.subr.mxu0 0.0
        %2441 = vmatpush2.msra.mxu0 0.0
        %2442 = vmatprep.subr.mxu0 0.0
        %2443 = vmatpush2.msra.mxu0 0.0
        %2444 = vmatprep.subr.mxu0 0.0
        %2445 = vmatpush2.msra.mxu0 0.0
        %2446 = vmatprep.subr.mxu0 0.0
        %2447 = vmatpush2.msra.mxu0 0.0
        %2448 = vmatprep.subr.mxu0 0.0
        %2449 = vmatpush2.msra.mxu0 0.0
        %2450 = vmatprep.subr.mxu0 0.0
        %2451 = vmatpush2.msra.mxu0 0.0
        %2452 = vmatprep.subr.mxu0 0.0
        %2453 = vmatpush2.msra.mxu0 0.0
        %2454 = vmatprep.subr.mxu0 0.0
        %2455 = vmatpush2.msra.mxu0 0.0
        %2456 = vmatprep.subr.mxu0 0.0
        %2457 = vmatpush2.msra.mxu0 0.0
        %2458 = vmatprep.subr.mxu0 0.0
        %2459 = vmatpush2.msra.mxu0 0.0
        %2460 = vmatprep.subr.mxu0 0.0
        %2461 = vmatpush2.msra.mxu0 0.0
        %2462 = vmatprep.subr.mxu0 0.0
        %2463 = vmatpush2.msra.mxu0 0.0
        %2464 = vmatprep.subr.mxu0 0.0
        %2465 = vmatpush2.msra.mxu0 0.0
        %2466 = vmatprep.mubr.f32.mxu0 0.0
        %v2467 = vand.u32 %v2399, 4294901760
        %v2468 = vsub.f32 %v2399, %v2467
        %v2469 = vand.u32 %v2468, 4294901760
        %v2470 = vsub.f32 %v2468, %v2469
        %v2471 = vand.u32 %v2470, 4294901760
        %2472 = vmatmul.mubr.f32.gmra.mxu0 %v2471
        %v2473 = vpop.f32.mrf.mxu0
        %v2474 = vadd.f32 0.0, %v2473
        %v2475 = vpop.f32.mrf.mxu0
        %2476 = vdwg.mxu0
        %2477 = vmatprep.subr.mxu0 0.0
        %2478 = vmatpush1.msra.mxu0 0.0
        %2479 = vmatprep.subr.mxu0 0.0
        %2480 = vmatpush1.msra.mxu0 0.0
        %2481 = vmatprep.subr.mxu0 0.0
        %2482 = vmatpush1.msra.mxu0 0.0
        %2483 = vmatprep.subr.mxu0 0.0
        %2484 = vmatpush1.msra.mxu0 0.0
        %2485 = vmatprep.subr.mxu0 0.0
        %2486 = vmatpush1.msra.mxu0 0.0
        %2487 = vmatprep.subr.mxu0 0.0
        %2488 = vmatpush1.msra.mxu0 0.0
        %2489 = vmatprep.subr.mxu0 0.0
        %2490 = vmatpush1.msra.mxu0 0.0
        %2491 = vmatprep.subr.mxu0 0.0
        %2492 = vmatpush1.msra.mxu0 0.0
        %2493 = vmatprep.subr.mxu0 0.0
        %2494 = vmatpush1.msra.mxu0 0.0
        %2495 = vmatprep.subr.mxu0 0.0
        %2496 = vmatpush1.msra.mxu0 0.0
        %2497 = vmatprep.subr.mxu0 0.0
        %2498 = vmatpush1.msra.mxu0 0.0
        %2499 = vmatprep.subr.mxu0 0.0
        %2500 = vmatpush1.msra.mxu0 0.0
        %2501 = vmatprep.subr.mxu0 0.0
        %2502 = vmatpush1.msra.mxu0 0.0
        %2503 = vmatprep.subr.mxu0 0.0
        %2504 = vmatpush1.msra.mxu0 0.0
        %2505 = vmatprep.subr.mxu0 0.0
        %2506 = vmatpush1.msra.mxu0 0.0
        %2507 = vmatprep.subr.mxu0 0.0
        %v2508 = vand.u32 %v1925, 4294901760
        %v2509 = vsub.f32 %v1925, %v2508
        %v2510 = vand.u32 %v2509, 4294901760
        %v2511 = vsub.f32 %v2509, %v2510
        %v2512 = vand.u32 %v2511, 4294901760
        %2513 = vmatpush1.msra.mxu0 %v2512
        %2514 = vmatprep.subr.mxu0 0.0
        %2515 = vmatpush2.msra.mxu0 0.0
        %2516 = vmatprep.subr.mxu0 0.0
        %2517 = vmatpush2.msra.mxu0 0.0
        %2518 = vmatprep.subr.mxu0 0.0
        %2519 = vmatpush2.msra.mxu0 0.0
        %2520 = vmatprep.subr.mxu0 0.0
        %2521 = vmatpush2.msra.mxu0 0.0
        %2522 = vmatprep.subr.mxu0 0.0
        %2523 = vmatpush2.msra.mxu0 0.0
        %2524 = vmatprep.subr.mxu0 0.0
        %2525 = vmatpush2.msra.mxu0 0.0
        %2526 = vmatprep.subr.mxu0 0.0
        %2527 = vmatpush2.msra.mxu0 0.0
        %2528 = vmatprep.subr.mxu0 0.0
        %2529 = vmatpush2.msra.mxu0 0.0
        %2530 = vmatprep.subr.mxu0 0.0
        %2531 = vmatpush2.msra.mxu0 0.0
        %2532 = vmatprep.subr.mxu0 0.0
        %2533 = vmatpush2.msra.mxu0 0.0
        %2534 = vmatprep.subr.mxu0 0.0
        %2535 = vmatpush2.msra.mxu0 0.0
        %2536 = vmatprep.subr.mxu0 0.0
        %2537 = vmatpush2.msra.mxu0 0.0
        %2538 = vmatprep.subr.mxu0 0.0
        %2539 = vmatpush2.msra.mxu0 0.0
        %2540 = vmatprep.subr.mxu0 0.0
        %2541 = vmatpush2.msra.mxu0 0.0
        %2542 = vmatprep.subr.mxu0 0.0
        %2543 = vmatpush2.msra.mxu0 0.0
        %2544 = vmatprep.subr.mxu0 0.0
        %2545 = vmatpush2.msra.mxu0 0.0
        %2546 = vmatprep.mubr.f32.mxu0 0.0
        %v2547 = vand.u32 %v2399, 4294901760
        %2548 = vmatmul.mubr.f32.gmra.mxu0 %v2547
        %v2549 = vpop.f32.mrf.mxu0
        %v2550 = vadd.f32 %v2474, %v2549
        %v2551 = vpop.f32.mrf.mxu0
        %2552 = vdwg.mxu0
        %2553 = vmatprep.subr.mxu0 0.0
        %2554 = vmatpush1.msra.mxu0 0.0
        %2555 = vmatprep.subr.mxu0 0.0
        %2556 = vmatpush1.msra.mxu0 0.0
        %2557 = vmatprep.subr.mxu0 0.0
        %2558 = vmatpush1.msra.mxu0 0.0
        %2559 = vmatprep.subr.mxu0 0.0
        %2560 = vmatpush1.msra.mxu0 0.0
        %2561 = vmatprep.subr.mxu0 0.0
        %2562 = vmatpush1.msra.mxu0 0.0
        %2563 = vmatprep.subr.mxu0 0.0
        %2564 = vmatpush1.msra.mxu0 0.0
        %2565 = vmatprep.subr.mxu0 0.0
        %2566 = vmatpush1.msra.mxu0 0.0
        %2567 = vmatprep.subr.mxu0 0.0
        %2568 = vmatpush1.msra.mxu0 0.0
        %2569 = vmatprep.subr.mxu0 0.0
        %2570 = vmatpush1.msra.mxu0 0.0
        %2571 = vmatprep.subr.mxu0 0.0
        %2572 = vmatpush1.msra.mxu0 0.0
        %2573 = vmatprep.subr.mxu0 0.0
        %2574 = vmatpush1.msra.mxu0 0.0
        %2575 = vmatprep.subr.mxu0 0.0
        %2576 = vmatpush1.msra.mxu0 0.0
        %2577 = vmatprep.subr.mxu0 0.0
        %2578 = vmatpush1.msra.mxu0 0.0
        %2579 = vmatprep.subr.mxu0 0.0
        %2580 = vmatpush1.msra.mxu0 0.0
        %2581 = vmatprep.subr.mxu0 0.0
        %2582 = vmatpush1.msra.mxu0 0.0
        %2583 = vmatprep.subr.mxu0 0.0
        %v2584 = vand.u32 %v1925, 4294901760
        %v2585 = vsub.f32 %v1925, %v2584
        %2586 = vmatpush1.msra.mxu0 %v2585
        %2587 = vmatprep.subr.mxu0 0.0
        %2588 = vmatpush2.msra.mxu0 0.0
        %2589 = vmatprep.subr.mxu0 0.0
        %2590 = vmatpush2.msra.mxu0 0.0
        %2591 = vmatprep.subr.mxu0 0.0
        %2592 = vmatpush2.msra.mxu0 0.0
        %2593 = vmatprep.subr.mxu0 0.0
        %2594 = vmatpush2.msra.mxu0 0.0
        %2595 = vmatprep.subr.mxu0 0.0
        %2596 = vmatpush2.msra.mxu0 0.0
        %2597 = vmatprep.subr.mxu0 0.0
        %2598 = vmatpush2.msra.mxu0 0.0
        %2599 = vmatprep.subr.mxu0 0.0
        %2600 = vmatpush2.msra.mxu0 0.0
        %2601 = vmatprep.subr.mxu0 0.0
        %2602 = vmatpush2.msra.mxu0 0.0
        %2603 = vmatprep.subr.mxu0 0.0
        %2604 = vmatpush2.msra.mxu0 0.0
        %2605 = vmatprep.subr.mxu0 0.0
        %2606 = vmatpush2.msra.mxu0 0.0
        %2607 = vmatprep.subr.mxu0 0.0
        %2608 = vmatpush2.msra.mxu0 0.0
        %2609 = vmatprep.subr.mxu0 0.0
        %2610 = vmatpush2.msra.mxu0 0.0
        %2611 = vmatprep.subr.mxu0 0.0
        %2612 = vmatpush2.msra.mxu0 0.0
        %2613 = vmatprep.subr.mxu0 0.0
        %2614 = vmatpush2.msra.mxu0 0.0
        %2615 = vmatprep.subr.mxu0 0.0
        %2616 = vmatpush2.msra.mxu0 0.0
        %2617 = vmatprep.subr.mxu0 0.0
        %2618 = vmatpush2.msra.mxu0 0.0
        %2619 = vmatprep.mubr.f32.mxu0 0.0
        %v2620 = vand.u32 %v2399, 4294901760
        %v2621 = vsub.f32 %v2399, %v2620
        %2622 = vmatmul.mubr.f32.gmra.mxu0 %v2621
        %v2623 = vpop.f32.mrf.mxu0
        %v2624 = vadd.f32 %v2550, %v2623
        %v2625 = vpop.f32.mrf.mxu0
        %2626 = vdwg.mxu0
        %2627 = vmatprep.subr.mxu0 0.0
        %2628 = vmatpush1.msra.mxu0 0.0
        %2629 = vmatprep.subr.mxu0 0.0
        %2630 = vmatpush1.msra.mxu0 0.0
        %2631 = vmatprep.subr.mxu0 0.0
        %2632 = vmatpush1.msra.mxu0 0.0
        %2633 = vmatprep.subr.mxu0 0.0
        %2634 = vmatpush1.msra.mxu0 0.0
        %2635 = vmatprep.subr.mxu0 0.0
        %2636 = vmatpush1.msra.mxu0 0.0
        %2637 = vmatprep.subr.mxu0 0.0
        %2638 = vmatpush1.msra.mxu0 0.0
        %2639 = vmatprep.subr.mxu0 0.0
        %2640 = vmatpush1.msra.mxu0 0.0
        %2641 = vmatprep.subr.mxu0 0.0
        %2642 = vmatpush1.msra.mxu0 0.0
        %2643 = vmatprep.subr.mxu0 0.0
        %2644 = vmatpush1.msra.mxu0 0.0
        %2645 = vmatprep.subr.mxu0 0.0
        %2646 = vmatpush1.msra.mxu0 0.0
        %2647 = vmatprep.subr.mxu0 0.0
        %2648 = vmatpush1.msra.mxu0 0.0
        %2649 = vmatprep.subr.mxu0 0.0
        %2650 = vmatpush1.msra.mxu0 0.0
        %2651 = vmatprep.subr.mxu0 0.0
        %2652 = vmatpush1.msra.mxu0 0.0
        %2653 = vmatprep.subr.mxu0 0.0
        %2654 = vmatpush1.msra.mxu0 0.0
        %2655 = vmatprep.subr.mxu0 0.0
        %2656 = vmatpush1.msra.mxu0 0.0
        %2657 = vmatprep.subr.mxu0 0.0
        %v2658 = vand.u32 %v1925, 4294901760
        %2659 = vmatpush1.msra.mxu0 %v2658
        %2660 = vmatprep.subr.mxu0 0.0
        %2661 = vmatpush2.msra.mxu0 0.0
        %2662 = vmatprep.subr.mxu0 0.0
        %2663 = vmatpush2.msra.mxu0 0.0
        %2664 = vmatprep.subr.mxu0 0.0
        %2665 = vmatpush2.msra.mxu0 0.0
        %2666 = vmatprep.subr.mxu0 0.0
        %2667 = vmatpush2.msra.mxu0 0.0
        %2668 = vmatprep.subr.mxu0 0.0
        %2669 = vmatpush2.msra.mxu0 0.0
        %2670 = vmatprep.subr.mxu0 0.0
        %2671 = vmatpush2.msra.mxu0 0.0
        %2672 = vmatprep.subr.mxu0 0.0
        %2673 = vmatpush2.msra.mxu0 0.0
        %2674 = vmatprep.subr.mxu0 0.0
        %2675 = vmatpush2.msra.mxu0 0.0
        %2676 = vmatprep.subr.mxu0 0.0
        %2677 = vmatpush2.msra.mxu0 0.0
        %2678 = vmatprep.subr.mxu0 0.0
        %2679 = vmatpush2.msra.mxu0 0.0
        %2680 = vmatprep.subr.mxu0 0.0
        %2681 = vmatpush2.msra.mxu0 0.0
        %2682 = vmatprep.subr.mxu0 0.0
        %2683 = vmatpush2.msra.mxu0 0.0
        %2684 = vmatprep.subr.mxu0 0.0
        %2685 = vmatpush2.msra.mxu0 0.0
        %2686 = vmatprep.subr.mxu0 0.0
        %2687 = vmatpush2.msra.mxu0 0.0
        %2688 = vmatprep.subr.mxu0 0.0
        %2689 = vmatpush2.msra.mxu0 0.0
        %2690 = vmatprep.subr.mxu0 0.0
        %2691 = vmatpush2.msra.mxu0 0.0
        %2692 = vmatprep.mubr.f32.mxu0 0.0
        %v2693 = vand.u32 %v2399, 4294901760
        %v2694 = vsub.f32 %v2399, %v2693
        %v2695 = vand.u32 %v2694, 4294901760
        %2696 = vmatmul.mubr.f32.gmra.mxu0 %v2695
        %v2697 = vpop.f32.mrf.mxu0
        %v2698 = vadd.f32 %v2624, %v2697
        %v2699 = vpop.f32.mrf.mxu0
        %2700 = vdwg.mxu0
        %2701 = vmatprep.subr.mxu0 0.0
        %2702 = vmatpush1.msra.mxu0 0.0
        %2703 = vmatprep.subr.mxu0 0.0
        %2704 = vmatpush1.msra.mxu0 0.0
        %2705 = vmatprep.subr.mxu0 0.0
        %2706 = vmatpush1.msra.mxu0 0.0
        %2707 = vmatprep.subr.mxu0 0.0
        %2708 = vmatpush1.msra.mxu0 0.0
        %2709 = vmatprep.subr.mxu0 0.0
        %2710 = vmatpush1.msra.mxu0 0.0
        %2711 = vmatprep.subr.mxu0 0.0
        %2712 = vmatpush1.msra.mxu0 0.0
        %2713 = vmatprep.subr.mxu0 0.0
        %2714 = vmatpush1.msra.mxu0 0.0
        %2715 = vmatprep.subr.mxu0 0.0
        %2716 = vmatpush1.msra.mxu0 0.0
        %2717 = vmatprep.subr.mxu0 0.0
        %2718 = vmatpush1.msra.mxu0 0.0
        %2719 = vmatprep.subr.mxu0 0.0
        %2720 = vmatpush1.msra.mxu0 0.0
        %2721 = vmatprep.subr.mxu0 0.0
        %2722 = vmatpush1.msra.mxu0 0.0
        %2723 = vmatprep.subr.mxu0 0.0
        %2724 = vmatpush1.msra.mxu0 0.0
        %2725 = vmatprep.subr.mxu0 0.0
        %2726 = vmatpush1.msra.mxu0 0.0
        %2727 = vmatprep.subr.mxu0 0.0
        %2728 = vmatpush1.msra.mxu0 0.0
        %2729 = vmatprep.subr.mxu0 0.0
        %2730 = vmatpush1.msra.mxu0 0.0
        %2731 = vmatprep.subr.mxu0 0.0
        %v2732 = vand.u32 %v1925, 4294901760
        %v2733 = vsub.f32 %v1925, %v2732
        %v2734 = vand.u32 %v2733, 4294901760
        %2735 = vmatpush1.msra.mxu0 %v2734
        %2736 = vmatprep.subr.mxu0 0.0
        %2737 = vmatpush2.msra.mxu0 0.0
        %2738 = vmatprep.subr.mxu0 0.0
        %2739 = vmatpush2.msra.mxu0 0.0
        %2740 = vmatprep.subr.mxu0 0.0
        %2741 = vmatpush2.msra.mxu0 0.0
        %2742 = vmatprep.subr.mxu0 0.0
        %2743 = vmatpush2.msra.mxu0 0.0
        %2744 = vmatprep.subr.mxu0 0.0
        %2745 = vmatpush2.msra.mxu0 0.0
        %2746 = vmatprep.subr.mxu0 0.0
        %2747 = vmatpush2.msra.mxu0 0.0
        %2748 = vmatprep.subr.mxu0 0.0
        %2749 = vmatpush2.msra.mxu0 0.0
        %2750 = vmatprep.subr.mxu0 0.0
        %2751 = vmatpush2.msra.mxu0 0.0
        %2752 = vmatprep.subr.mxu0 0.0
        %2753 = vmatpush2.msra.mxu0 0.0
        %2754 = vmatprep.subr.mxu0 0.0
        %2755 = vmatpush2.msra.mxu0 0.0
        %2756 = vmatprep.subr.mxu0 0.0
        %2757 = vmatpush2.msra.mxu0 0.0
        %2758 = vmatprep.subr.mxu0 0.0
        %2759 = vmatpush2.msra.mxu0 0.0
        %2760 = vmatprep.subr.mxu0 0.0
        %2761 = vmatpush2.msra.mxu0 0.0
        %2762 = vmatprep.subr.mxu0 0.0
        %2763 = vmatpush2.msra.mxu0 0.0
        %2764 = vmatprep.subr.mxu0 0.0
        %2765 = vmatpush2.msra.mxu0 0.0
        %2766 = vmatprep.subr.mxu0 0.0
        %2767 = vmatpush2.msra.mxu0 0.0
        %2768 = vmatprep.mubr.f32.mxu0 0.0
        %v2769 = vand.u32 %v2399, 4294901760
        %2770 = vmatmul.mubr.f32.gmra.mxu0 %v2769
        %v2771 = vpop.f32.mrf.mxu0
        %v2772 = vadd.f32 %v2698, %v2771
        %v2773 = vpop.f32.mrf.mxu0
        %2774 = vdwg.mxu0
        %2775 = vmatprep.subr.mxu0 0.0
        %2776 = vmatpush1.msra.mxu0 0.0
        %2777 = vmatprep.subr.mxu0 0.0
        %2778 = vmatpush1.msra.mxu0 0.0
        %2779 = vmatprep.subr.mxu0 0.0
        %2780 = vmatpush1.msra.mxu0 0.0
        %2781 = vmatprep.subr.mxu0 0.0
        %2782 = vmatpush1.msra.mxu0 0.0
        %2783 = vmatprep.subr.mxu0 0.0
        %2784 = vmatpush1.msra.mxu0 0.0
        %2785 = vmatprep.subr.mxu0 0.0
        %2786 = vmatpush1.msra.mxu0 0.0
        %2787 = vmatprep.subr.mxu0 0.0
        %2788 = vmatpush1.msra.mxu0 0.0
        %2789 = vmatprep.subr.mxu0 0.0
        %2790 = vmatpush1.msra.mxu0 0.0
        %2791 = vmatprep.subr.mxu0 0.0
        %2792 = vmatpush1.msra.mxu0 0.0
        %2793 = vmatprep.subr.mxu0 0.0
        %2794 = vmatpush1.msra.mxu0 0.0
        %2795 = vmatprep.subr.mxu0 0.0
        %2796 = vmatpush1.msra.mxu0 0.0
        %2797 = vmatprep.subr.mxu0 0.0
        %2798 = vmatpush1.msra.mxu0 0.0
        %2799 = vmatprep.subr.mxu0 0.0
        %2800 = vmatpush1.msra.mxu0 0.0
        %2801 = vmatprep.subr.mxu0 0.0
        %2802 = vmatpush1.msra.mxu0 0.0
        %2803 = vmatprep.subr.mxu0 0.0
        %2804 = vmatpush1.msra.mxu0 0.0
        %2805 = vmatprep.subr.mxu0 0.0
        %v2806 = vand.u32 %v1925, 4294901760
        %2807 = vmatpush1.msra.mxu0 %v2806
        %2808 = vmatprep.subr.mxu0 0.0
        %2809 = vmatpush2.msra.mxu0 0.0
        %2810 = vmatprep.subr.mxu0 0.0
        %2811 = vmatpush2.msra.mxu0 0.0
        %2812 = vmatprep.subr.mxu0 0.0
        %2813 = vmatpush2.msra.mxu0 0.0
        %2814 = vmatprep.subr.mxu0 0.0
        %2815 = vmatpush2.msra.mxu0 0.0
        %2816 = vmatprep.subr.mxu0 0.0
        %2817 = vmatpush2.msra.mxu0 0.0
        %2818 = vmatprep.subr.mxu0 0.0
        %2819 = vmatpush2.msra.mxu0 0.0
        %2820 = vmatprep.subr.mxu0 0.0
        %2821 = vmatpush2.msra.mxu0 0.0
        %2822 = vmatprep.subr.mxu0 0.0
        %2823 = vmatpush2.msra.mxu0 0.0
        %2824 = vmatprep.subr.mxu0 0.0
        %2825 = vmatpush2.msra.mxu0 0.0
        %2826 = vmatprep.subr.mxu0 0.0
        %2827 = vmatpush2.msra.mxu0 0.0
        %2828 = vmatprep.subr.mxu0 0.0
        %2829 = vmatpush2.msra.mxu0 0.0
        %2830 = vmatprep.subr.mxu0 0.0
        %2831 = vmatpush2.msra.mxu0 0.0
        %2832 = vmatprep.subr.mxu0 0.0
        %2833 = vmatpush2.msra.mxu0 0.0
        %2834 = vmatprep.subr.mxu0 0.0
        %2835 = vmatpush2.msra.mxu0 0.0
        %2836 = vmatprep.subr.mxu0 0.0
        %2837 = vmatpush2.msra.mxu0 0.0
        %2838 = vmatprep.subr.mxu0 0.0
        %2839 = vmatpush2.msra.mxu0 0.0
        %2840 = vmatprep.mubr.f32.mxu0 0.0
        %v2841 = vand.u32 %v2399, 4294901760
        %2842 = vmatmul.mubr.f32.gmra.mxu0 %v2841
        %v2843 = vpop.f32.mrf.mxu0
        %v2844 = vadd.f32 %v2772, %v2843
        %v2845 = vpop.f32.mrf.mxu0
        %2846 = vdwg.mxu0
        %v2847 = vld [vmem:[#allocation2] sm:$0xff]
        %v2848 = vld [vmem:[%s441] sm:$0xff]
        %v2849 = vld [vmem:[%s441 + $0x8] sm:$0xff]
        %v2851 = vsel %vm1928, %v2844, 0
        %2853 = vmatprep.subr.mxu0 0.0
        %2854 = vmatpush1.msra.mxu0 0.0
        %2855 = vmatprep.subr.mxu0 0.0
        %2856 = vmatpush1.msra.mxu0 0.0
        %2857 = vmatprep.subr.mxu0 0.0
        %2858 = vmatpush1.msra.mxu0 0.0
        %2859 = vmatprep.subr.mxu0 0.0
        %2860 = vmatpush1.msra.mxu0 0.0
        %2861 = vmatprep.subr.mxu0 0.0
        %2862 = vmatpush1.msra.mxu0 0.0
        %2863 = vmatprep.subr.mxu0 0.0
        %2864 = vmatpush1.msra.mxu0 0.0
        %2865 = vmatprep.subr.mxu0 0.0
        %2866 = vmatpush1.msra.mxu0 0.0
        %2867 = vmatprep.subr.mxu0 0.0
        %2868 = vmatpush1.msra.mxu0 0.0
        %2869 = vmatprep.subr.mxu0 0.0
        %2870 = vmatpush1.msra.mxu0 0.0
        %2871 = vmatprep.subr.mxu0 0.0
        %2872 = vmatpush1.msra.mxu0 0.0
        %2873 = vmatprep.subr.mxu0 0.0
        %2874 = vmatpush1.msra.mxu0 0.0
        %2875 = vmatprep.subr.mxu0 0.0
        %2876 = vmatpush1.msra.mxu0 0.0
        %2877 = vmatprep.subr.mxu0 0.0
        %2878 = vmatpush1.msra.mxu0 0.0
        %2879 = vmatprep.subr.mxu0 0.0
        %2880 = vmatpush1.msra.mxu0 0.0
        %2881 = vmatprep.subr.mxu0 0.0
        %v2882 = vand.u32 %v2849, 4294901760
        %2883 = vmatpush1.msra.mxu0 %v2882
        %2884 = vmatprep.subr.mxu0 0.0
        %v2885 = vand.u32 %v2848, 4294901760
        %2886 = vmatpush1.msra.mxu0 %v2885
        %2887 = vmatprep.subr.mxu0 0.0
        %2888 = vmatpush2.msra.mxu0 0.0
        %2889 = vmatprep.subr.mxu0 0.0
        %2890 = vmatpush2.msra.mxu0 0.0
        %2891 = vmatprep.subr.mxu0 0.0
        %2892 = vmatpush2.msra.mxu0 0.0
        %2893 = vmatprep.subr.mxu0 0.0
        %2894 = vmatpush2.msra.mxu0 0.0
        %2895 = vmatprep.subr.mxu0 0.0
        %2896 = vmatpush2.msra.mxu0 0.0
        %2897 = vmatprep.subr.mxu0 0.0
        %2898 = vmatpush2.msra.mxu0 0.0
        %2899 = vmatprep.subr.mxu0 0.0
        %2900 = vmatpush2.msra.mxu0 0.0
        %2901 = vmatprep.subr.mxu0 0.0
        %2902 = vmatpush2.msra.mxu0 0.0
        %2903 = vmatprep.subr.mxu0 0.0
        %2904 = vmatpush2.msra.mxu0 0.0
        %2905 = vmatprep.subr.mxu0 0.0
        %2906 = vmatpush2.msra.mxu0 0.0
        %2907 = vmatprep.subr.mxu0 0.0
        %2908 = vmatpush2.msra.mxu0 0.0
        %2909 = vmatprep.subr.mxu0 0.0
        %2910 = vmatpush2.msra.mxu0 0.0
        %2911 = vmatprep.subr.mxu0 0.0
        %2912 = vmatpush2.msra.mxu0 0.0
        %2913 = vmatprep.subr.mxu0 0.0
        %2914 = vmatpush2.msra.mxu0 0.0
        %2915 = vmatprep.subr.mxu0 0.0
        %2916 = vmatpush2.msra.mxu0 0.0
        %2917 = vmatprep.subr.mxu0 0.0
        %2918 = vmatpush2.msra.mxu0 0.0
        %2919 = vmatprep.mubr.f32.mxu0 0.0
        %v2920 = vand.u32 %v2851, 4294901760
        %v2921 = vsub.f32 %v2851, %v2920
        %v2922 = vand.u32 %v2921, 4294901760
        %v2923 = vsub.f32 %v2921, %v2922
        %v2924 = vand.u32 %v2923, 4294901760
        %2925 = vmatmul.mubr.f32.gmra.mxu0 %v2924
        %v2926 = vpop.f32.mrf.mxu0
        %v2927 = vadd.f32 0.0, %v2926
        %v2928 = vpop.f32.mrf.mxu0
        %2929 = vdwg.mxu0
        %2930 = vmatprep.subr.mxu0 0.0
        %2931 = vmatpush1.msra.mxu0 0.0
        %2932 = vmatprep.subr.mxu0 0.0
        %2933 = vmatpush1.msra.mxu0 0.0
        %2934 = vmatprep.subr.mxu0 0.0
        %2935 = vmatpush1.msra.mxu0 0.0
        %2936 = vmatprep.subr.mxu0 0.0
        %2937 = vmatpush1.msra.mxu0 0.0
        %2938 = vmatprep.subr.mxu0 0.0
        %2939 = vmatpush1.msra.mxu0 0.0
        %2940 = vmatprep.subr.mxu0 0.0
        %2941 = vmatpush1.msra.mxu0 0.0
        %2942 = vmatprep.subr.mxu0 0.0
        %2943 = vmatpush1.msra.mxu0 0.0
        %2944 = vmatprep.subr.mxu0 0.0
        %2945 = vmatpush1.msra.mxu0 0.0
        %2946 = vmatprep.subr.mxu0 0.0
        %2947 = vmatpush1.msra.mxu0 0.0
        %2948 = vmatprep.subr.mxu0 0.0
        %2949 = vmatpush1.msra.mxu0 0.0
        %2950 = vmatprep.subr.mxu0 0.0
        %2951 = vmatpush1.msra.mxu0 0.0
        %2952 = vmatprep.subr.mxu0 0.0
        %2953 = vmatpush1.msra.mxu0 0.0
        %2954 = vmatprep.subr.mxu0 0.0
        %2955 = vmatpush1.msra.mxu0 0.0
        %2956 = vmatprep.subr.mxu0 0.0
        %2957 = vmatpush1.msra.mxu0 0.0
        %2958 = vmatprep.subr.mxu0 0.0
        %v2959 = vand.u32 %v2849, 4294901760
        %v2960 = vsub.f32 %v2849, %v2959
        %v2961 = vand.u32 %v2960, 4294901760
        %v2962 = vsub.f32 %v2960, %v2961
        %v2963 = vand.u32 %v2962, 4294901760
        %2964 = vmatpush1.msra.mxu0 %v2963
        %2965 = vmatprep.subr.mxu0 0.0
        %v2966 = vand.u32 %v2848, 4294901760
        %v2967 = vsub.f32 %v2848, %v2966
        %v2968 = vand.u32 %v2967, 4294901760
        %v2969 = vsub.f32 %v2967, %v2968
        %v2970 = vand.u32 %v2969, 4294901760
        %2971 = vmatpush1.msra.mxu0 %v2970
        %2972 = vmatprep.subr.mxu0 0.0
        %2973 = vmatpush2.msra.mxu0 0.0
        %2974 = vmatprep.subr.mxu0 0.0
        %2975 = vmatpush2.msra.mxu0 0.0
        %2976 = vmatprep.subr.mxu0 0.0
        %2977 = vmatpush2.msra.mxu0 0.0
        %2978 = vmatprep.subr.mxu0 0.0
        %2979 = vmatpush2.msra.mxu0 0.0
        %2980 = vmatprep.subr.mxu0 0.0
        %2981 = vmatpush2.msra.mxu0 0.0
        %2982 = vmatprep.subr.mxu0 0.0
        %2983 = vmatpush2.msra.mxu0 0.0
        %2984 = vmatprep.subr.mxu0 0.0
        %2985 = vmatpush2.msra.mxu0 0.0
        %2986 = vmatprep.subr.mxu0 0.0
        %2987 = vmatpush2.msra.mxu0 0.0
        %2988 = vmatprep.subr.mxu0 0.0
        %2989 = vmatpush2.msra.mxu0 0.0
        %2990 = vmatprep.subr.mxu0 0.0
        %2991 = vmatpush2.msra.mxu0 0.0
        %2992 = vmatprep.subr.mxu0 0.0
        %2993 = vmatpush2.msra.mxu0 0.0
        %2994 = vmatprep.subr.mxu0 0.0
        %2995 = vmatpush2.msra.mxu0 0.0
        %2996 = vmatprep.subr.mxu0 0.0
        %2997 = vmatpush2.msra.mxu0 0.0
        %2998 = vmatprep.subr.mxu0 0.0
        %2999 = vmatpush2.msra.mxu0 0.0
        %3000 = vmatprep.subr.mxu0 0.0
        %3001 = vmatpush2.msra.mxu0 0.0
        %3002 = vmatprep.subr.mxu0 0.0
        %3003 = vmatpush2.msra.mxu0 0.0
        %3004 = vmatprep.mubr.f32.mxu0 0.0
        %v3005 = vand.u32 %v2851, 4294901760
        %3006 = vmatmul.mubr.f32.gmra.mxu0 %v3005
        %v3007 = vpop.f32.mrf.mxu0
        %v3008 = vadd.f32 %v2927, %v3007
        %v3009 = vpop.f32.mrf.mxu0
        %3010 = vdwg.mxu0
        %3011 = vmatprep.subr.mxu0 0.0
        %3012 = vmatpush1.msra.mxu0 0.0
        %3013 = vmatprep.subr.mxu0 0.0
        %3014 = vmatpush1.msra.mxu0 0.0
        %3015 = vmatprep.subr.mxu0 0.0
        %3016 = vmatpush1.msra.mxu0 0.0
        %3017 = vmatprep.subr.mxu0 0.0
        %3018 = vmatpush1.msra.mxu0 0.0
        %3019 = vmatprep.subr.mxu0 0.0
        %3020 = vmatpush1.msra.mxu0 0.0
        %3021 = vmatprep.subr.mxu0 0.0
        %3022 = vmatpush1.msra.mxu0 0.0
        %3023 = vmatprep.subr.mxu0 0.0
        %3024 = vmatpush1.msra.mxu0 0.0
        %3025 = vmatprep.subr.mxu0 0.0
        %3026 = vmatpush1.msra.mxu0 0.0
        %3027 = vmatprep.subr.mxu0 0.0
        %3028 = vmatpush1.msra.mxu0 0.0
        %3029 = vmatprep.subr.mxu0 0.0
        %3030 = vmatpush1.msra.mxu0 0.0
        %3031 = vmatprep.subr.mxu0 0.0
        %3032 = vmatpush1.msra.mxu0 0.0
        %3033 = vmatprep.subr.mxu0 0.0
        %3034 = vmatpush1.msra.mxu0 0.0
        %3035 = vmatprep.subr.mxu0 0.0
        %3036 = vmatpush1.msra.mxu0 0.0
        %3037 = vmatprep.subr.mxu0 0.0
        %3038 = vmatpush1.msra.mxu0 0.0
        %3039 = vmatprep.subr.mxu0 0.0
        %v3040 = vand.u32 %v2849, 4294901760
        %v3041 = vsub.f32 %v2849, %v3040
        %3042 = vmatpush1.msra.mxu0 %v3041
        %3043 = vmatprep.subr.mxu0 0.0
        %v3044 = vand.u32 %v2848, 4294901760
        %v3045 = vsub.f32 %v2848, %v3044
        %3046 = vmatpush1.msra.mxu0 %v3045
        %3047 = vmatprep.subr.mxu0 0.0
        %3048 = vmatpush2.msra.mxu0 0.0
        %3049 = vmatprep.subr.mxu0 0.0
        %3050 = vmatpush2.msra.mxu0 0.0
        %3051 = vmatprep.subr.mxu0 0.0
        %3052 = vmatpush2.msra.mxu0 0.0
        %3053 = vmatprep.subr.mxu0 0.0
        %3054 = vmatpush2.msra.mxu0 0.0
        %3055 = vmatprep.subr.mxu0 0.0
        %3056 = vmatpush2.msra.mxu0 0.0
        %3057 = vmatprep.subr.mxu0 0.0
        %3058 = vmatpush2.msra.mxu0 0.0
        %3059 = vmatprep.subr.mxu0 0.0
        %3060 = vmatpush2.msra.mxu0 0.0
        %3061 = vmatprep.subr.mxu0 0.0
        %3062 = vmatpush2.msra.mxu0 0.0
        %3063 = vmatprep.subr.mxu0 0.0
        %3064 = vmatpush2.msra.mxu0 0.0
        %3065 = vmatprep.subr.mxu0 0.0
        %3066 = vmatpush2.msra.mxu0 0.0
        %3067 = vmatprep.subr.mxu0 0.0
        %3068 = vmatpush2.msra.mxu0 0.0
        %3069 = vmatprep.subr.mxu0 0.0
        %3070 = vmatpush2.msra.mxu0 0.0
        %3071 = vmatprep.subr.mxu0 0.0
        %3072 = vmatpush2.msra.mxu0 0.0
        %3073 = vmatprep.subr.mxu0 0.0
        %3074 = vmatpush2.msra.mxu0 0.0
        %3075 = vmatprep.subr.mxu0 0.0
        %3076 = vmatpush2.msra.mxu0 0.0
        %3077 = vmatprep.subr.mxu0 0.0
        %3078 = vmatpush2.msra.mxu0 0.0
        %3079 = vmatprep.mubr.f32.mxu0 0.0
        %v3080 = vand.u32 %v2851, 4294901760
        %v3081 = vsub.f32 %v2851, %v3080
        %3082 = vmatmul.mubr.f32.gmra.mxu0 %v3081
        %v3083 = vpop.f32.mrf.mxu0
        %v3084 = vadd.f32 %v3008, %v3083
        %v3085 = vpop.f32.mrf.mxu0
        %3086 = vdwg.mxu0
        %3087 = vmatprep.subr.mxu0 0.0
        %3088 = vmatpush1.msra.mxu0 0.0
        %3089 = vmatprep.subr.mxu0 0.0
        %3090 = vmatpush1.msra.mxu0 0.0
        %3091 = vmatprep.subr.mxu0 0.0
        %3092 = vmatpush1.msra.mxu0 0.0
        %3093 = vmatprep.subr.mxu0 0.0
        %3094 = vmatpush1.msra.mxu0 0.0
        %3095 = vmatprep.subr.mxu0 0.0
        %3096 = vmatpush1.msra.mxu0 0.0
        %3097 = vmatprep.subr.mxu0 0.0
        %3098 = vmatpush1.msra.mxu0 0.0
        %3099 = vmatprep.subr.mxu0 0.0
        %3100 = vmatpush1.msra.mxu0 0.0
        %3101 = vmatprep.subr.mxu0 0.0
        %3102 = vmatpush1.msra.mxu0 0.0
        %3103 = vmatprep.subr.mxu0 0.0
        %3104 = vmatpush1.msra.mxu0 0.0
        %3105 = vmatprep.subr.mxu0 0.0
        %3106 = vmatpush1.msra.mxu0 0.0
        %3107 = vmatprep.subr.mxu0 0.0
        %3108 = vmatpush1.msra.mxu0 0.0
        %3109 = vmatprep.subr.mxu0 0.0
        %3110 = vmatpush1.msra.mxu0 0.0
        %3111 = vmatprep.subr.mxu0 0.0
        %3112 = vmatpush1.msra.mxu0 0.0
        %3113 = vmatprep.subr.mxu0 0.0
        %3114 = vmatpush1.msra.mxu0 0.0
        %3115 = vmatprep.subr.mxu0 0.0
        %v3116 = vand.u32 %v2849, 4294901760
        %3117 = vmatpush1.msra.mxu0 %v3116
        %3118 = vmatprep.subr.mxu0 0.0
        %v3119 = vand.u32 %v2848, 4294901760
        %3120 = vmatpush1.msra.mxu0 %v3119
        %3121 = vmatprep.subr.mxu0 0.0
        %3122 = vmatpush2.msra.mxu0 0.0
        %3123 = vmatprep.subr.mxu0 0.0
        %3124 = vmatpush2.msra.mxu0 0.0
        %3125 = vmatprep.subr.mxu0 0.0
        %3126 = vmatpush2.msra.mxu0 0.0
        %3127 = vmatprep.subr.mxu0 0.0
        %3128 = vmatpush2.msra.mxu0 0.0
        %3129 = vmatprep.subr.mxu0 0.0
        %3130 = vmatpush2.msra.mxu0 0.0
        %3131 = vmatprep.subr.mxu0 0.0
        %3132 = vmatpush2.msra.mxu0 0.0
        %3133 = vmatprep.subr.mxu0 0.0
        %3134 = vmatpush2.msra.mxu0 0.0
        %3135 = vmatprep.subr.mxu0 0.0
        %3136 = vmatpush2.msra.mxu0 0.0
        %3137 = vmatprep.subr.mxu0 0.0
        %3138 = vmatpush2.msra.mxu0 0.0
        %3139 = vmatprep.subr.mxu0 0.0
        %3140 = vmatpush2.msra.mxu0 0.0
        %3141 = vmatprep.subr.mxu0 0.0
        %3142 = vmatpush2.msra.mxu0 0.0
        %3143 = vmatprep.subr.mxu0 0.0
        %3144 = vmatpush2.msra.mxu0 0.0
        %3145 = vmatprep.subr.mxu0 0.0
        %3146 = vmatpush2.msra.mxu0 0.0
        %3147 = vmatprep.subr.mxu0 0.0
        %3148 = vmatpush2.msra.mxu0 0.0
        %3149 = vmatprep.subr.mxu0 0.0
        %3150 = vmatpush2.msra.mxu0 0.0
        %3151 = vmatprep.subr.mxu0 0.0
        %3152 = vmatpush2.msra.mxu0 0.0
        %3153 = vmatprep.mubr.f32.mxu0 0.0
        %v3154 = vand.u32 %v2851, 4294901760
        %v3155 = vsub.f32 %v2851, %v3154
        %v3156 = vand.u32 %v3155, 4294901760
        %3157 = vmatmul.mubr.f32.gmra.mxu0 %v3156
        %v3158 = vpop.f32.mrf.mxu0
        %v3159 = vadd.f32 %v3084, %v3158
        %v3160 = vpop.f32.mrf.mxu0
        %3161 = vdwg.mxu0
        %3162 = vmatprep.subr.mxu0 0.0
        %3163 = vmatpush1.msra.mxu0 0.0
        %3164 = vmatprep.subr.mxu0 0.0
        %3165 = vmatpush1.msra.mxu0 0.0
        %3166 = vmatprep.subr.mxu0 0.0
        %3167 = vmatpush1.msra.mxu0 0.0
        %3168 = vmatprep.subr.mxu0 0.0
        %3169 = vmatpush1.msra.mxu0 0.0
        %3170 = vmatprep.subr.mxu0 0.0
        %3171 = vmatpush1.msra.mxu0 0.0
        %3172 = vmatprep.subr.mxu0 0.0
        %3173 = vmatpush1.msra.mxu0 0.0
        %3174 = vmatprep.subr.mxu0 0.0
        %3175 = vmatpush1.msra.mxu0 0.0
        %3176 = vmatprep.subr.mxu0 0.0
        %3177 = vmatpush1.msra.mxu0 0.0
        %3178 = vmatprep.subr.mxu0 0.0
        %3179 = vmatpush1.msra.mxu0 0.0
        %3180 = vmatprep.subr.mxu0 0.0
        %3181 = vmatpush1.msra.mxu0 0.0
        %3182 = vmatprep.subr.mxu0 0.0
        %3183 = vmatpush1.msra.mxu0 0.0
        %3184 = vmatprep.subr.mxu0 0.0
        %3185 = vmatpush1.msra.mxu0 0.0
        %3186 = vmatprep.subr.mxu0 0.0
        %3187 = vmatpush1.msra.mxu0 0.0
        %3188 = vmatprep.subr.mxu0 0.0
        %3189 = vmatpush1.msra.mxu0 0.0
        %3190 = vmatprep.subr.mxu0 0.0
        %v3191 = vand.u32 %v2849, 4294901760
        %v3192 = vsub.f32 %v2849, %v3191
        %v3193 = vand.u32 %v3192, 4294901760
        %3194 = vmatpush1.msra.mxu0 %v3193
        %3195 = vmatprep.subr.mxu0 0.0
        %v3196 = vand.u32 %v2848, 4294901760
        %v3197 = vsub.f32 %v2848, %v3196
        %v3198 = vand.u32 %v3197, 4294901760
        %3199 = vmatpush1.msra.mxu0 %v3198
        %3200 = vmatprep.subr.mxu0 0.0
        %3201 = vmatpush2.msra.mxu0 0.0
        %3202 = vmatprep.subr.mxu0 0.0
        %3203 = vmatpush2.msra.mxu0 0.0
        %3204 = vmatprep.subr.mxu0 0.0
        %3205 = vmatpush2.msra.mxu0 0.0
        %3206 = vmatprep.subr.mxu0 0.0
        %3207 = vmatpush2.msra.mxu0 0.0
        %3208 = vmatprep.subr.mxu0 0.0
        %3209 = vmatpush2.msra.mxu0 0.0
        %3210 = vmatprep.subr.mxu0 0.0
        %3211 = vmatpush2.msra.mxu0 0.0
        %3212 = vmatprep.subr.mxu0 0.0
        %3213 = vmatpush2.msra.mxu0 0.0
        %3214 = vmatprep.subr.mxu0 0.0
        %3215 = vmatpush2.msra.mxu0 0.0
        %3216 = vmatprep.subr.mxu0 0.0
        %3217 = vmatpush2.msra.mxu0 0.0
        %3218 = vmatprep.subr.mxu0 0.0
        %3219 = vmatpush2.msra.mxu0 0.0
        %3220 = vmatprep.subr.mxu0 0.0
        %3221 = vmatpush2.msra.mxu0 0.0
        %3222 = vmatprep.subr.mxu0 0.0
        %3223 = vmatpush2.msra.mxu0 0.0
        %3224 = vmatprep.subr.mxu0 0.0
        %3225 = vmatpush2.msra.mxu0 0.0
        %3226 = vmatprep.subr.mxu0 0.0
        %3227 = vmatpush2.msra.mxu0 0.0
        %3228 = vmatprep.subr.mxu0 0.0
        %3229 = vmatpush2.msra.mxu0 0.0
        %3230 = vmatprep.subr.mxu0 0.0
        %3231 = vmatpush2.msra.mxu0 0.0
        %3232 = vmatprep.mubr.f32.mxu0 0.0
        %v3233 = vand.u32 %v2851, 4294901760
        %3234 = vmatmul.mubr.f32.gmra.mxu0 %v3233
        %v3235 = vpop.f32.mrf.mxu0
        %v3236 = vadd.f32 %v3159, %v3235
        %v3237 = vpop.f32.mrf.mxu0
        %3238 = vdwg.mxu0
        %3239 = vmatprep.subr.mxu0 0.0
        %3240 = vmatpush1.msra.mxu0 0.0
        %3241 = vmatprep.subr.mxu0 0.0
        %3242 = vmatpush1.msra.mxu0 0.0
        %3243 = vmatprep.subr.mxu0 0.0
        %3244 = vmatpush1.msra.mxu0 0.0
        %3245 = vmatprep.subr.mxu0 0.0
        %3246 = vmatpush1.msra.mxu0 0.0
        %3247 = vmatprep.subr.mxu0 0.0
        %3248 = vmatpush1.msra.mxu0 0.0
        %3249 = vmatprep.subr.mxu0 0.0
        %3250 = vmatpush1.msra.mxu0 0.0
        %3251 = vmatprep.subr.mxu0 0.0
        %3252 = vmatpush1.msra.mxu0 0.0
        %3253 = vmatprep.subr.mxu0 0.0
        %3254 = vmatpush1.msra.mxu0 0.0
        %3255 = vmatprep.subr.mxu0 0.0
        %3256 = vmatpush1.msra.mxu0 0.0
        %3257 = vmatprep.subr.mxu0 0.0
        %3258 = vmatpush1.msra.mxu0 0.0
        %3259 = vmatprep.subr.mxu0 0.0
        %3260 = vmatpush1.msra.mxu0 0.0
        %3261 = vmatprep.subr.mxu0 0.0
        %3262 = vmatpush1.msra.mxu0 0.0
        %3263 = vmatprep.subr.mxu0 0.0
        %3264 = vmatpush1.msra.mxu0 0.0
        %3265 = vmatprep.subr.mxu0 0.0
        %3266 = vmatpush1.msra.mxu0 0.0
        %3267 = vmatprep.subr.mxu0 0.0
        %v3268 = vand.u32 %v2849, 4294901760
        %3269 = vmatpush1.msra.mxu0 %v3268
        %3270 = vmatprep.subr.mxu0 0.0
        %v3271 = vand.u32 %v2848, 4294901760
        %3272 = vmatpush1.msra.mxu0 %v3271
        %3273 = vmatprep.subr.mxu0 0.0
        %3274 = vmatpush2.msra.mxu0 0.0
        %3275 = vmatprep.subr.mxu0 0.0
        %3276 = vmatpush2.msra.mxu0 0.0
        %3277 = vmatprep.subr.mxu0 0.0
        %3278 = vmatpush2.msra.mxu0 0.0
        %3279 = vmatprep.subr.mxu0 0.0
        %3280 = vmatpush2.msra.mxu0 0.0
        %3281 = vmatprep.subr.mxu0 0.0
        %3282 = vmatpush2.msra.mxu0 0.0
        %3283 = vmatprep.subr.mxu0 0.0
        %3284 = vmatpush2.msra.mxu0 0.0
        %3285 = vmatprep.subr.mxu0 0.0
        %3286 = vmatpush2.msra.mxu0 0.0
        %3287 = vmatprep.subr.mxu0 0.0
        %3288 = vmatpush2.msra.mxu0 0.0
        %3289 = vmatprep.subr.mxu0 0.0
        %3290 = vmatpush2.msra.mxu0 0.0
        %3291 = vmatprep.subr.mxu0 0.0
        %3292 = vmatpush2.msra.mxu0 0.0
        %3293 = vmatprep.subr.mxu0 0.0
        %3294 = vmatpush2.msra.mxu0 0.0
        %3295 = vmatprep.subr.mxu0 0.0
        %3296 = vmatpush2.msra.mxu0 0.0
        %3297 = vmatprep.subr.mxu0 0.0
        %3298 = vmatpush2.msra.mxu0 0.0
        %3299 = vmatprep.subr.mxu0 0.0
        %3300 = vmatpush2.msra.mxu0 0.0
        %3301 = vmatprep.subr.mxu0 0.0
        %3302 = vmatpush2.msra.mxu0 0.0
        %3303 = vmatprep.subr.mxu0 0.0
        %3304 = vmatpush2.msra.mxu0 0.0
        %3305 = vmatprep.mubr.f32.mxu0 0.0
        %v3306 = vand.u32 %v2851, 4294901760
        %3307 = vmatmul.mubr.f32.gmra.mxu0 %v3306
        %v3308 = vpop.f32.mrf.mxu0
        %v3309 = vadd.f32 %v3236, %v3308
        %v3310 = vpop.f32.mrf.mxu0
        %3311 = vdwg.mxu0
        %v3312 = vadd.f32 %v2847, %v3309
        %3313 = vst.msk [vmem:[#allocation2] sm:$0xff] %vm461, %v3312
        %p3314 = scmp.eq.s32.totalorder %s29, 1
        // Predicated region
        $region57: #{gpt_softmax10x_forward.5} parent=51 // pred_check
          %p3315 = pneg %p3314
        $region58: #{gpt_softmax10x_forward.5} parent=51 // pred_check_branch
          %3317 = sbr.rel (%p3315) target = $region60
        $region59: #{gpt_softmax10x_forward.5} parent=51 // pred_region
          %v3318 = vld [vmem:[#allocation2] sm:$0xff]
          %v3319 = vadd.f32 %v3318, %v456
          %v3320 = vld [vmem:[%s6] sm:$0x1]
          %v3321 = vld [vmem:[%s7] sm:$0x1]
          %v3322 = vsel %vm461, %v3319, 0.0
          %3323 = vadd.xlane.f32.xlu0 %v3322
          %v3324 = vpop.xlane.xlu0 %3323
          %v3325 = vrcp.pop 32.0
          %v3326 = vmul.f32 %v3324, %v3325
          %v3327 = vsub.f32 %v3319, %v3326
          %v3328 = vmul.f32 %v3327, %v3327
          %v3329 = vsel %vm461, %v3328, 0.0
          %3330 = vadd.xlane.f32.xlu0 %v3329
          %v3331 = vpop.xlane.xlu0 %3330
          %v3332 = vmul.f32 %v3331, %v3325
          %v3333 = vadd.f32 %v3332, 1e-05
          %v3334 = vrsqrt.pop %v3333
          %v3335 = vmul.f32 %v3327, %v3334
          %v3337 = vlaneseq
          %v3338 = vshrl.u32 %v3337, 7
          %v3339 = vsub.s32 0, %v3338
          %v3340 = vrot.slane %v3320, %v3339
          %v3342 = vmul.f32 %v3335, %v3340
          %v3344 = vlaneseq
          %v3345 = vshrl.u32 %v3344, 7
          %v3346 = vsub.s32 0, %v3345
          %v3347 = vrot.slane %v3321, %v3346
          %v3349 = vadd.f32 %v3342, %v3347
          %3350 = vst.msk [vmem:[%s449] sm:$0xff] %vm461, %v3349
        $region60: #{gpt_softmax10x_forward.5} parent=51 // pred_fallthru
          _
        %p3351 = scmp.lt.s32.totalorder %s28, 1
        %s3352 = scalar_select %p3351, %s28, 1
        %s3353 = smul.addr %s3352, 8
        %s3354 = scalar_lea.vmem %s8, %s3353
        %s3355 = sand.u32 %s270, 1
        %s3356 = scalar_lea.sflag [#allocation4], %s3355
        %s3357 = sand.u32 %s270, 1
        %s3358 = smul.addr %s3357, 8
        %s3359 = scalar_lea.vmem [#allocation3], %s3358
        // Predicated region
        $region61: #{gpt_softmax10x_forward.5} parent=51 // pred_check
          %p3360 = pneg %p252
        $region62: #{gpt_softmax10x_forward.5} parent=51 // pred_check_branch
          %3362 = sbr.rel (%p3360) target = $region64
        $region63: #{gpt_softmax10x_forward.5} parent=51 // pred_region
          _
        $region64: #{gpt_softmax10x_forward.5} parent=51 // pred_fallthru
          _
        // Predicated region
        $region65: #{gpt_softmax10x_forward.5} parent=51 // pred_check
          %p3363 = pneg %p280
        $region66: #{gpt_softmax10x_forward.5} parent=51 // pred_check_branch
          %3365 = sbr.rel (%p3363) target = $region68
        $region67: #{gpt_softmax10x_forward.5} parent=51 // pred_region
          %s3367 = ssub.s32 128, 128
          %3368 = vsyncadd %s3356, %s3367
          %s3369 = smul.addr %s28, 2
          %s3370 = sadd.s32 %s29, %s3369
          %s3371 = smul.addr %s3370, 128
          %s3372 = scalar_lea.hbm %s9, %s3371
          %s3374 = sshll.u32 %s3359, 4
          %s3375 = int_to_ptr.vmem [resolvable:$true] %s3374
          %3377 = dma.vmem_to_hbm [thread:$0]  %s3375, 128, %s3372, %s3356
        $region68: #{gpt_softmax10x_forward.5} parent=51 // pred_fallthru
          _
      $region52: #{gpt_softmax10x_forward.5} parent=5 // pred_fallthru
        _
      %p3378 = scmp.le.s32.totalorder 2, %s19
      // Predicated region
      $region69: #{gpt_softmax10x_forward.5} parent=5 // pred_check
        %p3379 = pneg %p3378
      $region70: #{gpt_softmax10x_forward.5} parent=5 // pred_check_branch
        %3381 = sbr.rel (%p3379) target = $region72
      $region71: #{gpt_softmax10x_forward.5} parent=5 // pred_region
        %s3382 = ssub.s32 %s19, 2
        // Predicated region
        $region73: #{gpt_softmax10x_forward.5} parent=71 // pred_check
          %p3383 = pneg %p258
        $region74: #{gpt_softmax10x_forward.5} parent=71 // pred_check_branch
          %3385 = sbr.rel (%p3383) target = $region76
        $region75: #{gpt_softmax10x_forward.5} parent=71 // pred_region
          %p3386 = scmp.lt.s32.totalorder %s30, 1
          %s3387 = scalar_select %p3386, %s30, 1
          %s3388 = smul.addr %s3387, 8
          %s3389 = scalar_lea.vmem %s8, %s3388
        $region76: #{gpt_softmax10x_forward.5} parent=71 // pred_fallthru
          _
        // Predicated region
        $region77: #{gpt_softmax10x_forward.5} parent=71 // pred_check
          %p3390 = pneg %p286
        $region78: #{gpt_softmax10x_forward.5} parent=71 // pred_check_branch
          %3392 = sbr.rel (%p3390) target = $region80
        $region79: #{gpt_softmax10x_forward.5} parent=71 // pred_region
          %s3393 = sand.u32 %s271, 1
          %s3394 = scalar_lea.sflag [#allocation4], %s3393
          %s3395 = sand.u32 %s271, 1
          %s3396 = smul.addr %s3395, 8
          %s3397 = scalar_lea.vmem [#allocation3], %s3396
          %3398 = dma.done %s3394, 128
        $region80: #{gpt_softmax10x_forward.5} parent=71 // pred_fallthru
          _
      $region72: #{gpt_softmax10x_forward.5} parent=5 // pred_fallthru
        _
    $region6: #{gpt_softmax10x_forward.5} parent=1 // loop_footer
      %s23 = sadd.s32 1, %s19
    $region7: #{gpt_softmax10x_forward.5} parent=1 // loop_footer_branch
      %18 = sbr.rel target = $region3
    $region8: #{gpt_softmax10x_forward.5} parent=1 // loop_exit
      _
    %3399 = vsyncpa [#allocation4], 1
    %s3400 = scalar_lea.sflag [#allocation4], 1
    %3401 = vsyncpa %s3400, 1

</llo_original>
